<compile_context>
chip_gen: v5e
topology: v5e:2x2
jax: 0.10.0
libtpu: 0.0.40
codegen_flags: <defaults>
</compile_context>

<pallas_src>
import math
from functools import partial

import jax
import jax.numpy as jnp
from jax import lax
from jax.experimental import pallas as pl
from jax.experimental.pallas import tpu as pltpu

LANE = 128


def _round_up(n, m=LANE):
    return ((n + m - 1) // m) * m


def _pick_row_chunk(H, W, target_m=256):
    # M = row_chunk * W ~ 256 keeps the 256-wide MXU (v6e/v7x) full while the
    # (M, 128) f32 accumulator stays within ~32 vregs.
    return max(1, min(H, max(1, target_m // max(W, 1))))


def _pick_batch_tile(B, H, W, c_max):
    # Fold several small images into one grid step to amortize per-step
    # overhead, but keep >= 2 grid steps when B >= 2 (v7x has 2 TensorCores).
    if B <= 1:
        return 1
    per_img = 2 * H * W * c_max * 4          # in + out block bytes per image
    bt = max(1, min(B // 2, (2 << 20) // max(per_img, 1)))
    while B % bt:
        bt -= 1
    return bt


# ----------------------------------------------------------------------------
# Fused DoubleConv kernel
# ----------------------------------------------------------------------------
def _double_conv_kernel(x_ref, w1_ref, s1_ref, t1_ref, w2_ref, s2_ref, t2_ref,
                        o_ref, e1_ref, e2_ref, *, row_chunk):
    """(conv3x3 + folded-BN affine + ReLU) x 2 for `bt` images.

    x_ref   : (bt, H, W, CinP)   f32 input, channels zero-padded to 128
    w1_ref  : (3, 3*CinP, C1P)   bf16 conv1 weights, [ky][kx*CinP + i, o]
    s1,t1   : (1, C1P)           f32 folded BN scale / shift (incl. conv bias)
    w2_ref  : (3, 3*C1P, C2P)    bf16 conv2 weights
    s2,t2   : (1, C2P)
    o_ref   : (bt, H, W, C2P)    f32 output (lane-dense, padded channels)
    e1_ref  : (H+2, W, 3*CinP)   bf16 expanded (kx folded into lanes) conv1 in
    e2_ref  : (H+2, W, 3*C1P)    bf16 expanded conv2 input (intermediate act.)
    """
    bt, H, W, _ = x_ref.shape
    C1 = w1_ref.shape[1] // 3
    C2 = w2_ref.shape[1] // 3
    act_dt = e1_ref.dtype

    def zero_borders(e_ref, C):
        # Only the 1-pixel halo; the interior is fully overwritten each image.
        zrow = jnp.zeros((1, W, 3 * C), act_dt)
        e_ref[0:1, :, :] = zrow
        e_ref[H + 1:H + 2, :, :] = zrow
        zcol = jnp.zeros((H + 2, 1, C), act_dt)
        e_ref[:, 0:1, 0:C] = zcol                        # left pad of kx=0 blk
        e_ref[:, W - 1:W, 2 * C:3 * C] = zcol            # right pad of kx=2 blk

    def scatter_kx(e_ref, C, r0, rows, y):
        # y: (rows, W, C) activation for output rows [r0, r0+rows).
        e_ref[pl.ds(r0 + 1, rows), :, C:2 * C] = y                   # kx = 1
        e_ref[pl.ds(r0 + 1, rows), 1:W, 0:C] = y[:, 0:W - 1, :]      # kx = 0
        e_ref[pl.ds(r0 + 1, rows), 0:W - 1, 2 * C:3 * C] = y[:, 1:W, :]  # kx=2

    def conv3x3_bn_relu(e_ref, w_ref, s_ref, t_ref, store):
        K = e_ref.shape[-1]
        N = w_ref.shape[-1]
        scale = s_ref[...]
        shift = t_ref[...]

        def chunk(r0, rows):
            acc = jnp.zeros((rows * W, N), jnp.float32)
            for ky in range(3):          # kx is folded into K; only ky looped
                lhs = e_ref[pl.ds(r0 + ky, rows), :, :].reshape(rows * W, K)
                acc = acc + jnp.dot(lhs, w_ref[ky],
                                    preferred_element_type=jnp.float32)
            y = jnp.maximum(acc * scale + shift, 0.0)
            store(r0, rows, y.reshape(rows, W, N))

        n_full = H // row_chunk
        rem = H - n_full * row_chunk
        if n_full <= 4:                  # short loops: keep unrolled
            for i in range(n_full):
                chunk(i * row_chunk, row_chunk)
        else:                            # long loops: fori_loop, small code
            def body(i, carry):
                chunk(pl.multiple_of(i * row_chunk, row_chunk), row_chunk)
                return carry
            lax.fori_loop(0, n_full, body, 0)
        if rem:
            chunk(n_full * row_chunk, rem)

    for b in range(bt):
        zero_borders(e1_ref, C1)
        zero_borders(e2_ref, C2)

        # Build the expanded conv1 input.  Centre block is fully aligned; the
        # kx=0/kx=2 blocks need one 1-column W shift each (2 per image).
        xb = x_ref[b].astype(act_dt)
        e1_ref[1:H + 1, :, C1:2 * C1] = xb
        e1_ref[1:H + 1, 1:W, 0:C1] = xb[:, 0:W - 1, :]
        e1_ref[1:H + 1, 0:W - 1, 2 * C1:3 * C1] = xb[:, 1:W, :]

        ob = o_ref.at[b]

        def store_mid(r0, rows, y):
            # Intermediate activation goes straight into the expanded conv2
            # input (stays in VMEM, stored as bf16).
            scatter_kx(e2_ref, C2, r0, rows, y.astype(act_dt))

        def store_out(r0, rows, y):
            ob[pl.ds(r0, rows), :, :] = y.astype(o_ref.dtype)

        conv3x3_bn_relu(e1_ref, w1_ref, s1_ref, t1_ref, store_mid)
        conv3x3_bn_relu(e2_ref, w2_ref, s2_ref, t2_ref, store_out)


def double_conv_pallas(x_nhwc_p, w1, s1, t1, w2, s2, t2):
    """x_nhwc_p: (B, H, W, CinP) f32 with CinP a multiple of 128."""
    B, H, W, cin_p = x_nhwc_p.shape
    mid_p = w1.shape[-1]
    out_p = w2.shape[-1]
    rc = _pick_row_chunk(H, W)
    bt = _pick_batch_tile(B, H, W, max(cin_p, out_p))

    # Explicit scoped-VMEM limit (v5e default is 16 MiB), capped under v7x's
    # 64 MiB physical VMEM.
    blk = bt * H * W * (cin_p + out_p) * 4 * 2           # in/out, double-buf
    wts = (w1.size + w2.size) * 2 * 2                    # bf16, double-buf
    scr = (H + 2) * W * 3 * (cin_p + mid_p) * 2          # bf16 scratches
    vmem_limit = int(min(max(2 * (blk + wts + scr) + (4 << 20), 32 << 20),
                         64 << 20))

    return pl.pallas_call(
        partial(_double_conv_kernel, row_chunk=rc),
        out_shape=jax.ShapeDtypeStruct((B, H, W, out_p), jnp.float32),
        grid=(B // bt,),
        in_specs=[
            pl.BlockSpec((bt, H, W, cin_p), lambda g: (g, 0, 0, 0)),
            pl.BlockSpec((3, 3 * cin_p, mid_p), lambda g: (0, 0, 0)),
            pl.BlockSpec((1, mid_p), lambda g: (0, 0)),
            pl.BlockSpec((1, mid_p), lambda g: (0, 0)),
            pl.BlockSpec((3, 3 * mid_p, out_p), lambda g: (0, 0, 0)),
            pl.BlockSpec((1, out_p), lambda g: (0, 0)),
            pl.BlockSpec((1, out_p), lambda g: (0, 0)),
        ],
        out_specs=pl.BlockSpec((bt, H, W, out_p), lambda g: (g, 0, 0, 0)),
        scratch_shapes=[
            pltpu.VMEM((H + 2, W, 3 * cin_p), jnp.bfloat16),
            pltpu.VMEM((H + 2, W, 3 * mid_p), jnp.bfloat16),
        ],
        compiler_params=pltpu.CompilerParams(
            dimension_semantics=("parallel",),
            vmem_limit_bytes=vmem_limit),
    )(x_nhwc_p, w1, s1, t1, w2, s2, t2)


# ----------------------------------------------------------------------------
# Parameter construction (deterministic, synthetic; BN folded, eval mode)
# ----------------------------------------------------------------------------
def _make_conv_bn(key, cin, cout):
    k = jax.random.split(key, 6)
    w = jax.random.normal(k[0], (cout, cin, 3, 3), jnp.float32) / math.sqrt(9 * cin)
    b = 0.1 * jax.random.normal(k[1], (cout,), jnp.float32)
    gamma = 1.0 + 0.1 * jax.random.normal(k[2], (cout,), jnp.float32)
    beta = 0.1 * jax.random.normal(k[3], (cout,), jnp.float32)
    mean = 0.1 * jax.random.normal(k[4], (cout,), jnp.float32)
    var = 1.0 + 0.1 * jax.random.uniform(k[5], (cout,), jnp.float32)
    eps = 1e-5
    scale = gamma / jnp.sqrt(var + eps)          # folded BN scale
    shift = (b - mean) * scale + beta            # folded BN shift (incl. bias)
    return dict(w_oihw=w, scale=scale, shift=shift)


def _pack_conv(p, cin_p, cout_p):
    w = p["w_oihw"]                              # (cout, cin, 3, 3)
    cout, cin = w.shape[0], w.shape[1]
    wt = jnp.transpose(w, (2, 3, 1, 0))          # (ky, kx, cin, cout)
    wt = jnp.pad(wt, ((0, 0), (0, 0), (0, cin_p - cin), (0, cout_p - cout)))
    wt = wt.reshape(3, 3 * cin_p, cout_p).astype(jnp.bfloat16)   # kx into K
    s = jnp.pad(p["scale"], (0, cout_p - cout)).reshape(1, cout_p)
    t = jnp.pad(p["shift"], (0, cout_p - cout)).reshape(1, cout_p)
    return wt, s, t


class DoubleConvPallas:
    """(Conv3x3 => BN(eval) => ReLU) * 2, NCHW in / NCHW out."""

    def __init__(self, in_channels, out_channels, mid_channels=None, *, key):
        if not mid_channels:
            mid_channels = out_channels
        self.cin, self.mid, self.cout = int(in_channels), int(mid_channels), int(out_channels)
        self.cin_p = _round_up(self.cin)
        self.mid_p = _round_up(self.mid)
        self.cout_p = _round_up(self.cout)
        k1, k2 = jax.random.split(key)
        self.p1 = _make_conv_bn(k1, self.cin, self.mid)
        self.p2 = _make_conv_bn(k2, self.mid, self.cout)
        self.w1, self.s1, self.t1 = _pack_conv(self.p1, self.cin_p, self.mid_p)
        self.w2, self.s2, self.t2 = _pack_conv(self.p2, self.mid_p, self.cout_p)

    def __call__(self, x_nchw):
        B, C, H, W = x_nchw.shape
        assert C == self.cin, x_nchw.shape
        x = jnp.transpose(x_nchw, (0, 2, 3, 1)).astype(jnp.float32)   # -> NHWC
        if self.cin_p > C:                       # lane-dense channels
            x = jnp.pad(x, ((0, 0), (0, 0), (0, 0), (0, self.cin_p - C)))
        y = double_conv_pallas(x, self.w1, self.s1, self.t1,
                               self.w2, self.s2, self.t2)
        y = y[..., :self.cout]                   # drop lane padding
        return jnp.transpose(y, (0, 3, 1, 2))    # -> NCHW

    # Pure-JAX reference (same folded-BN eval semantics, full-f32 precision).
    def reference(self, x_nchw):
        x = x_nchw.astype(jnp.float32)
        for p in (self.p1, self.p2):
            y = lax.conv_general_dilated(
                x, p["w_oihw"], (1, 1), ((1, 1), (1, 1)),
                dimension_numbers=("NCHW", "OIHW", "NCHW"),
                precision=lax.Precision.HIGHEST)
            y = y * p["scale"][None, :, None, None] + p["shift"][None, :, None, None]
            x = jnp.maximum(y, 0.0)
        return x


# ----------------------------------------------------------------------------
if __name__ == "__main__":
    key = jax.random.PRNGKey(0)
    kx, kp = jax.random.split(key)

    B, Cin, H, W = 2, 4, 16, 16
    mid_channels, out_channels = 16, 8

    x = jax.random.normal(kx, (B, Cin, H, W), jnp.float32)
    model = DoubleConvPallas(Cin, out_channels, mid_channels, key=kp)

    out = jax.block_until_ready(model(x))
    assert out.shape == (B, out_channels, H, W), out.shape
    assert out.dtype == jnp.float32

    ref = jax.block_until_ready(model.reference(x))
    max_err = float(jnp.max(jnp.abs(out - ref)))
    max_ref = float(jnp.max(jnp.abs(ref)))
    # bf16 matmul operands with f32 accumulation: ~1e-2 relative tolerance.
    assert max_err < 3e-2 * (1.0 + max_ref), (max_err, max_ref)

    print("KERNEL_OK")
</pallas_src>

<mosaic_0001>
module attributes {stable_mosaic.version = 11 : i64} {
  func.func @_double_conv_kernel(%arg0: i32, %arg1: memref<1x16x16x128xf32, #tpu.memory_space<vmem>>, %arg2: memref<3x384x128xbf16, #tpu.memory_space<vmem>>, %arg3: memref<1x128xf32, #tpu.memory_space<vmem>>, %arg4: memref<1x128xf32, #tpu.memory_space<vmem>>, %arg5: memref<3x384x128xbf16, #tpu.memory_space<vmem>>, %arg6: memref<1x128xf32, #tpu.memory_space<vmem>>, %arg7: memref<1x128xf32, #tpu.memory_space<vmem>>, %arg8: memref<1x16x16x128xf32, #tpu.memory_space<vmem>>, %arg9: memref<18x16x384xbf16, #tpu.memory_space<vmem>>, %arg10: memref<18x16x384xbf16, #tpu.memory_space<vmem>>) attributes {dimension_semantics = [#tpu.dimension_semantics<parallel>], iteration_bounds = array<i64: 2>, scalar_prefetch = 0 : i64, scratch_operands = 2 : i64, tpu.core_type = #tpu.core_type<tc>, window_params = [{transform_indices = @transform_0, window_bounds = array<i64: 1, 16, 16, 128>}, {pipeline_mode = #tpu.pipeline_mode<synchronous>, transform_indices = @transform_1, window_bounds = array<i64: 3, 384, 128>}, {pipeline_mode = #tpu.pipeline_mode<synchronous>, transform_indices = @transform_2, window_bounds = array<i64: 1, 128>}, {pipeline_mode = #tpu.pipeline_mode<synchronous>, transform_indices = @transform_3, window_bounds = array<i64: 1, 128>}, {pipeline_mode = #tpu.pipeline_mode<synchronous>, transform_indices = @transform_4, window_bounds = array<i64: 3, 384, 128>}, {pipeline_mode = #tpu.pipeline_mode<synchronous>, transform_indices = @transform_5, window_bounds = array<i64: 1, 128>}, {pipeline_mode = #tpu.pipeline_mode<synchronous>, transform_indices = @transform_6, window_bounds = array<i64: 1, 128>}, {transform_indices = @transform_7, window_bounds = array<i64: 1, 16, 16, 128>}]} {
    %cst = arith.constant 0.000000e+00 : bf16
    %0 = vector.broadcast %cst : bf16 to vector<1x16x384xbf16>
    %c0 = arith.constant 0 : index
    %c0_0 = arith.constant 0 : index
    %c0_1 = arith.constant 0 : index
    %1 = vector.load %arg9[%c0, %c0_0, %c0_1] : memref<18x16x384xbf16, #tpu.memory_space<vmem>>, vector<1x16x384xbf16>
    tpu.vector_store %arg9[%c0, %c0_0, %c0_1], %0 {strides = array<i32>} : memref<18x16x384xbf16, #tpu.memory_space<vmem>>, vector<1x16x384xbf16>,
    %c17 = arith.constant 17 : index
    %c0_2 = arith.constant 0 : index
    %c0_3 = arith.constant 0 : index
    %2 = vector.load %arg9[%c17, %c0_2, %c0_3] : memref<18x16x384xbf16, #tpu.memory_space<vmem>>, vector<1x16x384xbf16>
    tpu.vector_store %arg9[%c17, %c0_2, %c0_3], %0 {strides = array<i32>} : memref<18x16x384xbf16, #tpu.memory_space<vmem>>, vector<1x16x384xbf16>,
    %cst_4 = arith.constant 0.000000e+00 : bf16
    %3 = vector.broadcast %cst_4 : bf16 to vector<18x1x128xbf16>
    %c0_5 = arith.constant 0 : index
    %c0_6 = arith.constant 0 : index
    %c0_7 = arith.constant 0 : index
    %4 = vector.load %arg9[%c0_5, %c0_6, %c0_7] : memref<18x16x384xbf16, #tpu.memory_space<vmem>>, vector<18x1x128xbf16>
    tpu.vector_store %arg9[%c0_5, %c0_6, %c0_7], %3 {strides = array<i32>} : memref<18x16x384xbf16, #tpu.memory_space<vmem>>, vector<18x1x128xbf16>,
    %c0_8 = arith.constant 0 : index
    %c15 = arith.constant 15 : index
    %c256 = arith.constant 256 : index
    %5 = vector.load %arg9[%c0_8, %c15, %c256] : memref<18x16x384xbf16, #tpu.memory_space<vmem>>, vector<18x1x128xbf16>
    tpu.vector_store %arg9[%c0_8, %c15, %c256], %3 {strides = array<i32>} : memref<18x16x384xbf16, #tpu.memory_space<vmem>>, vector<18x1x128xbf16>,
    %cst_9 = arith.constant 0.000000e+00 : bf16
    %6 = vector.broadcast %cst_9 : bf16 to vector<1x16x384xbf16>
    %c0_10 = arith.constant 0 : index
    %c0_11 = arith.constant 0 : index
    %c0_12 = arith.constant 0 : index
    %7 = vector.load %arg10[%c0_10, %c0_11, %c0_12] : memref<18x16x384xbf16, #tpu.memory_space<vmem>>, vector<1x16x384xbf16>
    tpu.vector_store %arg10[%c0_10, %c0_11, %c0_12], %6 {strides = array<i32>} : memref<18x16x384xbf16, #tpu.memory_space<vmem>>, vector<1x16x384xbf16>,
    %c17_13 = arith.constant 17 : index
    %c0_14 = arith.constant 0 : index
    %c0_15 = arith.constant 0 : index
    %8 = vector.load %arg10[%c17_13, %c0_14, %c0_15] : memref<18x16x384xbf16, #tpu.memory_space<vmem>>, vector<1x16x384xbf16>
    tpu.vector_store %arg10[%c17_13, %c0_14, %c0_15], %6 {strides = array<i32>} : memref<18x16x384xbf16, #tpu.memory_space<vmem>>, vector<1x16x384xbf16>,
    %cst_16 = arith.constant 0.000000e+00 : bf16
    %9 = vector.broadcast %cst_16 : bf16 to vector<18x1x128xbf16>
    %c0_17 = arith.constant 0 : index
    %c0_18 = arith.constant 0 : index
    %c0_19 = arith.constant 0 : index
    %10 = vector.load %arg10[%c0_17, %c0_18, %c0_19] : memref<18x16x384xbf16, #tpu.memory_space<vmem>>, vector<18x1x128xbf16>
    tpu.vector_store %arg10[%c0_17, %c0_18, %c0_19], %9 {strides = array<i32>} : memref<18x16x384xbf16, #tpu.memory_space<vmem>>, vector<18x1x128xbf16>,
    %c0_20 = arith.constant 0 : index
    %c15_21 = arith.constant 15 : index
    %c256_22 = arith.constant 256 : index
    %11 = vector.load %arg10[%c0_20, %c15_21, %c256_22] : memref<18x16x384xbf16, #tpu.memory_space<vmem>>, vector<18x1x128xbf16>
    tpu.vector_store %arg10[%c0_20, %c15_21, %c256_22], %9 {strides = array<i32>} : memref<18x16x384xbf16, #tpu.memory_space<vmem>>, vector<18x1x128xbf16>,
    %c0_23 = arith.constant 0 : index
    %c0_24 = arith.constant 0 : index
    %c0_25 = arith.constant 0 : index
    %c0_26 = arith.constant 0 : index
    %12 = vector.load %arg1[%c0_23, %c0_24, %c0_25, %c0_26] : memref<1x16x16x128xf32, #tpu.memory_space<vmem>>, vector<1x16x16x128xf32>
    %13 = vector.shape_cast %12 : vector<1x16x16x128xf32> to vector<16x16x128xf32>
    %14 = arith.truncf %13 : vector<16x16x128xf32> to vector<16x16x128xbf16>
    %c1 = arith.constant 1 : index
    %c0_27 = arith.constant 0 : index
    %c128 = arith.constant 128 : index
    %15 = vector.load %arg9[%c1, %c0_27, %c128] : memref<18x16x384xbf16, #tpu.memory_space<vmem>>, vector<16x16x128xbf16>
    tpu.vector_store %arg9[%c1, %c0_27, %c128], %14 {strides = array<i32>} : memref<18x16x384xbf16, #tpu.memory_space<vmem>>, vector<16x16x128xbf16>,
    %16 = vector.extract_strided_slice %14 {offsets = [0, 0, 0], sizes = [16, 15, 128], strides = [1, 1, 1]} : vector<16x16x128xbf16> to vector<16x15x128xbf16>
    %c1_28 = arith.constant 1 : index
    %c1_29 = arith.constant 1 : index
    %c0_30 = arith.constant 0 : index
    %17 = vector.load %arg9[%c1_28, %c1_29, %c0_30] : memref<18x16x384xbf16, #tpu.memory_space<vmem>>, vector<16x15x128xbf16>
    tpu.vector_store %arg9[%c1_28, %c1_29, %c0_30], %16 {strides = array<i32>} : memref<18x16x384xbf16, #tpu.memory_space<vmem>>, vector<16x15x128xbf16>,
    %18 = vector.extract_strided_slice %14 {offsets = [0, 1, 0], sizes = [16, 15, 128], strides = [1, 1, 1]} : vector<16x16x128xbf16> to vector<16x15x128xbf16>
    %c1_31 = arith.constant 1 : index
    %c0_32 = arith.constant 0 : index
    %c256_33 = arith.constant 256 : index
    %19 = vector.load %arg9[%c1_31, %c0_32, %c256_33] : memref<18x16x384xbf16, #tpu.memory_space<vmem>>, vector<16x15x128xbf16>
    tpu.vector_store %arg9[%c1_31, %c0_32, %c256_33], %18 {strides = array<i32>} : memref<18x16x384xbf16, #tpu.memory_space<vmem>>, vector<16x15x128xbf16>,
    %c0_34 = arith.constant 0 : index
    %c0_35 = arith.constant 0 : index
    %20 = vector.load %arg3[%c0_34, %c0_35] : memref<1x128xf32, #tpu.memory_space<vmem>>, vector<1x128xf32>
    %c0_36 = arith.constant 0 : index
    %c0_37 = arith.constant 0 : index
    %21 = vector.load %arg4[%c0_36, %c0_37] : memref<1x128xf32, #tpu.memory_space<vmem>>, vector<1x128xf32>
    %cst_38 = arith.constant 0.000000e+00 : f32
    %22 = vector.broadcast %cst_38 : f32 to vector<256x128xf32>
    %c0_39 = arith.constant 0 : index
    %c0_40 = arith.constant 0 : index
    %c0_41 = arith.constant 0 : index
    %23 = vector.load %arg9[%c0_39, %c0_40, %c0_41] : memref<18x16x384xbf16, #tpu.memory_space<vmem>>, vector<16x16x384xbf16>
    %24 = vector.shape_cast %23 : vector<16x16x384xbf16> to vector<256x384xbf16>
    %c0_42 = arith.constant 0 : index
    %c0_43 = arith.constant 0 : index
    %c0_44 = arith.constant 0 : index
    %25 = vector.load %arg2[%c0_42, %c0_43, %c0_44] : memref<3x384x128xbf16, #tpu.memory_space<vmem>>, vector<1x384x128xbf16>
    %26 = vector.shape_cast %25 : vector<1x384x128xbf16> to vector<384x128xbf16>
    %cst_45 = arith.constant dense<0.000000e+00> : vector<256x128xf32>
    %27 = tpu.matmul %24, %26, %cst_45 {dimension_numbers = #tpu.dot_dimension_numbers<[1], [0], [0], [1], [0, 0, 1, 1], [], []>} : vector<256x384xbf16>, vector<384x128xbf16>, vector<256x128xf32> -> vector<256x128xf32>
    %28 = arith.addf %22, %27 : vector<256x128xf32>
    %c1_46 = arith.constant 1 : index
    %c0_47 = arith.constant 0 : index
    %c0_48 = arith.constant 0 : index
    %29 = vector.load %arg9[%c1_46, %c0_47, %c0_48] : memref<18x16x384xbf16, #tpu.memory_space<vmem>>, vector<16x16x384xbf16>
    %30 = vector.shape_cast %29 : vector<16x16x384xbf16> to vector<256x384xbf16>
    %c1_49 = arith.constant 1 : index
    %c0_50 = arith.constant 0 : index
    %c0_51 = arith.constant 0 : index
    %31 = vector.load %arg2[%c1_49, %c0_50, %c0_51] : memref<3x384x128xbf16, #tpu.memory_space<vmem>>, vector<1x384x128xbf16>
    %32 = vector.shape_cast %31 : vector<1x384x128xbf16> to vector<384x128xbf16>
    %cst_52 = arith.constant dense<0.000000e+00> : vector<256x128xf32>
    %33 = tpu.matmul %30, %32, %cst_52 {dimension_numbers = #tpu.dot_dimension_numbers<[1], [0], [0], [1], [0, 0, 1, 1], [], []>} : vector<256x384xbf16>, vector<384x128xbf16>, vector<256x128xf32> -> vector<256x128xf32>
    %34 = arith.addf %28, %33 : vector<256x128xf32>
    %c2 = arith.constant 2 : index
    %c0_53 = arith.constant 0 : index
    %c0_54 = arith.constant 0 : index
    %35 = vector.load %arg9[%c2, %c0_53, %c0_54] : memref<18x16x384xbf16, #tpu.memory_space<vmem>>, vector<16x16x384xbf16>
    %36 = vector.shape_cast %35 : vector<16x16x384xbf16> to vector<256x384xbf16>
    %c2_55 = arith.constant 2 : index
    %c0_56 = arith.constant 0 : index
    %c0_57 = arith.constant 0 : index
    %37 = vector.load %arg2[%c2_55, %c0_56, %c0_57] : memref<3x384x128xbf16, #tpu.memory_space<vmem>>, vector<1x384x128xbf16>
    %38 = vector.shape_cast %37 : vector<1x384x128xbf16> to vector<384x128xbf16>
    %cst_58 = arith.constant dense<0.000000e+00> : vector<256x128xf32>
    %39 = tpu.matmul %36, %38, %cst_58 {dimension_numbers = #tpu.dot_dimension_numbers<[1], [0], [0], [1], [0, 0, 1, 1], [], []>} : vector<256x384xbf16>, vector<384x128xbf16>, vector<256x128xf32> -> vector<256x128xf32>
    %40 = arith.addf %34, %39 : vector<256x128xf32>
    %41 = vector.broadcast %20 : vector<1x128xf32> to vector<256x128xf32>
    %42 = arith.mulf %40, %41 : vector<256x128xf32>
    %43 = vector.broadcast %21 : vector<1x128xf32> to vector<256x128xf32>
    %44 = arith.addf %42, %43 : vector<256x128xf32>
    %cst_59 = arith.constant 0.000000e+00 : f32
    %45 = vector.broadcast %cst_59 : f32 to vector<256x128xf32>
    %46 = arith.maximumf %44, %45 : vector<256x128xf32>
    %47 = vector.shape_cast %46 : vector<256x128xf32> to vector<16x16x128xf32>
    %48 = arith.truncf %47 : vector<16x16x128xf32> to vector<16x16x128xbf16>
    %c1_60 = arith.constant 1 : index
    %c0_61 = arith.constant 0 : index
    %c128_62 = arith.constant 128 : index
    %49 = vector.load %arg10[%c1_60, %c0_61, %c128_62] : memref<18x16x384xbf16, #tpu.memory_space<vmem>>, vector<16x16x128xbf16>
    tpu.vector_store %arg10[%c1_60, %c0_61, %c128_62], %48 {strides = array<i32>} : memref<18x16x384xbf16, #tpu.memory_space<vmem>>, vector<16x16x128xbf16>,
    %50 = vector.extract_strided_slice %48 {offsets = [0, 0, 0], sizes = [16, 15, 128], strides = [1, 1, 1]} : vector<16x16x128xbf16> to vector<16x15x128xbf16>
    %c1_63 = arith.constant 1 : index
    %c1_64 = arith.constant 1 : index
    %c0_65 = arith.constant 0 : index
    %51 = vector.load %arg10[%c1_63, %c1_64, %c0_65] : memref<18x16x384xbf16, #tpu.memory_space<vmem>>, vector<16x15x128xbf16>
    tpu.vector_store %arg10[%c1_63, %c1_64, %c0_65], %50 {strides = array<i32>} : memref<18x16x384xbf16, #tpu.memory_space<vmem>>, vector<16x15x128xbf16>,
    %52 = vector.extract_strided_slice %48 {offsets = [0, 1, 0], sizes = [16, 15, 128], strides = [1, 1, 1]} : vector<16x16x128xbf16> to vector<16x15x128xbf16>
    %c1_66 = arith.constant 1 : index
    %c0_67 = arith.constant 0 : index
    %c256_68 = arith.constant 256 : index
    %53 = vector.load %arg10[%c1_66, %c0_67, %c256_68] : memref<18x16x384xbf16, #tpu.memory_space<vmem>>, vector<16x15x128xbf16>
    tpu.vector_store %arg10[%c1_66, %c0_67, %c256_68], %52 {strides = array<i32>} : memref<18x16x384xbf16, #tpu.memory_space<vmem>>, vector<16x15x128xbf16>,
    %c0_69 = arith.constant 0 : index
    %c0_70 = arith.constant 0 : index
    %54 = vector.load %arg6[%c0_69, %c0_70] : memref<1x128xf32, #tpu.memory_space<vmem>>, vector<1x128xf32>
    %c0_71 = arith.constant 0 : index
    %c0_72 = arith.constant 0 : index
    %55 = vector.load %arg7[%c0_71, %c0_72] : memref<1x128xf32, #tpu.memory_space<vmem>>, vector<1x128xf32>
    %cst_73 = arith.constant 0.000000e+00 : f32
    %56 = vector.broadcast %cst_73 : f32 to vector<256x128xf32>
    %c0_74 = arith.constant 0 : index
    %c0_75 = arith.constant 0 : index
    %c0_76 = arith.constant 0 : index
    %57 = vector.load %arg10[%c0_74, %c0_75, %c0_76] : memref<18x16x384xbf16, #tpu.memory_space<vmem>>, vector<16x16x384xbf16>
    %58 = vector.shape_cast %57 : vector<16x16x384xbf16> to vector<256x384xbf16>
    %c0_77 = arith.constant 0 : index
    %c0_78 = arith.constant 0 : index
    %c0_79 = arith.constant 0 : index
    %59 = vector.load %arg5[%c0_77, %c0_78, %c0_79] : memref<3x384x128xbf16, #tpu.memory_space<vmem>>, vector<1x384x128xbf16>
    %60 = vector.shape_cast %59 : vector<1x384x128xbf16> to vector<384x128xbf16>
    %cst_80 = arith.constant dense<0.000000e+00> : vector<256x128xf32>
    %61 = tpu.matmul %58, %60, %cst_80 {dimension_numbers = #tpu.dot_dimension_numbers<[1], [0], [0], [1], [0, 0, 1, 1], [], []>} : vector<256x384xbf16>, vector<384x128xbf16>, vector<256x128xf32> -> vector<256x128xf32>
    %62 = arith.addf %56, %61 : vector<256x128xf32>
    %c1_81 = arith.constant 1 : index
    %c0_82 = arith.constant 0 : index
    %c0_83 = arith.constant 0 : index
    %63 = vector.load %arg10[%c1_81, %c0_82, %c0_83] : memref<18x16x384xbf16, #tpu.memory_space<vmem>>, vector<16x16x384xbf16>
    %64 = vector.shape_cast %63 : vector<16x16x384xbf16> to vector<256x384xbf16>
    %c1_84 = arith.constant 1 : index
    %c0_85 = arith.constant 0 : index
    %c0_86 = arith.constant 0 : index
    %65 = vector.load %arg5[%c1_84, %c0_85, %c0_86] : memref<3x384x128xbf16, #tpu.memory_space<vmem>>, vector<1x384x128xbf16>
    %66 = vector.shape_cast %65 : vector<1x384x128xbf16> to vector<384x128xbf16>
    %cst_87 = arith.constant dense<0.000000e+00> : vector<256x128xf32>
    %67 = tpu.matmul %64, %66, %cst_87 {dimension_numbers = #tpu.dot_dimension_numbers<[1], [0], [0], [1], [0, 0, 1, 1], [], []>} : vector<256x384xbf16>, vector<384x128xbf16>, vector<256x128xf32> -> vector<256x128xf32>
    %68 = arith.addf %62, %67 : vector<256x128xf32>
    %c2_88 = arith.constant 2 : index
    %c0_89 = arith.constant 0 : index
    %c0_90 = arith.constant 0 : index
    %69 = vector.load %arg10[%c2_88, %c0_89, %c0_90] : memref<18x16x384xbf16, #tpu.memory_space<vmem>>, vector<16x16x384xbf16>
    %70 = vector.shape_cast %69 : vector<16x16x384xbf16> to vector<256x384xbf16>
    %c2_91 = arith.constant 2 : index
    %c0_92 = arith.constant 0 : index
    %c0_93 = arith.constant 0 : index
    %71 = vector.load %arg5[%c2_91, %c0_92, %c0_93] : memref<3x384x128xbf16, #tpu.memory_space<vmem>>, vector<1x384x128xbf16>
    %72 = vector.shape_cast %71 : vector<1x384x128xbf16> to vector<384x128xbf16>
    %cst_94 = arith.constant dense<0.000000e+00> : vector<256x128xf32>
    %73 = tpu.matmul %70, %72, %cst_94 {dimension_numbers = #tpu.dot_dimension_numbers<[1], [0], [0], [1], [0, 0, 1, 1], [], []>} : vector<256x384xbf16>, vector<384x128xbf16>, vector<256x128xf32> -> vector<256x128xf32>
    %74 = arith.addf %68, %73 : vector<256x128xf32>
    %75 = vector.broadcast %54 : vector<1x128xf32> to vector<256x128xf32>
    %76 = arith.mulf %74, %75 : vector<256x128xf32>
    %77 = vector.broadcast %55 : vector<1x128xf32> to vector<256x128xf32>
    %78 = arith.addf %76, %77 : vector<256x128xf32>
    %cst_95 = arith.constant 0.000000e+00 : f32
    %79 = vector.broadcast %cst_95 : f32 to vector<256x128xf32>
    %80 = arith.maximumf %78, %79 : vector<256x128xf32>
    %81 = vector.shape_cast %80 : vector<256x128xf32> to vector<16x16x128xf32>
    %c0_i32 = arith.constant 0 : i32
    %c0_i32_96 = arith.constant 0 : i32
    %c0_i32_97 = arith.constant 0 : i32
    %c0_i32_98 = arith.constant 0 : i32
    %82 = tpu.memref_slice %arg8[%c0_i32, %c0_i32_96, %c0_i32_97, %c0_i32_98] : memref<1x16x16x128xf32, #tpu.memory_space<vmem>> -> memref<1x16x16x128xf32, #tpu.memory_space<vmem>>
    %83 = tpu.memref_squeeze %82 : memref<1x16x16x128xf32, #tpu.memory_space<vmem>> -> memref<16x16x128xf32, #tpu.memory_space<vmem>>
    %c0_99 = arith.constant 0 : index
    %c0_100 = arith.constant 0 : index
    %c0_101 = arith.constant 0 : index
    %84 = vector.load %83[%c0_99, %c0_100, %c0_101] : memref<16x16x128xf32, #tpu.memory_space<vmem>>, vector<16x16x128xf32>
    tpu.vector_store %83[%c0_99, %c0_100, %c0_101], %81 {strides = array<i32>} : memref<16x16x128xf32, #tpu.memory_space<vmem>>, vector<16x16x128xf32>,
    return
  }
  func.func @transform_0(%arg0: i32) -> (i32, i32, i32, i32) {
    %c0_i32 = arith.constant 0 : i32
    %c0_i32_0 = arith.constant 0 : i32
    %c0_i32_1 = arith.constant 0 : i32
    %c0_i32_2 = arith.constant 0 : i32
    return %arg0, %c0_i32, %c0_i32_0, %c0_i32_1 : i32, i32, i32, i32
  }
  func.func @transform_1(%arg0: i32) -> (i32, i32, i32) {
    %c0_i32 = arith.constant 0 : i32
    %c0_i32_0 = arith.constant 0 : i32
    %c0_i32_1 = arith.constant 0 : i32
    %c0_i32_2 = arith.constant 0 : i32
    return %c0_i32, %c0_i32_0, %c0_i32_1 : i32, i32, i32
  }
  func.func @transform_2(%arg0: i32) -> (i32, i32) {
    %c0_i32 = arith.constant 0 : i32
    %c0_i32_0 = arith.constant 0 : i32
    %c0_i32_1 = arith.constant 0 : i32
    return %c0_i32, %c0_i32_0 : i32, i32
  }
  func.func @transform_3(%arg0: i32) -> (i32, i32) {
    %c0_i32 = arith.constant 0 : i32
    %c0_i32_0 = arith.constant 0 : i32
    %c0_i32_1 = arith.constant 0 : i32
    return %c0_i32, %c0_i32_0 : i32, i32
  }
  func.func @transform_4(%arg0: i32) -> (i32, i32, i32) {
    %c0_i32 = arith.constant 0 : i32
    %c0_i32_0 = arith.constant 0 : i32
    %c0_i32_1 = arith.constant 0 : i32
    %c0_i32_2 = arith.constant 0 : i32
    return %c0_i32, %c0_i32_0, %c0_i32_1 : i32, i32, i32
  }
  func.func @transform_5(%arg0: i32) -> (i32, i32) {
    %c0_i32 = arith.constant 0 : i32
    %c0_i32_0 = arith.constant 0 : i32
    %c0_i32_1 = arith.constant 0 : i32
    return %c0_i32, %c0_i32_0 : i32, i32
  }
  func.func @transform_6(%arg0: i32) -> (i32, i32) {
    %c0_i32 = arith.constant 0 : i32
    %c0_i32_0 = arith.constant 0 : i32
    %c0_i32_1 = arith.constant 0 : i32
    return %c0_i32, %c0_i32_0 : i32, i32
  }
  func.func @transform_7(%arg0: i32) -> (i32, i32, i32, i32) {
    %c0_i32 = arith.constant 0 : i32
    %c0_i32_0 = arith.constant 0 : i32
    %c0_i32_1 = arith.constant 0 : i32
    %c0_i32_2 = arith.constant 0 : i32
    return %arg0, %c0_i32, %c0_i32_0, %c0_i32_1 : i32, i32, i32, i32
  }
}

</mosaic_0001>

<llo_original>
// kernel: tpu_custom_call.1
$region0: #{tpu_custom_call.1}
  #allocation0 [shape = 'u32[]', space=smem, size = 0x4, offset = 0x4, fixed_abs, tag = 'smem constant byte address 0x4 - core index']
  #allocation1 [shape = 'u32[72,128]{1,0:T(1,128)}', space=vmem, size = 0x9000, scoped, tag = 'internal scratch']
  #allocation2 [shape = 'bf16[18,16,384]{2,1,0:T(8,128)(2,1)}', space=vmem, size = 0x36000, scoped, tag = 'scratch operand']
  #allocation3 [shape = 'bf16[18,16,384]{2,1,0:T(8,128)(2,1)}', space=vmem, size = 0x36000, scoped, tag = 'scratch operand']
  %s0 = inlined_call_operand.hbm [shape: f32[2,16,16,128], index: 0, kind: input, shape index: {}]
  %s1 = inlined_call_operand.hbm [shape: bf16[3,384,128], index: 1, kind: input, shape index: {}]
  %s2 = inlined_call_operand.vmem [shape: f32[1,128], index: 2, kind: input, shape index: {}]
  %s3 = inlined_call_operand.vmem [shape: f32[1,128], index: 3, kind: input, shape index: {}]
  %s4 = inlined_call_operand.hbm [shape: bf16[3,384,128], index: 4, kind: input, shape index: {}]
  %s5 = inlined_call_operand.vmem [shape: f32[1,128], index: 5, kind: input, shape index: {}]
  %s6 = inlined_call_operand.vmem [shape: f32[1,128], index: 6, kind: input, shape index: {}]
  %s7 = inlined_call_operand.hbm [shape: f32[2,16,16,128], index: 7, kind: output, shape index: {}]
  %s8 = sld [smem:[#allocation0]]
  $region73: #{tpu_custom_call.1} parent=0
    _
  %s10 = ssub.s32 1, %s8
  %s11 = scalar_select 0, %s10, %s8
  $region1: #{tpu_custom_call.1} parent=0
    #allocation4 [shape = 'u8[262144]{0}', space=vmem, size = 0x40000, scoped, tag = 'input window, operand 0']
    #allocation5 [shape = 's32[2]{0}', space=sflag, size = 0x8, scoped, tag = 'scoped memory for tpu_custom_call.1']
    #allocation6 [shape = 's32[2]{0}', space=sflag, size = 0x8, scoped, tag = 'scoped memory for tpu_custom_call.1']
    #allocation7 [shape = 'u8[294912]{0}', space=vmem, size = 0x48000, scoped, tag = 'input window, operand 1, single buffered']
    #allocation8 [shape = 's32[1]{0}', space=sflag, size = 0x4, scoped, tag = 'scoped memory for tpu_custom_call.1']
    #allocation9 [shape = 'u8[294912]{0}', space=vmem, size = 0x48000, scoped, tag = 'input window, operand 4, single buffered']
    #allocation10 [shape = 'u8[262144]{0}', space=vmem, size = 0x40000, scoped, tag = 'output window, operand 0']
    %12 = vsyncpa [#allocation5], 0
    %s13 = scalar_lea.sflag [#allocation5], 1
    %14 = vsyncpa %s13, 0
    %15 = vsyncpa [#allocation8], 0
    %16 = vsyncpa [#allocation6], 0
    %s17 = scalar_lea.sflag [#allocation6], 1
    %18 = vsyncpa %s17, 0
    loop: start=0, step=1, limit=4
    $region2: #{tpu_custom_call.1} parent=1 // loop_pre_header
      _
    $region3: #{tpu_custom_call.1} parent=1 // loop_header
      %s20 = sphi 0, %s24
      %p21 = scmp.ge.s32.totalorder %s20, 4
      %s30 = sphi 0, %s32
      %s33 = sphi 0, %s30
      %s34 = sphi 0, %s33
      %s50 = sphi 0, %s34
      %s54 = sphi 0, %s54
      %s56 = sphi 0, %s54
      %s57 = sphi 0, %s56
      %s71 = sphi 0, %s57
      %s75 = sphi 0, %s75
      %s77 = sphi 0, %s75
      %s78 = sphi 0, %s77
      %s92 = sphi 0, %s78
      %s96 = sphi 0, %s96
      %s98 = sphi 0, %s96
      %s99 = sphi 0, %s98
      %s113 = sphi 0, %s99
      %s117 = sphi 0, %s117
      %s119 = sphi 0, %s117
      %s120 = sphi 0, %s119
      %s134 = sphi 0, %s120
      %s138 = sphi 0, %s138
      %s140 = sphi 0, %s138
      %s141 = sphi 0, %s140
      %s155 = sphi 0, %s141
      %s159 = sphi 0, %s159
      %s161 = sphi 0, %s159
      %s162 = sphi 0, %s161
      %s176 = sphi 0, %s162
      %s182 = sphi 0, %s184
      %s185 = sphi 0, %s182
      %s186 = sphi 0, %s185
      %s202 = sphi 0, %s186
    $region4: #{tpu_custom_call.1} parent=1 // loop_header_branch
      %23 = sbr.rel (%p21) target = $region8
    $region5: #{tpu_custom_call.1} parent=1 // loop_body
      %s25 = ssub.s32 %s20, 1
      %s26 = ssub.s32 %s20, 2
      %s27 = sadd.s32 %s20, 1
      %s28 = ssub.s32 %s20, %s27
      %p29 = scmp.eq.s32.totalorder %s28, 0
      %s31 = sadd.s32 %s30, 1
      %s32 = scalar_select %p29, %s30, %s31
      %p35 = pneg %p29
      %p36 = scmp.eq.s32.totalorder %s20, 1
      %p37 = por %p35, %p36
      %p38 = scmp.ne.s32.totalorder %s30, %s33
      %p39 = scmp.eq.s32.totalorder %s20, 0
      %p40 = por %p38, %p39
      %p41 = scmp.ne.s32.totalorder %s30, %s33
      %p42 = scmp.eq.s32.totalorder %s25, 1
      %p43 = por %p41, %p42
      %p44 = scmp.ne.s32.totalorder %s33, %s34
      %p45 = scmp.eq.s32.totalorder %s25, 0
      %p46 = por %p44, %p45
      %p47 = scmp.ne.s32.totalorder %s33, %s34
      %p48 = scmp.eq.s32.totalorder %s26, 1
      %p49 = por %p47, %p48
      %p51 = scmp.ne.s32.totalorder %s34, %s50
      %p52 = scmp.eq.s32.totalorder %s26, 0
      %p53 = por %p51, %p52
      %s55 = sadd.s32 %s54, 1
      %p58 = scmp.eq.s32.totalorder %s20, 1
      %p59 = scmp.ne.s32.totalorder %s54, %s56
      %p60 = scmp.eq.s32.totalorder %s20, 0
      %p61 = por %p59, %p60
      %p62 = scmp.ne.s32.totalorder %s54, %s56
      %p63 = scmp.eq.s32.totalorder %s25, 1
      %p64 = por %p62, %p63
      %p65 = scmp.ne.s32.totalorder %s56, %s57
      %p66 = scmp.eq.s32.totalorder %s25, 0
      %p67 = por %p65, %p66
      %p68 = scmp.ne.s32.totalorder %s56, %s57
      %p69 = scmp.eq.s32.totalorder %s26, 1
      %p70 = por %p68, %p69
      %p72 = scmp.ne.s32.totalorder %s57, %s71
      %p73 = scmp.eq.s32.totalorder %s26, 0
      %p74 = por %p72, %p73
      %s76 = sadd.s32 %s75, 1
      %p79 = scmp.eq.s32.totalorder %s20, 1
      %p80 = scmp.ne.s32.totalorder %s75, %s77
      %p81 = scmp.eq.s32.totalorder %s20, 0
      %p82 = por %p80, %p81
      %p83 = scmp.ne.s32.totalorder %s75, %s77
      %p84 = scmp.eq.s32.totalorder %s25, 1
      %p85 = por %p83, %p84
      %p86 = scmp.ne.s32.totalorder %s77, %s78
      %p87 = scmp.eq.s32.totalorder %s25, 0
      %p88 = por %p86, %p87
      %p89 = scmp.ne.s32.totalorder %s77, %s78
      %p90 = scmp.eq.s32.totalorder %s26, 1
      %p91 = por %p89, %p90
      %p93 = scmp.ne.s32.totalorder %s78, %s92
      %p94 = scmp.eq.s32.totalorder %s26, 0
      %p95 = por %p93, %p94
      %s97 = sadd.s32 %s96, 1
      %p100 = scmp.eq.s32.totalorder %s20, 1
      %p101 = scmp.ne.s32.totalorder %s96, %s98
      %p102 = scmp.eq.s32.totalorder %s20, 0
      %p103 = por %p101, %p102
      %p104 = scmp.ne.s32.totalorder %s96, %s98
      %p105 = scmp.eq.s32.totalorder %s25, 1
      %p106 = por %p104, %p105
      %p107 = scmp.ne.s32.totalorder %s98, %s99
      %p108 = scmp.eq.s32.totalorder %s25, 0
      %p109 = por %p107, %p108
      %p110 = scmp.ne.s32.totalorder %s98, %s99
      %p111 = scmp.eq.s32.totalorder %s26, 1
      %p112 = por %p110, %p111
      %p114 = scmp.ne.s32.totalorder %s99, %s113
      %p115 = scmp.eq.s32.totalorder %s26, 0
      %p116 = por %p114, %p115
      %s118 = sadd.s32 %s117, 1
      %p121 = scmp.eq.s32.totalorder %s20, 1
      %p122 = scmp.ne.s32.totalorder %s117, %s119
      %p123 = scmp.eq.s32.totalorder %s20, 0
      %p124 = por %p122, %p123
      %p125 = scmp.ne.s32.totalorder %s117, %s119
      %p126 = scmp.eq.s32.totalorder %s25, 1
      %p127 = por %p125, %p126
      %p128 = scmp.ne.s32.totalorder %s119, %s120
      %p129 = scmp.eq.s32.totalorder %s25, 0
      %p130 = por %p128, %p129
      %p131 = scmp.ne.s32.totalorder %s119, %s120
      %p132 = scmp.eq.s32.totalorder %s26, 1
      %p133 = por %p131, %p132
      %p135 = scmp.ne.s32.totalorder %s120, %s134
      %p136 = scmp.eq.s32.totalorder %s26, 0
      %p137 = por %p135, %p136
      %s139 = sadd.s32 %s138, 1
      %p142 = scmp.eq.s32.totalorder %s20, 1
      %p143 = scmp.ne.s32.totalorder %s138, %s140
      %p144 = scmp.eq.s32.totalorder %s20, 0
      %p145 = por %p143, %p144
      %p146 = scmp.ne.s32.totalorder %s138, %s140
      %p147 = scmp.eq.s32.totalorder %s25, 1
      %p148 = por %p146, %p147
      %p149 = scmp.ne.s32.totalorder %s140, %s141
      %p150 = scmp.eq.s32.totalorder %s25, 0
      %p151 = por %p149, %p150
      %p152 = scmp.ne.s32.totalorder %s140, %s141
      %p153 = scmp.eq.s32.totalorder %s26, 1
      %p154 = por %p152, %p153
      %p156 = scmp.ne.s32.totalorder %s141, %s155
      %p157 = scmp.eq.s32.totalorder %s26, 0
      %p158 = por %p156, %p157
      %s160 = sadd.s32 %s159, 1
      %p163 = scmp.eq.s32.totalorder %s20, 1
      %p164 = scmp.ne.s32.totalorder %s159, %s161
      %p165 = scmp.eq.s32.totalorder %s20, 0
      %p166 = por %p164, %p165
      %p167 = scmp.ne.s32.totalorder %s159, %s161
      %p168 = scmp.eq.s32.totalorder %s25, 1
      %p169 = por %p167, %p168
      %p170 = scmp.ne.s32.totalorder %s161, %s162
      %p171 = scmp.eq.s32.totalorder %s25, 0
      %p172 = por %p170, %p171
      %p173 = scmp.ne.s32.totalorder %s161, %s162
      %p174 = scmp.eq.s32.totalorder %s26, 1
      %p175 = por %p173, %p174
      %p177 = scmp.ne.s32.totalorder %s162, %s176
      %p178 = scmp.eq.s32.totalorder %s26, 0
      %p179 = por %p177, %p178
      %s180 = ssub.s32 %s20, %s27
      %p181 = scmp.eq.s32.totalorder %s180, 0
      %s183 = sadd.s32 %s182, 1
      %s184 = scalar_select %p181, %s182, %s183
      %p187 = pneg %p181
      %p188 = scmp.eq.s32.totalorder %s20, 1
      %p189 = por %p187, %p188
      %p190 = scmp.ne.s32.totalorder %s182, %s185
      %p191 = scmp.eq.s32.totalorder %s20, 0
      %p192 = por %p190, %p191
      %p193 = scmp.ne.s32.totalorder %s182, %s185
      %p194 = scmp.eq.s32.totalorder %s25, 1
      %p195 = por %p193, %p194
      %p196 = scmp.ne.s32.totalorder %s185, %s186
      %p197 = scmp.eq.s32.totalorder %s25, 0
      %p198 = por %p196, %p197
      %p199 = scmp.ne.s32.totalorder %s185, %s186
      %p200 = scmp.eq.s32.totalorder %s26, 1
      %p201 = por %p199, %p200
      %p203 = scmp.ne.s32.totalorder %s186, %s202
      %p204 = scmp.eq.s32.totalorder %s26, 0
      %p205 = por %p203, %p204
      %p206 = scmp.le.s32.totalorder 1, %s20
      %p207 = scmp.lt.s32.totalorder %s20, 3
      %p208 = pnand %p206, %p207
      %p209 = pneg %p208
      // Predicated region
      $region9: #{tpu_custom_call.1} parent=5 // pred_check
        _
      $region10: #{tpu_custom_call.1} parent=5 // pred_check_branch
        %211 = sbr.rel (%p208) target = $region12
      $region11: #{tpu_custom_call.1} parent=5 // pred_region
        %s212 = ssub.s32 %s20, 1
        // Predicated region
        $region13: #{tpu_custom_call.1} parent=11 // pred_check
          %p213 = pneg %p67
        $region14: #{tpu_custom_call.1} parent=11 // pred_check_branch
          %215 = sbr.rel (%p213) target = $region16
        $region15: #{tpu_custom_call.1} parent=11 // pred_region
          %217 = vsyncadd [#allocation8], 0
          %s218 = sshll.u32 %s1, 4
          %s219 = int_to_ptr.hbm [resolvable:$true] %s218
          %s220 = sshll.u32 [#allocation7], 4
          %s221 = int_to_ptr.vmem [resolvable:$true] %s220
          %226 = dma.hbm_to_vmem [thread:$0]  %s219, 9216, %s221, [#allocation8], 64, 64, 4
        $region16: #{tpu_custom_call.1} parent=11 // pred_fallthru
          _
        // Predicated region
        $region17: #{tpu_custom_call.1} parent=11 // pred_check
          %p227 = pneg %p88
        $region18: #{tpu_custom_call.1} parent=11 // pred_check_branch
          %229 = sbr.rel (%p227) target = $region20
        $region19: #{tpu_custom_call.1} parent=11 // pred_region
          _
        $region20: #{tpu_custom_call.1} parent=11 // pred_fallthru
          _
        // Predicated region
        $region21: #{tpu_custom_call.1} parent=11 // pred_check
          %p230 = pneg %p109
        $region22: #{tpu_custom_call.1} parent=11 // pred_check_branch
          %232 = sbr.rel (%p230) target = $region24
        $region23: #{tpu_custom_call.1} parent=11 // pred_region
          _
        $region24: #{tpu_custom_call.1} parent=11 // pred_fallthru
          _
        // Predicated region
        $region25: #{tpu_custom_call.1} parent=11 // pred_check
          %p233 = pneg %p130
        $region26: #{tpu_custom_call.1} parent=11 // pred_check_branch
          %235 = sbr.rel (%p233) target = $region28
        $region27: #{tpu_custom_call.1} parent=11 // pred_region
          %237 = vsyncadd [#allocation8], 0
          %s238 = sshll.u32 %s4, 4
          %s239 = int_to_ptr.hbm [resolvable:$true] %s238
          %s240 = sshll.u32 [#allocation9], 4
          %s241 = int_to_ptr.vmem [resolvable:$true] %s240
          %246 = dma.hbm_to_vmem [thread:$0]  %s239, 9216, %s241, [#allocation8], 64, 64, 4
        $region28: #{tpu_custom_call.1} parent=11 // pred_fallthru
          _
        // Predicated region
        $region29: #{tpu_custom_call.1} parent=11 // pred_check
          %p247 = pneg %p151
        $region30: #{tpu_custom_call.1} parent=11 // pred_check_branch
          %249 = sbr.rel (%p247) target = $region32
        $region31: #{tpu_custom_call.1} parent=11 // pred_region
          _
        $region32: #{tpu_custom_call.1} parent=11 // pred_fallthru
          _
        // Predicated region
        $region33: #{tpu_custom_call.1} parent=11 // pred_check
          %p250 = pneg %p172
        $region34: #{tpu_custom_call.1} parent=11 // pred_check_branch
          %252 = sbr.rel (%p250) target = $region36
        $region35: #{tpu_custom_call.1} parent=11 // pred_region
          _
        $region36: #{tpu_custom_call.1} parent=11 // pred_fallthru
          _
      $region12: #{tpu_custom_call.1} parent=5 // pred_fallthru
        _
      %p253 = scmp.lt.s32.totalorder %s20, 2
      // Predicated region
      $region37: #{tpu_custom_call.1} parent=5 // pred_check
        %p254 = pneg %p253
      $region38: #{tpu_custom_call.1} parent=5 // pred_check_branch
        %256 = sbr.rel (%p254) target = $region40
      $region39: #{tpu_custom_call.1} parent=5 // pred_region
        // Predicated region
        $region41: #{tpu_custom_call.1} parent=39 // pred_check
          %p257 = pneg %p40
        $region42: #{tpu_custom_call.1} parent=39 // pred_check_branch
          %259 = sbr.rel (%p257) target = $region44
        $region43: #{tpu_custom_call.1} parent=39 // pred_region
          %s260 = sand.u32 %s30, 1
          %s261 = scalar_lea.sflag [#allocation5], %s260
          %s262 = sand.u32 %s30, 1
          %s263 = smul.addr %s262, 256
          %s264 = scalar_lea.vmem [#allocation4], %s263
          %266 = vsyncadd %s261, 0
          %s267 = smul.addr %s20, 32
          %s268 = smul.addr %s267, 8
          %s269 = scalar_lea.hbm %s0, %s268
          %s270 = sshll.u32 %s269, 4
          %s271 = int_to_ptr.hbm [resolvable:$true] %s270
          %s272 = sshll.u32 %s264, 4
          %s273 = int_to_ptr.vmem [resolvable:$true] %s272
          %278 = dma.hbm_to_vmem [thread:$0]  %s271, 4096, %s273, %s261, 128, 128, 8
        $region44: #{tpu_custom_call.1} parent=39 // pred_fallthru
          _
      $region40: #{tpu_custom_call.1} parent=5 // pred_fallthru
        _
      %p279 = scmp.le.s32.totalorder 1, %s20
      %p280 = scmp.lt.s32.totalorder %s20, 3
      %p281 = pnand %p279, %p280
      %p282 = pneg %p281
      // Predicated region
      $region45: #{tpu_custom_call.1} parent=5 // pred_check
        _
      $region46: #{tpu_custom_call.1} parent=5 // pred_check_branch
        %284 = sbr.rel (%p281) target = $region48
      $region47: #{tpu_custom_call.1} parent=5 // pred_region
        %s285 = ssub.s32 %s20, 1
        %s286 = sand.u32 %s33, 1
        %s287 = scalar_lea.sflag [#allocation5], %s286
        %s288 = sand.u32 %s33, 1
        %s289 = smul.addr %s288, 256
        %s290 = scalar_lea.vmem [#allocation4], %s289
        // Predicated region
        $region49: #{tpu_custom_call.1} parent=47 // pred_check
          %p291 = pneg %p46
        $region50: #{tpu_custom_call.1} parent=47 // pred_check_branch
          %293 = sbr.rel (%p291) target = $region52
        $region51: #{tpu_custom_call.1} parent=47 // pred_region
          %295 = dma.done %s287, 4096
        $region52: #{tpu_custom_call.1} parent=47 // pred_fallthru
          _
        // Predicated region
        $region53: #{tpu_custom_call.1} parent=47 // pred_check
          %p296 = pneg %p67
        $region54: #{tpu_custom_call.1} parent=47 // pred_check_branch
          %298 = sbr.rel (%p296) target = $region56
        $region55: #{tpu_custom_call.1} parent=47 // pred_region
          %300 = dma.done [#allocation8], 9216
        $region56: #{tpu_custom_call.1} parent=47 // pred_fallthru
          _
        // Predicated region
        $region57: #{tpu_custom_call.1} parent=47 // pred_check
          %p301 = pneg %p130
        $region58: #{tpu_custom_call.1} parent=47 // pred_check_branch
          %303 = sbr.rel (%p301) target = $region60
        $region59: #{tpu_custom_call.1} parent=47 // pred_region
          %305 = dma.done [#allocation8], 9216
        $region60: #{tpu_custom_call.1} parent=47 // pred_fallthru
          _
        %s306 = sand.u32 %s33, 1
        %s307 = scalar_lea.sflag [#allocation5], %s306
        %s308 = sand.u32 %s33, 1
        %s309 = smul.addr %s308, 256
        %s310 = scalar_lea.vmem [#allocation4], %s309
        %p311 = pneg %p46
        %p312 = pneg %p43
        %p313 = pneg %p67
        %p314 = pneg %p64
        %p315 = pneg %p88
        %p316 = pneg %p85
        %p317 = pneg %p109
        %p318 = pneg %p106
        %p319 = pneg %p130
        %p320 = pneg %p127
        %p321 = pneg %p151
        %p322 = pneg %p148
        %p323 = pneg %p172
        %p324 = pneg %p169
        %p325 = pneg %p198
        %p326 = pneg %p195
        %s327 = sand.u32 %s185, 1
        %s328 = scalar_lea.sflag [#allocation6], %s327
        %s329 = sand.u32 %s185, 1
        %s330 = smul.addr %s329, 256
        %s331 = scalar_lea.vmem [#allocation10], %s330
        %333 = vst [vmem:[#allocation2] sm:$0xff] 0
        %334 = vst [vmem:[#allocation2 + $0x8] sm:$0xf] 0
        %335 = vst [vmem:[#allocation2 + $0xc] sm:$0xff] 0
        %336 = vst [vmem:[#allocation2 + $0x14] sm:$0xf] 0
        %s337 = scalar_lea.vmem [#allocation2], 408
        %338 = vst [vmem:[%s337] sm:$0xff] 0
        %339 = vst [vmem:[%s337 + $0x8] sm:$0xf] 0
        %340 = vst [vmem:[%s337 + $0xc] sm:$0xff] 0
        %341 = vst [vmem:[%s337 + $0x14] sm:$0xf] 0
        %vm342 = vcmask 1040384
        %vm343 = vsmask.f32 256
        %vm344 = vmand %vm342, %vm343
        %v345 = vld [vmem:[#allocation2] sm:$0x1]
        %v346 = vsel %vm344, 0, %v345
        %347 = vst [vmem:[#allocation2] sm:$0x1] %v346
        %v348 = vld [vmem:[#allocation2 + $0x18] sm:$0x1]
        %v349 = vsel %vm344, 0, %v348
        %350 = vst [vmem:[#allocation2 + $0x18] sm:$0x1] %v349
        %v351 = vld [vmem:[#allocation2 + $0x30] sm:$0x1]
        %v352 = vsel %vm344, 0, %v351
        %353 = vst [vmem:[#allocation2 + $0x30] sm:$0x1] %v352
        %v354 = vld [vmem:[#allocation2 + $0x48] sm:$0x1]
        %v355 = vsel %vm344, 0, %v354
        %356 = vst [vmem:[#allocation2 + $0x48] sm:$0x1] %v355
        %v357 = vld [vmem:[#allocation2 + $0x60] sm:$0x1]
        %v358 = vsel %vm344, 0, %v357
        %359 = vst [vmem:[#allocation2 + $0x60] sm:$0x1] %v358
        %v360 = vld [vmem:[#allocation2 + $0x78] sm:$0x1]
        %v361 = vsel %vm344, 0, %v360
        %362 = vst [vmem:[#allocation2 + $0x78] sm:$0x1] %v361
        %v363 = vld [vmem:[#allocation2 + $0x90] sm:$0x1]
        %v364 = vsel %vm344, 0, %v363
        %365 = vst [vmem:[#allocation2 + $0x90] sm:$0x1] %v364
        %v366 = vld [vmem:[#allocation2 + $0xa8] sm:$0x1]
        %v367 = vsel %vm344, 0, %v366
        %368 = vst [vmem:[#allocation2 + $0xa8] sm:$0x1] %v367
        %v369 = vld [vmem:[#allocation2 + $0xc0] sm:$0x1]
        %v370 = vsel %vm344, 0, %v369
        %371 = vst [vmem:[#allocation2 + $0xc0] sm:$0x1] %v370
        %v372 = vld [vmem:[#allocation2 + $0xd8] sm:$0x1]
        %v373 = vsel %vm344, 0, %v372
        %374 = vst [vmem:[#allocation2 + $0xd8] sm:$0x1] %v373
        %v375 = vld [vmem:[#allocation2 + $0xf0] sm:$0x1]
        %v376 = vsel %vm344, 0, %v375
        %377 = vst [vmem:[#allocation2 + $0xf0] sm:$0x1] %v376
        %v378 = vld [vmem:[#allocation2 + $0x108] sm:$0x1]
        %v379 = vsel %vm344, 0, %v378
        %380 = vst [vmem:[#allocation2 + $0x108] sm:$0x1] %v379
        %v381 = vld [vmem:[#allocation2 + $0x120] sm:$0x1]
        %v382 = vsel %vm344, 0, %v381
        %383 = vst [vmem:[#allocation2 + $0x120] sm:$0x1] %v382
        %v384 = vld [vmem:[#allocation2 + $0x138] sm:$0x1]
        %v385 = vsel %vm344, 0, %v384
        %386 = vst [vmem:[#allocation2 + $0x138] sm:$0x1] %v385
        %v387 = vld [vmem:[#allocation2 + $0x150] sm:$0x1]
        %v388 = vsel %vm344, 0, %v387
        %389 = vst [vmem:[#allocation2 + $0x150] sm:$0x1] %v388
        %v390 = vld [vmem:[#allocation2 + $0x168] sm:$0x1]
        %v391 = vsel %vm344, 0, %v390
        %392 = vst [vmem:[#allocation2 + $0x168] sm:$0x1] %v391
        %v393 = vld [vmem:[#allocation2 + $0x180] sm:$0x1]
        %v394 = vsel %vm344, 0, %v393
        %395 = vst [vmem:[#allocation2 + $0x180] sm:$0x1] %v394
        %v396 = vld [vmem:[#allocation2 + $0x198] sm:$0x1]
        %v397 = vsel %vm344, 0, %v396
        %398 = vst [vmem:[#allocation2 + $0x198] sm:$0x1] %v397
        %vm399 = vcmask 1043459
        %vm400 = vsmask.f32 7950
        %vm401 = vmand %vm399, %vm400
        %v402 = vld [vmem:[#allocation2 + $0x14] sm:$0x8]
        %v403 = vsel %vm401, 0, %v402
        %404 = vst [vmem:[#allocation2 + $0x14] sm:$0x8] %v403
        %v405 = vld [vmem:[#allocation2 + $0x2c] sm:$0x8]
        %v406 = vsel %vm401, 0, %v405
        %407 = vst [vmem:[#allocation2 + $0x2c] sm:$0x8] %v406
        %v408 = vld [vmem:[#allocation2 + $0x44] sm:$0x8]
        %v409 = vsel %vm401, 0, %v408
        %410 = vst [vmem:[#allocation2 + $0x44] sm:$0x8] %v409
        %v411 = vld [vmem:[#allocation2 + $0x5c] sm:$0x8]
        %v412 = vsel %vm401, 0, %v411
        %413 = vst [vmem:[#allocation2 + $0x5c] sm:$0x8] %v412
        %v414 = vld [vmem:[#allocation2 + $0x74] sm:$0x8]
        %v415 = vsel %vm401, 0, %v414
        %416 = vst [vmem:[#allocation2 + $0x74] sm:$0x8] %v415
        %v417 = vld [vmem:[#allocation2 + $0x8c] sm:$0x8]
        %v418 = vsel %vm401, 0, %v417
        %419 = vst [vmem:[#allocation2 + $0x8c] sm:$0x8] %v418
        %v420 = vld [vmem:[#allocation2 + $0xa4] sm:$0x8]
        %v421 = vsel %vm401, 0, %v420
        %422 = vst [vmem:[#allocation2 + $0xa4] sm:$0x8] %v421
        %v423 = vld [vmem:[#allocation2 + $0xbc] sm:$0x8]
        %v424 = vsel %vm401, 0, %v423
        %425 = vst [vmem:[#allocation2 + $0xbc] sm:$0x8] %v424
        %v426 = vld [vmem:[#allocation2 + $0xd4] sm:$0x8]
        %v427 = vsel %vm401, 0, %v426
        %428 = vst [vmem:[#allocation2 + $0xd4] sm:$0x8] %v427
        %v429 = vld [vmem:[#allocation2 + $0xec] sm:$0x8]
        %v430 = vsel %vm401, 0, %v429
        %431 = vst [vmem:[#allocation2 + $0xec] sm:$0x8] %v430
        %v432 = vld [vmem:[#allocation2 + $0x104] sm:$0x8]
        %v433 = vsel %vm401, 0, %v432
        %434 = vst [vmem:[#allocation2 + $0x104] sm:$0x8] %v433
        %v435 = vld [vmem:[#allocation2 + $0x11c] sm:$0x8]
        %v436 = vsel %vm401, 0, %v435
        %437 = vst [vmem:[#allocation2 + $0x11c] sm:$0x8] %v436
        %v438 = vld [vmem:[#allocation2 + $0x134] sm:$0x8]
        %v439 = vsel %vm401, 0, %v438
        %440 = vst [vmem:[#allocation2 + $0x134] sm:$0x8] %v439
        %v441 = vld [vmem:[#allocation2 + $0x14c] sm:$0x8]
        %v442 = vsel %vm401, 0, %v441
        %443 = vst [vmem:[#allocation2 + $0x14c] sm:$0x8] %v442
        %v444 = vld [vmem:[#allocation2 + $0x164] sm:$0x8]
        %v445 = vsel %vm401, 0, %v444
        %446 = vst [vmem:[#allocation2 + $0x164] sm:$0x8] %v445
        %v447 = vld [vmem:[#allocation2 + $0x17c] sm:$0x8]
        %v448 = vsel %vm401, 0, %v447
        %449 = vst [vmem:[#allocation2 + $0x17c] sm:$0x8] %v448
        %v450 = vld [vmem:[#allocation2 + $0x194] sm:$0x8]
        %v451 = vsel %vm401, 0, %v450
        %452 = vst [vmem:[#allocation2 + $0x194] sm:$0x8] %v451
        %v453 = vld [vmem:[#allocation2 + $0x1ac] sm:$0x8]
        %v454 = vsel %vm401, 0, %v453
        %455 = vst [vmem:[#allocation2 + $0x1ac] sm:$0x8] %v454
        %456 = vst [vmem:[#allocation3] sm:$0xff] 0
        %457 = vst [vmem:[#allocation3 + $0x8] sm:$0xf] 0
        %458 = vst [vmem:[#allocation3 + $0xc] sm:$0xff] 0
        %459 = vst [vmem:[#allocation3 + $0x14] sm:$0xf] 0
        %s460 = scalar_lea.vmem [#allocation3], 408
        %461 = vst [vmem:[%s460] sm:$0xff] 0
        %462 = vst [vmem:[%s460 + $0x8] sm:$0xf] 0
        %463 = vst [vmem:[%s460 + $0xc] sm:$0xff] 0
        %464 = vst [vmem:[%s460 + $0x14] sm:$0xf] 0
        %v465 = vld [vmem:[#allocation3] sm:$0x1]
        %v466 = vsel %vm344, 0, %v465
        %467 = vst [vmem:[#allocation3] sm:$0x1] %v466
        %v468 = vld [vmem:[#allocation3 + $0x18] sm:$0x1]
        %v469 = vsel %vm344, 0, %v468
        %470 = vst [vmem:[#allocation3 + $0x18] sm:$0x1] %v469
        %v471 = vld [vmem:[#allocation3 + $0x30] sm:$0x1]
        %v472 = vsel %vm344, 0, %v471
        %473 = vst [vmem:[#allocation3 + $0x30] sm:$0x1] %v472
        %v474 = vld [vmem:[#allocation3 + $0x48] sm:$0x1]
        %v475 = vsel %vm344, 0, %v474
        %476 = vst [vmem:[#allocation3 + $0x48] sm:$0x1] %v475
        %v477 = vld [vmem:[#allocation3 + $0x60] sm:$0x1]
        %v478 = vsel %vm344, 0, %v477
        %479 = vst [vmem:[#allocation3 + $0x60] sm:$0x1] %v478
        %v480 = vld [vmem:[#allocation3 + $0x78] sm:$0x1]
        %v481 = vsel %vm344, 0, %v480
        %482 = vst [vmem:[#allocation3 + $0x78] sm:$0x1] %v481
        %v483 = vld [vmem:[#allocation3 + $0x90] sm:$0x1]
        %v484 = vsel %vm344, 0, %v483
        %485 = vst [vmem:[#allocation3 + $0x90] sm:$0x1] %v484
        %v486 = vld [vmem:[#allocation3 + $0xa8] sm:$0x1]
        %v487 = vsel %vm344, 0, %v486
        %488 = vst [vmem:[#allocation3 + $0xa8] sm:$0x1] %v487
        %v489 = vld [vmem:[#allocation3 + $0xc0] sm:$0x1]
        %v490 = vsel %vm344, 0, %v489
        %491 = vst [vmem:[#allocation3 + $0xc0] sm:$0x1] %v490
        %v492 = vld [vmem:[#allocation3 + $0xd8] sm:$0x1]
        %v493 = vsel %vm344, 0, %v492
        %494 = vst [vmem:[#allocation3 + $0xd8] sm:$0x1] %v493
        %v495 = vld [vmem:[#allocation3 + $0xf0] sm:$0x1]
        %v496 = vsel %vm344, 0, %v495
        %497 = vst [vmem:[#allocation3 + $0xf0] sm:$0x1] %v496
        %v498 = vld [vmem:[#allocation3 + $0x108] sm:$0x1]
        %v499 = vsel %vm344, 0, %v498
        %500 = vst [vmem:[#allocation3 + $0x108] sm:$0x1] %v499
        %v501 = vld [vmem:[#allocation3 + $0x120] sm:$0x1]
        %v502 = vsel %vm344, 0, %v501
        %503 = vst [vmem:[#allocation3 + $0x120] sm:$0x1] %v502
        %v504 = vld [vmem:[#allocation3 + $0x138] sm:$0x1]
        %v505 = vsel %vm344, 0, %v504
        %506 = vst [vmem:[#allocation3 + $0x138] sm:$0x1] %v505
        %v507 = vld [vmem:[#allocation3 + $0x150] sm:$0x1]
        %v508 = vsel %vm344, 0, %v507
        %509 = vst [vmem:[#allocation3 + $0x150] sm:$0x1] %v508
        %v510 = vld [vmem:[#allocation3 + $0x168] sm:$0x1]
        %v511 = vsel %vm344, 0, %v510
        %512 = vst [vmem:[#allocation3 + $0x168] sm:$0x1] %v511
        %v513 = vld [vmem:[#allocation3 + $0x180] sm:$0x1]
        %v514 = vsel %vm344, 0, %v513
        %515 = vst [vmem:[#allocation3 + $0x180] sm:$0x1] %v514
        %v516 = vld [vmem:[#allocation3 + $0x198] sm:$0x1]
        %v517 = vsel %vm344, 0, %v516
        %518 = vst [vmem:[#allocation3 + $0x198] sm:$0x1] %v517
        %v519 = vld [vmem:[#allocation3 + $0x14] sm:$0x8]
        %v520 = vsel %vm401, 0, %v519
        %521 = vst [vmem:[#allocation3 + $0x14] sm:$0x8] %v520
        %v522 = vld [vmem:[#allocation3 + $0x2c] sm:$0x8]
        %v523 = vsel %vm401, 0, %v522
        %524 = vst [vmem:[#allocation3 + $0x2c] sm:$0x8] %v523
        %v525 = vld [vmem:[#allocation3 + $0x44] sm:$0x8]
        %v526 = vsel %vm401, 0, %v525
        %527 = vst [vmem:[#allocation3 + $0x44] sm:$0x8] %v526
        %v528 = vld [vmem:[#allocation3 + $0x5c] sm:$0x8]
        %v529 = vsel %vm401, 0, %v528
        %530 = vst [vmem:[#allocation3 + $0x5c] sm:$0x8] %v529
        %v531 = vld [vmem:[#allocation3 + $0x74] sm:$0x8]
        %v532 = vsel %vm401, 0, %v531
        %533 = vst [vmem:[#allocation3 + $0x74] sm:$0x8] %v532
        %v534 = vld [vmem:[#allocation3 + $0x8c] sm:$0x8]
        %v535 = vsel %vm401, 0, %v534
        %536 = vst [vmem:[#allocation3 + $0x8c] sm:$0x8] %v535
        %v537 = vld [vmem:[#allocation3 + $0xa4] sm:$0x8]
        %v538 = vsel %vm401, 0, %v537
        %539 = vst [vmem:[#allocation3 + $0xa4] sm:$0x8] %v538
        %v540 = vld [vmem:[#allocation3 + $0xbc] sm:$0x8]
        %v541 = vsel %vm401, 0, %v540
        %542 = vst [vmem:[#allocation3 + $0xbc] sm:$0x8] %v541
        %v543 = vld [vmem:[#allocation3 + $0xd4] sm:$0x8]
        %v544 = vsel %vm401, 0, %v543
        %545 = vst [vmem:[#allocation3 + $0xd4] sm:$0x8] %v544
        %v546 = vld [vmem:[#allocation3 + $0xec] sm:$0x8]
        %v547 = vsel %vm401, 0, %v546
        %548 = vst [vmem:[#allocation3 + $0xec] sm:$0x8] %v547
        %v549 = vld [vmem:[#allocation3 + $0x104] sm:$0x8]
        %v550 = vsel %vm401, 0, %v549
        %551 = vst [vmem:[#allocation3 + $0x104] sm:$0x8] %v550
        %v552 = vld [vmem:[#allocation3 + $0x11c] sm:$0x8]
        %v553 = vsel %vm401, 0, %v552
        %554 = vst [vmem:[#allocation3 + $0x11c] sm:$0x8] %v553
        %v555 = vld [vmem:[#allocation3 + $0x134] sm:$0x8]
        %v556 = vsel %vm401, 0, %v555
        %557 = vst [vmem:[#allocation3 + $0x134] sm:$0x8] %v556
        %v558 = vld [vmem:[#allocation3 + $0x14c] sm:$0x8]
        %v559 = vsel %vm401, 0, %v558
        %560 = vst [vmem:[#allocation3 + $0x14c] sm:$0x8] %v559
        %v561 = vld [vmem:[#allocation3 + $0x164] sm:$0x8]
        %v562 = vsel %vm401, 0, %v561
        %563 = vst [vmem:[#allocation3 + $0x164] sm:$0x8] %v562
        %v564 = vld [vmem:[#allocation3 + $0x17c] sm:$0x8]
        %v565 = vsel %vm401, 0, %v564
        %566 = vst [vmem:[#allocation3 + $0x17c] sm:$0x8] %v565
        %v567 = vld [vmem:[#allocation3 + $0x194] sm:$0x8]
        %v568 = vsel %vm401, 0, %v567
        %569 = vst [vmem:[#allocation3 + $0x194] sm:$0x8] %v568
        %v570 = vld [vmem:[#allocation3 + $0x1ac] sm:$0x8]
        %v571 = vsel %vm401, 0, %v570
        %572 = vst [vmem:[#allocation3 + $0x1ac] sm:$0x8] %v571
        %v573 = vld [vmem:[%s290] sm:$0xff]
        %v574 = vld [vmem:[%s290 + $0x8] sm:$0xff]
        %v575 = vld [vmem:[%s290 + $0x10] sm:$0xff]
        %v576 = vld [vmem:[%s290 + $0x18] sm:$0xff]
        %v577 = vld [vmem:[%s290 + $0x20] sm:$0xff]
        %v578 = vld [vmem:[%s290 + $0x28] sm:$0xff]
        %v579 = vld [vmem:[%s290 + $0x30] sm:$0xff]
        %v580 = vld [vmem:[%s290 + $0x38] sm:$0xff]
        %v581 = vld [vmem:[%s290 + $0x40] sm:$0xff]
        %v582 = vld [vmem:[%s290 + $0x48] sm:$0xff]
        %v583 = vld [vmem:[%s290 + $0x50] sm:$0xff]
        %v584 = vld [vmem:[%s290 + $0x58] sm:$0xff]
        %v585 = vld [vmem:[%s290 + $0x60] sm:$0xff]
        %v586 = vld [vmem:[%s290 + $0x68] sm:$0xff]
        %v587 = vld [vmem:[%s290 + $0x70] sm:$0xff]
        %v588 = vld [vmem:[%s290 + $0x78] sm:$0xff]
        %v589 = vld [vmem:[%s290 + $0x80] sm:$0xff]
        %v590 = vld [vmem:[%s290 + $0x88] sm:$0xff]
        %v591 = vld [vmem:[%s290 + $0x90] sm:$0xff]
        %v592 = vld [vmem:[%s290 + $0x98] sm:$0xff]
        %v593 = vld [vmem:[%s290 + $0xa0] sm:$0xff]
        %v594 = vld [vmem:[%s290 + $0xa8] sm:$0xff]
        %v595 = vld [vmem:[%s290 + $0xb0] sm:$0xff]
        %v596 = vld [vmem:[%s290 + $0xb8] sm:$0xff]
        %v597 = vld [vmem:[%s290 + $0xc0] sm:$0xff]
        %v598 = vld [vmem:[%s290 + $0xc8] sm:$0xff]
        %v599 = vld [vmem:[%s290 + $0xd0] sm:$0xff]
        %v600 = vld [vmem:[%s290 + $0xd8] sm:$0xff]
        %v601 = vld [vmem:[%s290 + $0xe0] sm:$0xff]
        %v602 = vld [vmem:[%s290 + $0xe8] sm:$0xff]
        %v603 = vld [vmem:[%s290 + $0xf0] sm:$0xff]
        %v604 = vld [vmem:[%s290 + $0xf8] sm:$0xff]
        %v605 = vpack.c.bf16 %v573, %v573
        %v606 = vpack.c.bf16 %v574, %v574
        %v607 = vpack.c.bf16 %v575, %v575
        %v608 = vpack.c.bf16 %v576, %v576
        %v609 = vpack.c.bf16 %v577, %v577
        %v610 = vpack.c.bf16 %v578, %v578
        %v611 = vpack.c.bf16 %v579, %v579
        %v612 = vpack.c.bf16 %v580, %v580
        %v613 = vpack.c.bf16 %v581, %v581
        %v614 = vpack.c.bf16 %v582, %v582
        %v615 = vpack.c.bf16 %v583, %v583
        %v616 = vpack.c.bf16 %v584, %v584
        %v617 = vpack.c.bf16 %v585, %v585
        %v618 = vpack.c.bf16 %v586, %v586
        %v619 = vpack.c.bf16 %v587, %v587
        %v620 = vpack.c.bf16 %v588, %v588
        %v621 = vpack.c.bf16 %v589, %v589
        %v622 = vpack.c.bf16 %v590, %v590
        %v623 = vpack.c.bf16 %v591, %v591
        %v624 = vpack.c.bf16 %v592, %v592
        %v625 = vpack.c.bf16 %v593, %v593
        %v626 = vpack.c.bf16 %v594, %v594
        %v627 = vpack.c.bf16 %v595, %v595
        %v628 = vpack.c.bf16 %v596, %v596
        %v629 = vpack.c.bf16 %v597, %v597
        %v630 = vpack.c.bf16 %v598, %v598
        %v631 = vpack.c.bf16 %v599, %v599
        %v632 = vpack.c.bf16 %v600, %v600
        %v633 = vpack.c.bf16 %v601, %v601
        %v634 = vpack.c.bf16 %v602, %v602
        %v635 = vpack.c.bf16 %v603, %v603
        %v636 = vpack.c.bf16 %v604, %v604
        %s637 = scalar_lea.vmem [#allocation2], 24
        %638 = vst [vmem:[%s637 + $0x4] sm:$0xf] %v605
        %639 = vst [vmem:[%s637 + $0x10] sm:$0xf] %v606
        %640 = vst [vmem:[%s637 + $0x1c] sm:$0xf] %v607
        %641 = vst [vmem:[%s637 + $0x28] sm:$0xf] %v608
        %642 = vst [vmem:[%s637 + $0x34] sm:$0xf] %v609
        %643 = vst [vmem:[%s637 + $0x40] sm:$0xf] %v610
        %644 = vst [vmem:[%s637 + $0x4c] sm:$0xf] %v611
        %645 = vst [vmem:[%s637 + $0x58] sm:$0xf] %v612
        %646 = vst [vmem:[%s637 + $0x64] sm:$0xf] %v613
        %647 = vst [vmem:[%s637 + $0x70] sm:$0xf] %v614
        %648 = vst [vmem:[%s637 + $0x7c] sm:$0xf] %v615
        %649 = vst [vmem:[%s637 + $0x88] sm:$0xf] %v616
        %650 = vst [vmem:[%s637 + $0x94] sm:$0xf] %v617
        %651 = vst [vmem:[%s637 + $0xa0] sm:$0xf] %v618
        %652 = vst [vmem:[%s637 + $0xac] sm:$0xf] %v619
        %653 = vst [vmem:[%s637 + $0xb8] sm:$0xf] %v620
        %654 = vst [vmem:[%s637 + $0xc4] sm:$0xf] %v621
        %655 = vst [vmem:[%s637 + $0xd0] sm:$0xf] %v622
        %656 = vst [vmem:[%s637 + $0xdc] sm:$0xf] %v623
        %657 = vst [vmem:[%s637 + $0xe8] sm:$0xf] %v624
        %658 = vst [vmem:[%s637 + $0xf4] sm:$0xf] %v625
        %659 = vst [vmem:[%s637 + $0x100] sm:$0xf] %v626
        %660 = vst [vmem:[%s637 + $0x10c] sm:$0xf] %v627
        %661 = vst [vmem:[%s637 + $0x118] sm:$0xf] %v628
        %662 = vst [vmem:[%s637 + $0x124] sm:$0xf] %v629
        %663 = vst [vmem:[%s637 + $0x130] sm:$0xf] %v630
        %664 = vst [vmem:[%s637 + $0x13c] sm:$0xf] %v631
        %665 = vst [vmem:[%s637 + $0x148] sm:$0xf] %v632
        %666 = vst [vmem:[%s637 + $0x154] sm:$0xf] %v633
        %667 = vst [vmem:[%s637 + $0x160] sm:$0xf] %v634
        %668 = vst [vmem:[%s637 + $0x16c] sm:$0xf] %v635
        %669 = vst [vmem:[%s637 + $0x178] sm:$0xf] %v636
        %vm670 = vsmask.f32 4368
        %vm671 = vmor %vm343, %vm670
        %v673 = vshrl.u32 %v605, 16
        %v675 = vrot.slane %v673, 7
        %v676 = vshll.u32 %v605, 16
        %v678 = vor.u32 %v675, %v676
        %v679 = vrot.slane %v675, 4
        %v681 = vshrl.u32 %v606, 16
        %v683 = vrot.slane %v681, 7
        %v684 = vshll.u32 %v606, 16
        %v686 = vor.u32 %v683, %v684
        %v687 = vsel %vm671, %v679, %v686
        %v689 = vshrl.u32 %v607, 16
        %v691 = vrot.slane %v689, 7
        %v692 = vshll.u32 %v607, 16
        %v694 = vor.u32 %v691, %v692
        %v695 = vrot.slane %v691, 4
        %v697 = vshrl.u32 %v608, 16
        %v699 = vrot.slane %v697, 7
        %v700 = vshll.u32 %v608, 16
        %v702 = vor.u32 %v699, %v700
        %v703 = vsel %vm671, %v695, %v702
        %v705 = vshrl.u32 %v609, 16
        %v707 = vrot.slane %v705, 7
        %v708 = vshll.u32 %v609, 16
        %v710 = vor.u32 %v707, %v708
        %v711 = vrot.slane %v707, 4
        %v713 = vshrl.u32 %v610, 16
        %v715 = vrot.slane %v713, 7
        %v716 = vshll.u32 %v610, 16
        %v718 = vor.u32 %v715, %v716
        %v719 = vsel %vm671, %v711, %v718
        %v721 = vshrl.u32 %v611, 16
        %v723 = vrot.slane %v721, 7
        %v724 = vshll.u32 %v611, 16
        %v726 = vor.u32 %v723, %v724
        %v727 = vrot.slane %v723, 4
        %v729 = vshrl.u32 %v612, 16
        %v731 = vrot.slane %v729, 7
        %v732 = vshll.u32 %v612, 16
        %v734 = vor.u32 %v731, %v732
        %v735 = vsel %vm671, %v727, %v734
        %v737 = vshrl.u32 %v613, 16
        %v739 = vrot.slane %v737, 7
        %v740 = vshll.u32 %v613, 16
        %v742 = vor.u32 %v739, %v740
        %v743 = vrot.slane %v739, 4
        %v745 = vshrl.u32 %v614, 16
        %v747 = vrot.slane %v745, 7
        %v748 = vshll.u32 %v614, 16
        %v750 = vor.u32 %v747, %v748
        %v751 = vsel %vm671, %v743, %v750
        %v753 = vshrl.u32 %v615, 16
        %v755 = vrot.slane %v753, 7
        %v756 = vshll.u32 %v615, 16
        %v758 = vor.u32 %v755, %v756
        %v759 = vrot.slane %v755, 4
        %v761 = vshrl.u32 %v616, 16
        %v763 = vrot.slane %v761, 7
        %v764 = vshll.u32 %v616, 16
        %v766 = vor.u32 %v763, %v764
        %v767 = vsel %vm671, %v759, %v766
        %v769 = vshrl.u32 %v617, 16
        %v771 = vrot.slane %v769, 7
        %v772 = vshll.u32 %v617, 16
        %v774 = vor.u32 %v771, %v772
        %v775 = vrot.slane %v771, 4
        %v777 = vshrl.u32 %v618, 16
        %v779 = vrot.slane %v777, 7
        %v780 = vshll.u32 %v618, 16
        %v782 = vor.u32 %v779, %v780
        %v783 = vsel %vm671, %v775, %v782
        %v785 = vshrl.u32 %v619, 16
        %v787 = vrot.slane %v785, 7
        %v788 = vshll.u32 %v619, 16
        %v790 = vor.u32 %v787, %v788
        %v791 = vrot.slane %v787, 4
        %v793 = vshrl.u32 %v620, 16
        %v795 = vrot.slane %v793, 7
        %v796 = vshll.u32 %v620, 16
        %v798 = vor.u32 %v795, %v796
        %v799 = vsel %vm671, %v791, %v798
        %v801 = vshrl.u32 %v621, 16
        %v803 = vrot.slane %v801, 7
        %v804 = vshll.u32 %v621, 16
        %v806 = vor.u32 %v803, %v804
        %v807 = vrot.slane %v803, 4
        %v809 = vshrl.u32 %v622, 16
        %v811 = vrot.slane %v809, 7
        %v812 = vshll.u32 %v622, 16
        %v814 = vor.u32 %v811, %v812
        %v815 = vsel %vm671, %v807, %v814
        %v817 = vshrl.u32 %v623, 16
        %v819 = vrot.slane %v817, 7
        %v820 = vshll.u32 %v623, 16
        %v822 = vor.u32 %v819, %v820
        %v823 = vrot.slane %v819, 4
        %v825 = vshrl.u32 %v624, 16
        %v827 = vrot.slane %v825, 7
        %v828 = vshll.u32 %v624, 16
        %v830 = vor.u32 %v827, %v828
        %v831 = vsel %vm671, %v823, %v830
        %v833 = vshrl.u32 %v625, 16
        %v835 = vrot.slane %v833, 7
        %v836 = vshll.u32 %v625, 16
        %v838 = vor.u32 %v835, %v836
        %v839 = vrot.slane %v835, 4
        %v841 = vshrl.u32 %v626, 16
        %v843 = vrot.slane %v841, 7
        %v844 = vshll.u32 %v626, 16
        %v846 = vor.u32 %v843, %v844
        %v847 = vsel %vm671, %v839, %v846
        %v849 = vshrl.u32 %v627, 16
        %v851 = vrot.slane %v849, 7
        %v852 = vshll.u32 %v627, 16
        %v854 = vor.u32 %v851, %v852
        %v855 = vrot.slane %v851, 4
        %v857 = vshrl.u32 %v628, 16
        %v859 = vrot.slane %v857, 7
        %v860 = vshll.u32 %v628, 16
        %v862 = vor.u32 %v859, %v860
        %v863 = vsel %vm671, %v855, %v862
        %v865 = vshrl.u32 %v629, 16
        %v867 = vrot.slane %v865, 7
        %v868 = vshll.u32 %v629, 16
        %v870 = vor.u32 %v867, %v868
        %v871 = vrot.slane %v867, 4
        %v873 = vshrl.u32 %v630, 16
        %v875 = vrot.slane %v873, 7
        %v876 = vshll.u32 %v630, 16
        %v878 = vor.u32 %v875, %v876
        %v879 = vsel %vm671, %v871, %v878
        %v881 = vshrl.u32 %v631, 16
        %v883 = vrot.slane %v881, 7
        %v884 = vshll.u32 %v631, 16
        %v886 = vor.u32 %v883, %v884
        %v887 = vrot.slane %v883, 4
        %v889 = vshrl.u32 %v632, 16
        %v891 = vrot.slane %v889, 7
        %v892 = vshll.u32 %v632, 16
        %v894 = vor.u32 %v891, %v892
        %v895 = vsel %vm671, %v887, %v894
        %v897 = vshrl.u32 %v633, 16
        %v899 = vrot.slane %v897, 7
        %v900 = vshll.u32 %v633, 16
        %v902 = vor.u32 %v899, %v900
        %v903 = vrot.slane %v899, 4
        %v905 = vshrl.u32 %v634, 16
        %v907 = vrot.slane %v905, 7
        %v908 = vshll.u32 %v634, 16
        %v910 = vor.u32 %v907, %v908
        %v911 = vsel %vm671, %v903, %v910
        %v913 = vshrl.u32 %v635, 16
        %v915 = vrot.slane %v913, 7
        %v916 = vshll.u32 %v635, 16
        %v918 = vor.u32 %v915, %v916
        %v919 = vrot.slane %v915, 4
        %v921 = vshrl.u32 %v636, 16
        %v923 = vrot.slane %v921, 7
        %v924 = vshll.u32 %v636, 16
        %v926 = vor.u32 %v923, %v924
        %v927 = vsel %vm671, %v919, %v926
        %vm960 = vcmask 1043456
        %vm961 = vsmask.f32 7938
        %vm962 = vmand %vm960, %vm961
        %v963 = vld [vmem:[%s637] sm:$0xf]
        %v964 = vsel %vm962, %v678, %v963
        %965 = vst [vmem:[%s637] sm:$0xf] %v964
        %966 = vst [vmem:[%s637 + $0xc] sm:$0xf] %v687
        %v967 = vld [vmem:[%s637 + $0x18] sm:$0xf]
        %v968 = vsel %vm962, %v694, %v967
        %969 = vst [vmem:[%s637 + $0x18] sm:$0xf] %v968
        %970 = vst [vmem:[%s637 + $0x24] sm:$0xf] %v703
        %v971 = vld [vmem:[%s637 + $0x30] sm:$0xf]
        %v972 = vsel %vm962, %v710, %v971
        %973 = vst [vmem:[%s637 + $0x30] sm:$0xf] %v972
        %974 = vst [vmem:[%s637 + $0x3c] sm:$0xf] %v719
        %v975 = vld [vmem:[%s637 + $0x48] sm:$0xf]
        %v976 = vsel %vm962, %v726, %v975
        %977 = vst [vmem:[%s637 + $0x48] sm:$0xf] %v976
        %978 = vst [vmem:[%s637 + $0x54] sm:$0xf] %v735
        %v979 = vld [vmem:[%s637 + $0x60] sm:$0xf]
        %v980 = vsel %vm962, %v742, %v979
        %981 = vst [vmem:[%s637 + $0x60] sm:$0xf] %v980
        %982 = vst [vmem:[%s637 + $0x6c] sm:$0xf] %v751
        %v983 = vld [vmem:[%s637 + $0x78] sm:$0xf]
        %v984 = vsel %vm962, %v758, %v983
        %985 = vst [vmem:[%s637 + $0x78] sm:$0xf] %v984
        %986 = vst [vmem:[%s637 + $0x84] sm:$0xf] %v767
        %v987 = vld [vmem:[%s637 + $0x90] sm:$0xf]
        %v988 = vsel %vm962, %v774, %v987
        %989 = vst [vmem:[%s637 + $0x90] sm:$0xf] %v988
        %990 = vst [vmem:[%s637 + $0x9c] sm:$0xf] %v783
        %v991 = vld [vmem:[%s637 + $0xa8] sm:$0xf]
        %v992 = vsel %vm962, %v790, %v991
        %993 = vst [vmem:[%s637 + $0xa8] sm:$0xf] %v992
        %994 = vst [vmem:[%s637 + $0xb4] sm:$0xf] %v799
        %v995 = vld [vmem:[%s637 + $0xc0] sm:$0xf]
        %v996 = vsel %vm962, %v806, %v995
        %997 = vst [vmem:[%s637 + $0xc0] sm:$0xf] %v996
        %998 = vst [vmem:[%s637 + $0xcc] sm:$0xf] %v815
        %v999 = vld [vmem:[%s637 + $0xd8] sm:$0xf]
        %v1000 = vsel %vm962, %v822, %v999
        %1001 = vst [vmem:[%s637 + $0xd8] sm:$0xf] %v1000
        %1002 = vst [vmem:[%s637 + $0xe4] sm:$0xf] %v831
        %v1003 = vld [vmem:[%s637 + $0xf0] sm:$0xf]
        %v1004 = vsel %vm962, %v838, %v1003
        %1005 = vst [vmem:[%s637 + $0xf0] sm:$0xf] %v1004
        %1006 = vst [vmem:[%s637 + $0xfc] sm:$0xf] %v847
        %v1007 = vld [vmem:[%s637 + $0x108] sm:$0xf]
        %v1008 = vsel %vm962, %v854, %v1007
        %1009 = vst [vmem:[%s637 + $0x108] sm:$0xf] %v1008
        %1010 = vst [vmem:[%s637 + $0x114] sm:$0xf] %v863
        %v1011 = vld [vmem:[%s637 + $0x120] sm:$0xf]
        %v1012 = vsel %vm962, %v870, %v1011
        %1013 = vst [vmem:[%s637 + $0x120] sm:$0xf] %v1012
        %1014 = vst [vmem:[%s637 + $0x12c] sm:$0xf] %v879
        %v1015 = vld [vmem:[%s637 + $0x138] sm:$0xf]
        %v1016 = vsel %vm962, %v886, %v1015
        %1017 = vst [vmem:[%s637 + $0x138] sm:$0xf] %v1016
        %1018 = vst [vmem:[%s637 + $0x144] sm:$0xf] %v895
        %v1019 = vld [vmem:[%s637 + $0x150] sm:$0xf]
        %v1020 = vsel %vm962, %v902, %v1019
        %1021 = vst [vmem:[%s637 + $0x150] sm:$0xf] %v1020
        %1022 = vst [vmem:[%s637 + $0x15c] sm:$0xf] %v911
        %v1023 = vld [vmem:[%s637 + $0x168] sm:$0xf]
        %v1024 = vsel %vm962, %v918, %v1023
        %1025 = vst [vmem:[%s637 + $0x168] sm:$0xf] %v1024
        %1026 = vst [vmem:[%s637 + $0x174] sm:$0xf] %v927
        %vm1027 = vsmask.f32 3328
        %vm1028 = vsmask.f32 7440
        %vm1029 = vmor %vm1027, %vm1028
        %v1030 = vrot.slane %v673, 4
        %v1031 = vrot.slane %v676, 5
        %v1032 = vor.u32 %v1030, %v1031
        %v1033 = vrot.slane %v1032, 4
        %v1034 = vrot.slane %v684, 5
        %v1035 = vsel %vm1029, %v1033, %v1034
        %v1036 = vrot.slane %v681, 4
        %v1037 = vor.u32 %v1036, %v1034
        %v1038 = vrot.slane %v1037, 4
        %v1039 = vrot.slane %v689, 4
        %v1040 = vrot.slane %v692, 5
        %v1041 = vor.u32 %v1039, %v1040
        %v1042 = vrot.slane %v1041, 4
        %v1043 = vrot.slane %v700, 5
        %v1044 = vsel %vm1029, %v1042, %v1043
        %v1045 = vrot.slane %v697, 4
        %v1046 = vor.u32 %v1045, %v1043
        %v1047 = vrot.slane %v1046, 4
        %v1048 = vrot.slane %v705, 4
        %v1049 = vrot.slane %v708, 5
        %v1050 = vor.u32 %v1048, %v1049
        %v1051 = vrot.slane %v1050, 4
        %v1052 = vrot.slane %v716, 5
        %v1053 = vsel %vm1029, %v1051, %v1052
        %v1054 = vrot.slane %v713, 4
        %v1055 = vor.u32 %v1054, %v1052
        %v1056 = vrot.slane %v1055, 4
        %v1057 = vrot.slane %v721, 4
        %v1058 = vrot.slane %v724, 5
        %v1059 = vor.u32 %v1057, %v1058
        %v1060 = vrot.slane %v1059, 4
        %v1061 = vrot.slane %v732, 5
        %v1062 = vsel %vm1029, %v1060, %v1061
        %v1063 = vrot.slane %v729, 4
        %v1064 = vor.u32 %v1063, %v1061
        %v1065 = vrot.slane %v1064, 4
        %v1066 = vrot.slane %v737, 4
        %v1067 = vrot.slane %v740, 5
        %v1068 = vor.u32 %v1066, %v1067
        %v1069 = vrot.slane %v1068, 4
        %v1070 = vrot.slane %v748, 5
        %v1071 = vsel %vm1029, %v1069, %v1070
        %v1072 = vrot.slane %v745, 4
        %v1073 = vor.u32 %v1072, %v1070
        %v1074 = vrot.slane %v1073, 4
        %v1075 = vrot.slane %v753, 4
        %v1076 = vrot.slane %v756, 5
        %v1077 = vor.u32 %v1075, %v1076
        %v1078 = vrot.slane %v1077, 4
        %v1079 = vrot.slane %v764, 5
        %v1080 = vsel %vm1029, %v1078, %v1079
        %v1081 = vrot.slane %v761, 4
        %v1082 = vor.u32 %v1081, %v1079
        %v1083 = vrot.slane %v1082, 4
        %v1084 = vrot.slane %v769, 4
        %v1085 = vrot.slane %v772, 5
        %v1086 = vor.u32 %v1084, %v1085
        %v1087 = vrot.slane %v1086, 4
        %v1088 = vrot.slane %v780, 5
        %v1089 = vsel %vm1029, %v1087, %v1088
        %v1090 = vrot.slane %v777, 4
        %v1091 = vor.u32 %v1090, %v1088
        %v1092 = vrot.slane %v1091, 4
        %v1093 = vrot.slane %v785, 4
        %v1094 = vrot.slane %v788, 5
        %v1095 = vor.u32 %v1093, %v1094
        %v1096 = vrot.slane %v1095, 4
        %v1097 = vrot.slane %v796, 5
        %v1098 = vsel %vm1029, %v1096, %v1097
        %v1099 = vrot.slane %v793, 4
        %v1100 = vor.u32 %v1099, %v1097
        %v1101 = vrot.slane %v1100, 4
        %v1102 = vrot.slane %v801, 4
        %v1103 = vrot.slane %v804, 5
        %v1104 = vor.u32 %v1102, %v1103
        %v1105 = vrot.slane %v1104, 4
        %v1106 = vrot.slane %v812, 5
        %v1107 = vsel %vm1029, %v1105, %v1106
        %v1108 = vrot.slane %v809, 4
        %v1109 = vor.u32 %v1108, %v1106
        %v1110 = vrot.slane %v1109, 4
        %v1111 = vrot.slane %v817, 4
        %v1112 = vrot.slane %v820, 5
        %v1113 = vor.u32 %v1111, %v1112
        %v1114 = vrot.slane %v1113, 4
        %v1115 = vrot.slane %v828, 5
        %v1116 = vsel %vm1029, %v1114, %v1115
        %v1117 = vrot.slane %v825, 4
        %v1118 = vor.u32 %v1117, %v1115
        %v1119 = vrot.slane %v1118, 4
        %v1120 = vrot.slane %v833, 4
        %v1121 = vrot.slane %v836, 5
        %v1122 = vor.u32 %v1120, %v1121
        %v1123 = vrot.slane %v1122, 4
        %v1124 = vrot.slane %v844, 5
        %v1125 = vsel %vm1029, %v1123, %v1124
        %v1126 = vrot.slane %v841, 4
        %v1127 = vor.u32 %v1126, %v1124
        %v1128 = vrot.slane %v1127, 4
        %v1129 = vrot.slane %v849, 4
        %v1130 = vrot.slane %v852, 5
        %v1131 = vor.u32 %v1129, %v1130
        %v1132 = vrot.slane %v1131, 4
        %v1133 = vrot.slane %v860, 5
        %v1134 = vsel %vm1029, %v1132, %v1133
        %v1135 = vrot.slane %v857, 4
        %v1136 = vor.u32 %v1135, %v1133
        %v1137 = vrot.slane %v1136, 4
        %v1138 = vrot.slane %v865, 4
        %v1139 = vrot.slane %v868, 5
        %v1140 = vor.u32 %v1138, %v1139
        %v1141 = vrot.slane %v1140, 4
        %v1142 = vrot.slane %v876, 5
        %v1143 = vsel %vm1029, %v1141, %v1142
        %v1144 = vrot.slane %v873, 4
        %v1145 = vor.u32 %v1144, %v1142
        %v1146 = vrot.slane %v1145, 4
        %v1147 = vrot.slane %v881, 4
        %v1148 = vrot.slane %v884, 5
        %v1149 = vor.u32 %v1147, %v1148
        %v1150 = vrot.slane %v1149, 4
        %v1151 = vrot.slane %v892, 5
        %v1152 = vsel %vm1029, %v1150, %v1151
        %v1153 = vrot.slane %v889, 4
        %v1154 = vor.u32 %v1153, %v1151
        %v1155 = vrot.slane %v1154, 4
        %v1156 = vrot.slane %v897, 4
        %v1157 = vrot.slane %v900, 5
        %v1158 = vor.u32 %v1156, %v1157
        %v1159 = vrot.slane %v1158, 4
        %v1160 = vrot.slane %v908, 5
        %v1161 = vsel %vm1029, %v1159, %v1160
        %v1162 = vrot.slane %v905, 4
        %v1163 = vor.u32 %v1162, %v1160
        %v1164 = vrot.slane %v1163, 4
        %v1165 = vrot.slane %v913, 4
        %v1166 = vrot.slane %v916, 5
        %v1167 = vor.u32 %v1165, %v1166
        %v1168 = vrot.slane %v1167, 4
        %v1169 = vrot.slane %v924, 5
        %v1170 = vsel %vm1029, %v1168, %v1169
        %v1171 = vrot.slane %v921, 4
        %v1172 = vor.u32 %v1171, %v1169
        %v1173 = vrot.slane %v1172, 4
        %1206 = vst [vmem:[%s637 + $0x8] sm:$0xf] %v1035
        %vm1207 = vmand %vm960, %vm1027
        %v1208 = vld [vmem:[%s637 + $0x14] sm:$0xf]
        %v1209 = vsel %vm1207, %v1038, %v1208
        %1210 = vst [vmem:[%s637 + $0x14] sm:$0xf] %v1209
        %1211 = vst [vmem:[%s637 + $0x20] sm:$0xf] %v1044
        %v1212 = vld [vmem:[%s637 + $0x2c] sm:$0xf]
        %v1213 = vsel %vm1207, %v1047, %v1212
        %1214 = vst [vmem:[%s637 + $0x2c] sm:$0xf] %v1213
        %1215 = vst [vmem:[%s637 + $0x38] sm:$0xf] %v1053
        %v1216 = vld [vmem:[%s637 + $0x44] sm:$0xf]
        %v1217 = vsel %vm1207, %v1056, %v1216
        %1218 = vst [vmem:[%s637 + $0x44] sm:$0xf] %v1217
        %1219 = vst [vmem:[%s637 + $0x50] sm:$0xf] %v1062
        %v1220 = vld [vmem:[%s637 + $0x5c] sm:$0xf]
        %v1221 = vsel %vm1207, %v1065, %v1220
        %1222 = vst [vmem:[%s637 + $0x5c] sm:$0xf] %v1221
        %1223 = vst [vmem:[%s637 + $0x68] sm:$0xf] %v1071
        %v1224 = vld [vmem:[%s637 + $0x74] sm:$0xf]
        %v1225 = vsel %vm1207, %v1074, %v1224
        %1226 = vst [vmem:[%s637 + $0x74] sm:$0xf] %v1225
        %1227 = vst [vmem:[%s637 + $0x80] sm:$0xf] %v1080
        %v1228 = vld [vmem:[%s637 + $0x8c] sm:$0xf]
        %v1229 = vsel %vm1207, %v1083, %v1228
        %1230 = vst [vmem:[%s637 + $0x8c] sm:$0xf] %v1229
        %1231 = vst [vmem:[%s637 + $0x98] sm:$0xf] %v1089
        %v1232 = vld [vmem:[%s637 + $0xa4] sm:$0xf]
        %v1233 = vsel %vm1207, %v1092, %v1232
        %1234 = vst [vmem:[%s637 + $0xa4] sm:$0xf] %v1233
        %1235 = vst [vmem:[%s637 + $0xb0] sm:$0xf] %v1098
        %v1236 = vld [vmem:[%s637 + $0xbc] sm:$0xf]
        %v1237 = vsel %vm1207, %v1101, %v1236
        %1238 = vst [vmem:[%s637 + $0xbc] sm:$0xf] %v1237
        %1239 = vst [vmem:[%s637 + $0xc8] sm:$0xf] %v1107
        %v1240 = vld [vmem:[%s637 + $0xd4] sm:$0xf]
        %v1241 = vsel %vm1207, %v1110, %v1240
        %1242 = vst [vmem:[%s637 + $0xd4] sm:$0xf] %v1241
        %1243 = vst [vmem:[%s637 + $0xe0] sm:$0xf] %v1116
        %v1244 = vld [vmem:[%s637 + $0xec] sm:$0xf]
        %v1245 = vsel %vm1207, %v1119, %v1244
        %1246 = vst [vmem:[%s637 + $0xec] sm:$0xf] %v1245
        %1247 = vst [vmem:[%s637 + $0xf8] sm:$0xf] %v1125
        %v1248 = vld [vmem:[%s637 + $0x104] sm:$0xf]
        %v1249 = vsel %vm1207, %v1128, %v1248
        %1250 = vst [vmem:[%s637 + $0x104] sm:$0xf] %v1249
        %1251 = vst [vmem:[%s637 + $0x110] sm:$0xf] %v1134
        %v1252 = vld [vmem:[%s637 + $0x11c] sm:$0xf]
        %v1253 = vsel %vm1207, %v1137, %v1252
        %1254 = vst [vmem:[%s637 + $0x11c] sm:$0xf] %v1253
        %1255 = vst [vmem:[%s637 + $0x128] sm:$0xf] %v1143
        %v1256 = vld [vmem:[%s637 + $0x134] sm:$0xf]
        %v1257 = vsel %vm1207, %v1146, %v1256
        %1258 = vst [vmem:[%s637 + $0x134] sm:$0xf] %v1257
        %1259 = vst [vmem:[%s637 + $0x140] sm:$0xf] %v1152
        %v1260 = vld [vmem:[%s637 + $0x14c] sm:$0xf]
        %v1261 = vsel %vm1207, %v1155, %v1260
        %1262 = vst [vmem:[%s637 + $0x14c] sm:$0xf] %v1261
        %1263 = vst [vmem:[%s637 + $0x158] sm:$0xf] %v1161
        %v1264 = vld [vmem:[%s637 + $0x164] sm:$0xf]
        %v1265 = vsel %vm1207, %v1164, %v1264
        %1266 = vst [vmem:[%s637 + $0x164] sm:$0xf] %v1265
        %1267 = vst [vmem:[%s637 + $0x170] sm:$0xf] %v1170
        %v1268 = vld [vmem:[%s637 + $0x17c] sm:$0xf]
        %v1269 = vsel %vm1207, %v1173, %v1268
        %1270 = vst [vmem:[%s637 + $0x17c] sm:$0xf] %v1269
        %v1271 = vld [vmem:[%s2] sm:$0x1]
        %v1272 = vld [vmem:[%s3] sm:$0x1]
        %v1273 = vld [vmem:[#allocation2] sm:$0xff]
        %v1274 = vld [vmem:[#allocation2 + $0x8] sm:$0xf]
        %v1275 = vld [vmem:[#allocation2 + $0xc] sm:$0xff]
        %v1276 = vld [vmem:[#allocation2 + $0x14] sm:$0xf]
        %v1277 = vld [vmem:[#allocation2 + $0x18] sm:$0xff]
        %v1278 = vld [vmem:[#allocation2 + $0x20] sm:$0xf]
        %v1279 = vld [vmem:[#allocation2 + $0x24] sm:$0xff]
        %v1280 = vld [vmem:[#allocation2 + $0x2c] sm:$0xf]
        %v1281 = vld [vmem:[#allocation2 + $0x30] sm:$0xff]
        %v1282 = vld [vmem:[#allocation2 + $0x38] sm:$0xf]
        %v1283 = vld [vmem:[#allocation2 + $0x3c] sm:$0xff]
        %v1284 = vld [vmem:[#allocation2 + $0x44] sm:$0xf]
        %v1285 = vld [vmem:[#allocation2 + $0x48] sm:$0xff]
        %v1286 = vld [vmem:[#allocation2 + $0x50] sm:$0xf]
        %v1287 = vld [vmem:[#allocation2 + $0x54] sm:$0xff]
        %v1288 = vld [vmem:[#allocation2 + $0x5c] sm:$0xf]
        %v1289 = vld [vmem:[#allocation2 + $0x60] sm:$0xff]
        %v1290 = vld [vmem:[#allocation2 + $0x68] sm:$0xf]
        %v1291 = vld [vmem:[#allocation2 + $0x6c] sm:$0xff]
        %v1292 = vld [vmem:[#allocation2 + $0x74] sm:$0xf]
        %v1293 = vld [vmem:[#allocation2 + $0x78] sm:$0xff]
        %v1294 = vld [vmem:[#allocation2 + $0x80] sm:$0xf]
        %v1295 = vld [vmem:[#allocation2 + $0x84] sm:$0xff]
        %v1296 = vld [vmem:[#allocation2 + $0x8c] sm:$0xf]
        %v1297 = vld [vmem:[#allocation2 + $0x90] sm:$0xff]
        %v1298 = vld [vmem:[#allocation2 + $0x98] sm:$0xf]
        %v1299 = vld [vmem:[#allocation2 + $0x9c] sm:$0xff]
        %v1300 = vld [vmem:[#allocation2 + $0xa4] sm:$0xf]
        %v1301 = vld [vmem:[#allocation2 + $0xa8] sm:$0xff]
        %v1302 = vld [vmem:[#allocation2 + $0xb0] sm:$0xf]
        %v1303 = vld [vmem:[#allocation2 + $0xb4] sm:$0xff]
        %v1304 = vld [vmem:[#allocation2 + $0xbc] sm:$0xf]
        %v1305 = vld [vmem:[#allocation2 + $0xc0] sm:$0xff]
        %v1306 = vld [vmem:[#allocation2 + $0xc8] sm:$0xf]
        %v1307 = vld [vmem:[#allocation2 + $0xcc] sm:$0xff]
        %v1308 = vld [vmem:[#allocation2 + $0xd4] sm:$0xf]
        %v1309 = vld [vmem:[#allocation2 + $0xd8] sm:$0xff]
        %v1310 = vld [vmem:[#allocation2 + $0xe0] sm:$0xf]
        %v1311 = vld [vmem:[#allocation2 + $0xe4] sm:$0xff]
        %v1312 = vld [vmem:[#allocation2 + $0xec] sm:$0xf]
        %v1313 = vld [vmem:[#allocation2 + $0xf0] sm:$0xff]
        %v1314 = vld [vmem:[#allocation2 + $0xf8] sm:$0xf]
        %v1315 = vld [vmem:[#allocation2 + $0xfc] sm:$0xff]
        %v1316 = vld [vmem:[#allocation2 + $0x104] sm:$0xf]
        %v1317 = vld [vmem:[#allocation2 + $0x108] sm:$0xff]
        %v1318 = vld [vmem:[#allocation2 + $0x110] sm:$0xf]
        %v1319 = vld [vmem:[#allocation2 + $0x114] sm:$0xff]
        %v1320 = vld [vmem:[#allocation2 + $0x11c] sm:$0xf]
        %v1321 = vld [vmem:[#allocation2 + $0x120] sm:$0xff]
        %v1322 = vld [vmem:[#allocation2 + $0x128] sm:$0xf]
        %v1323 = vld [vmem:[#allocation2 + $0x12c] sm:$0xff]
        %v1324 = vld [vmem:[#allocation2 + $0x134] sm:$0xf]
        %v1325 = vld [vmem:[#allocation2 + $0x138] sm:$0xff]
        %v1326 = vld [vmem:[#allocation2 + $0x140] sm:$0xf]
        %v1327 = vld [vmem:[#allocation2 + $0x144] sm:$0xff]
        %v1328 = vld [vmem:[#allocation2 + $0x14c] sm:$0xf]
        %v1329 = vld [vmem:[#allocation2 + $0x150] sm:$0xff]
        %v1330 = vld [vmem:[#allocation2 + $0x158] sm:$0xf]
        %v1331 = vld [vmem:[#allocation2 + $0x15c] sm:$0xff]
        %v1332 = vld [vmem:[#allocation2 + $0x164] sm:$0xf]
        %v1333 = vld [vmem:[#allocation2 + $0x168] sm:$0xff]
        %v1334 = vld [vmem:[#allocation2 + $0x170] sm:$0xf]
        %v1335 = vld [vmem:[#allocation2 + $0x174] sm:$0xff]
        %v1336 = vld [vmem:[#allocation2 + $0x17c] sm:$0xf]
        %v1337 = vld [vmem:[#allocation7] sm:$0xf]
        %v1338 = vld [vmem:[#allocation7 + $0x4] sm:$0xf]
        %v1339 = vld [vmem:[#allocation7 + $0x8] sm:$0xf]
        %v1340 = vld [vmem:[#allocation7 + $0xc] sm:$0xf]
        %v1341 = vld [vmem:[#allocation7 + $0x10] sm:$0xf]
        %v1342 = vld [vmem:[#allocation7 + $0x14] sm:$0xf]
        %v1343 = vld [vmem:[#allocation7 + $0x18] sm:$0xf]
        %v1344 = vld [vmem:[#allocation7 + $0x1c] sm:$0xf]
        %v1345 = vld [vmem:[#allocation7 + $0x20] sm:$0xf]
        %v1346 = vld [vmem:[#allocation7 + $0x24] sm:$0xf]
        %v1347 = vld [vmem:[#allocation7 + $0x28] sm:$0xf]
        %v1348 = vld [vmem:[#allocation7 + $0x2c] sm:$0xf]
        %v1349 = vld [vmem:[#allocation7 + $0x30] sm:$0xf]
        %v1350 = vld [vmem:[#allocation7 + $0x34] sm:$0xf]
        %v1351 = vld [vmem:[#allocation7 + $0x38] sm:$0xf]
        %v1352 = vld [vmem:[#allocation7 + $0x3c] sm:$0xf]
        %v1353 = vld [vmem:[#allocation7 + $0x40] sm:$0xf]
        %v1354 = vld [vmem:[#allocation7 + $0x44] sm:$0xf]
        %v1355 = vld [vmem:[#allocation7 + $0x48] sm:$0xf]
        %v1356 = vld [vmem:[#allocation7 + $0x4c] sm:$0xf]
        %v1357 = vld [vmem:[#allocation7 + $0x50] sm:$0xf]
        %v1358 = vld [vmem:[#allocation7 + $0x54] sm:$0xf]
        %v1359 = vld [vmem:[#allocation7 + $0x58] sm:$0xf]
        %v1360 = vld [vmem:[#allocation7 + $0x5c] sm:$0xf]
        %v1361 = vld [vmem:[#allocation7 + $0x60] sm:$0xf]
        %v1362 = vld [vmem:[#allocation7 + $0x64] sm:$0xf]
        %v1363 = vld [vmem:[#allocation7 + $0x68] sm:$0xf]
        %v1364 = vld [vmem:[#allocation7 + $0x6c] sm:$0xf]
        %v1365 = vld [vmem:[#allocation7 + $0x70] sm:$0xf]
        %v1366 = vld [vmem:[#allocation7 + $0x74] sm:$0xf]
        %v1367 = vld [vmem:[#allocation7 + $0x78] sm:$0xf]
        %v1368 = vld [vmem:[#allocation7 + $0x7c] sm:$0xf]
        %v1369 = vld [vmem:[#allocation7 + $0x80] sm:$0xf]
        %v1370 = vld [vmem:[#allocation7 + $0x84] sm:$0xf]
        %v1371 = vld [vmem:[#allocation7 + $0x88] sm:$0xf]
        %v1372 = vld [vmem:[#allocation7 + $0x8c] sm:$0xf]
        %v1373 = vld [vmem:[#allocation7 + $0x90] sm:$0xf]
        %v1374 = vld [vmem:[#allocation7 + $0x94] sm:$0xf]
        %v1375 = vld [vmem:[#allocation7 + $0x98] sm:$0xf]
        %v1376 = vld [vmem:[#allocation7 + $0x9c] sm:$0xf]
        %v1377 = vld [vmem:[#allocation7 + $0xa0] sm:$0xf]
        %v1378 = vld [vmem:[#allocation7 + $0xa4] sm:$0xf]
        %v1379 = vld [vmem:[#allocation7 + $0xa8] sm:$0xf]
        %v1380 = vld [vmem:[#allocation7 + $0xac] sm:$0xf]
        %v1381 = vld [vmem:[#allocation7 + $0xb0] sm:$0xf]
        %v1382 = vld [vmem:[#allocation7 + $0xb4] sm:$0xf]
        %v1383 = vld [vmem:[#allocation7 + $0xb8] sm:$0xf]
        %v1384 = vld [vmem:[#allocation7 + $0xbc] sm:$0xf]
        %v1385 = vld [vmem:[%s637] sm:$0xff]
        %v1386 = vld [vmem:[%s637 + $0x8] sm:$0xf]
        %v1387 = vld [vmem:[%s637 + $0xc] sm:$0xff]
        %v1388 = vld [vmem:[%s637 + $0x14] sm:$0xf]
        %v1389 = vld [vmem:[%s637 + $0x18] sm:$0xff]
        %v1390 = vld [vmem:[%s637 + $0x20] sm:$0xf]
        %v1391 = vld [vmem:[%s637 + $0x24] sm:$0xff]
        %v1392 = vld [vmem:[%s637 + $0x2c] sm:$0xf]
        %v1393 = vld [vmem:[%s637 + $0x30] sm:$0xff]
        %v1394 = vld [vmem:[%s637 + $0x38] sm:$0xf]
        %v1395 = vld [vmem:[%s637 + $0x3c] sm:$0xff]
        %v1396 = vld [vmem:[%s637 + $0x44] sm:$0xf]
        %v1397 = vld [vmem:[%s637 + $0x48] sm:$0xff]
        %v1398 = vld [vmem:[%s637 + $0x50] sm:$0xf]
        %v1399 = vld [vmem:[%s637 + $0x54] sm:$0xff]
        %v1400 = vld [vmem:[%s637 + $0x5c] sm:$0xf]
        %v1401 = vld [vmem:[%s637 + $0x60] sm:$0xff]
        %v1402 = vld [vmem:[%s637 + $0x68] sm:$0xf]
        %v1403 = vld [vmem:[%s637 + $0x6c] sm:$0xff]
        %v1404 = vld [vmem:[%s637 + $0x74] sm:$0xf]
        %v1405 = vld [vmem:[%s637 + $0x78] sm:$0xff]
        %v1406 = vld [vmem:[%s637 + $0x80] sm:$0xf]
        %v1407 = vld [vmem:[%s637 + $0x84] sm:$0xff]
        %v1408 = vld [vmem:[%s637 + $0x8c] sm:$0xf]
        %v1409 = vld [vmem:[%s637 + $0x90] sm:$0xff]
        %v1410 = vld [vmem:[%s637 + $0x98] sm:$0xf]
        %v1411 = vld [vmem:[%s637 + $0x9c] sm:$0xff]
        %v1412 = vld [vmem:[%s637 + $0xa4] sm:$0xf]
        %v1413 = vld [vmem:[%s637 + $0xa8] sm:$0xff]
        %v1414 = vld [vmem:[%s637 + $0xb0] sm:$0xf]
        %v1415 = vld [vmem:[%s637 + $0xb4] sm:$0xff]
        %v1416 = vld [vmem:[%s637 + $0xbc] sm:$0xf]
        %v1417 = vld [vmem:[%s637 + $0xc0] sm:$0xff]
        %v1418 = vld [vmem:[%s637 + $0xc8] sm:$0xf]
        %v1419 = vld [vmem:[%s637 + $0xcc] sm:$0xff]
        %v1420 = vld [vmem:[%s637 + $0xd4] sm:$0xf]
        %v1421 = vld [vmem:[%s637 + $0xd8] sm:$0xff]
        %v1422 = vld [vmem:[%s637 + $0xe0] sm:$0xf]
        %v1423 = vld [vmem:[%s637 + $0xe4] sm:$0xff]
        %v1424 = vld [vmem:[%s637 + $0xec] sm:$0xf]
        %v1425 = vld [vmem:[%s637 + $0xf0] sm:$0xff]
        %v1426 = vld [vmem:[%s637 + $0xf8] sm:$0xf]
        %v1427 = vld [vmem:[%s637 + $0xfc] sm:$0xff]
        %v1428 = vld [vmem:[%s637 + $0x104] sm:$0xf]
        %v1429 = vld [vmem:[%s637 + $0x108] sm:$0xff]
        %v1430 = vld [vmem:[%s637 + $0x110] sm:$0xf]
        %v1431 = vld [vmem:[%s637 + $0x114] sm:$0xff]
        %v1432 = vld [vmem:[%s637 + $0x11c] sm:$0xf]
        %v1433 = vld [vmem:[%s637 + $0x120] sm:$0xff]
        %v1434 = vld [vmem:[%s637 + $0x128] sm:$0xf]
        %v1435 = vld [vmem:[%s637 + $0x12c] sm:$0xff]
        %v1436 = vld [vmem:[%s637 + $0x134] sm:$0xf]
        %v1437 = vld [vmem:[%s637 + $0x138] sm:$0xff]
        %v1438 = vld [vmem:[%s637 + $0x140] sm:$0xf]
        %v1439 = vld [vmem:[%s637 + $0x144] sm:$0xff]
        %v1440 = vld [vmem:[%s637 + $0x14c] sm:$0xf]
        %v1441 = vld [vmem:[%s637 + $0x150] sm:$0xff]
        %v1442 = vld [vmem:[%s637 + $0x158] sm:$0xf]
        %v1443 = vld [vmem:[%s637 + $0x15c] sm:$0xff]
        %v1444 = vld [vmem:[%s637 + $0x164] sm:$0xf]
        %v1445 = vld [vmem:[%s637 + $0x168] sm:$0xff]
        %v1446 = vld [vmem:[%s637 + $0x170] sm:$0xf]
        %v1447 = vld [vmem:[%s637 + $0x174] sm:$0xff]
        %v1448 = vld [vmem:[%s637 + $0x17c] sm:$0xf]
        %s1449 = scalar_lea.vmem [#allocation7], 192
        %v1450 = vld [vmem:[%s1449] sm:$0xf]
        %v1451 = vld [vmem:[%s1449 + $0x4] sm:$0xf]
        %v1452 = vld [vmem:[%s1449 + $0x8] sm:$0xf]
        %v1453 = vld [vmem:[%s1449 + $0xc] sm:$0xf]
        %v1454 = vld [vmem:[%s1449 + $0x10] sm:$0xf]
        %v1455 = vld [vmem:[%s1449 + $0x14] sm:$0xf]
        %v1456 = vld [vmem:[%s1449 + $0x18] sm:$0xf]
        %v1457 = vld [vmem:[%s1449 + $0x1c] sm:$0xf]
        %v1458 = vld [vmem:[%s1449 + $0x20] sm:$0xf]
        %v1459 = vld [vmem:[%s1449 + $0x24] sm:$0xf]
        %v1460 = vld [vmem:[%s1449 + $0x28] sm:$0xf]
        %v1461 = vld [vmem:[%s1449 + $0x2c] sm:$0xf]
        %v1462 = vld [vmem:[%s1449 + $0x30] sm:$0xf]
        %v1463 = vld [vmem:[%s1449 + $0x34] sm:$0xf]
        %v1464 = vld [vmem:[%s1449 + $0x38] sm:$0xf]
        %v1465 = vld [vmem:[%s1449 + $0x3c] sm:$0xf]
        %v1466 = vld [vmem:[%s1449 + $0x40] sm:$0xf]
        %v1467 = vld [vmem:[%s1449 + $0x44] sm:$0xf]
        %v1468 = vld [vmem:[%s1449 + $0x48] sm:$0xf]
        %v1469 = vld [vmem:[%s1449 + $0x4c] sm:$0xf]
        %v1470 = vld [vmem:[%s1449 + $0x50] sm:$0xf]
        %v1471 = vld [vmem:[%s1449 + $0x54] sm:$0xf]
        %v1472 = vld [vmem:[%s1449 + $0x58] sm:$0xf]
        %v1473 = vld [vmem:[%s1449 + $0x5c] sm:$0xf]
        %v1474 = vld [vmem:[%s1449 + $0x60] sm:$0xf]
        %v1475 = vld [vmem:[%s1449 + $0x64] sm:$0xf]
        %v1476 = vld [vmem:[%s1449 + $0x68] sm:$0xf]
        %v1477 = vld [vmem:[%s1449 + $0x6c] sm:$0xf]
        %v1478 = vld [vmem:[%s1449 + $0x70] sm:$0xf]
        %v1479 = vld [vmem:[%s1449 + $0x74] sm:$0xf]
        %v1480 = vld [vmem:[%s1449 + $0x78] sm:$0xf]
        %v1481 = vld [vmem:[%s1449 + $0x7c] sm:$0xf]
        %v1482 = vld [vmem:[%s1449 + $0x80] sm:$0xf]
        %v1483 = vld [vmem:[%s1449 + $0x84] sm:$0xf]
        %v1484 = vld [vmem:[%s1449 + $0x88] sm:$0xf]
        %v1485 = vld [vmem:[%s1449 + $0x8c] sm:$0xf]
        %v1486 = vld [vmem:[%s1449 + $0x90] sm:$0xf]
        %v1487 = vld [vmem:[%s1449 + $0x94] sm:$0xf]
        %v1488 = vld [vmem:[%s1449 + $0x98] sm:$0xf]
        %v1489 = vld [vmem:[%s1449 + $0x9c] sm:$0xf]
        %v1490 = vld [vmem:[%s1449 + $0xa0] sm:$0xf]
        %v1491 = vld [vmem:[%s1449 + $0xa4] sm:$0xf]
        %v1492 = vld [vmem:[%s1449 + $0xa8] sm:$0xf]
        %v1493 = vld [vmem:[%s1449 + $0xac] sm:$0xf]
        %v1494 = vld [vmem:[%s1449 + $0xb0] sm:$0xf]
        %v1495 = vld [vmem:[%s1449 + $0xb4] sm:$0xf]
        %v1496 = vld [vmem:[%s1449 + $0xb8] sm:$0xf]
        %v1497 = vld [vmem:[%s1449 + $0xbc] sm:$0xf]
        %v1562 = vunpack.c.l.b16 %v1385
        %v1563 = vunpack.c.h.b16 %v1385
        %v1564 = vunpack.c.l.b16 %v1386
        %v1565 = vunpack.c.l.b16 %v1387
        %v1566 = vunpack.c.h.b16 %v1387
        %v1567 = vunpack.c.l.b16 %v1388
        %v1568 = vunpack.c.l.b16 %v1389
        %v1569 = vunpack.c.h.b16 %v1389
        %v1570 = vunpack.c.l.b16 %v1390
        %v1571 = vunpack.c.l.b16 %v1391
        %v1572 = vunpack.c.h.b16 %v1391
        %v1573 = vunpack.c.l.b16 %v1392
        %v1574 = vunpack.c.l.b16 %v1393
        %v1575 = vunpack.c.h.b16 %v1393
        %v1576 = vunpack.c.l.b16 %v1394
        %v1577 = vunpack.c.l.b16 %v1395
        %v1578 = vunpack.c.h.b16 %v1395
        %v1579 = vunpack.c.l.b16 %v1396
        %v1580 = vunpack.c.l.b16 %v1397
        %v1581 = vunpack.c.h.b16 %v1397
        %v1582 = vunpack.c.l.b16 %v1398
        %v1583 = vunpack.c.l.b16 %v1399
        %v1584 = vunpack.c.h.b16 %v1399
        %v1585 = vunpack.c.l.b16 %v1400
        %v1586 = vunpack.c.l.b16 %v1401
        %v1587 = vunpack.c.h.b16 %v1401
        %v1588 = vunpack.c.l.b16 %v1402
        %v1589 = vunpack.c.l.b16 %v1403
        %v1590 = vunpack.c.h.b16 %v1403
        %v1591 = vunpack.c.l.b16 %v1404
        %v1592 = vunpack.c.l.b16 %v1405
        %v1593 = vunpack.c.h.b16 %v1405
        %v1594 = vunpack.c.l.b16 %v1406
        %v1595 = vunpack.c.l.b16 %v1407
        %v1596 = vunpack.c.h.b16 %v1407
        %v1597 = vunpack.c.l.b16 %v1408
        %v1598 = vunpack.c.l.b16 %v1409
        %v1599 = vunpack.c.h.b16 %v1409
        %v1600 = vunpack.c.l.b16 %v1410
        %v1601 = vunpack.c.l.b16 %v1411
        %v1602 = vunpack.c.h.b16 %v1411
        %v1603 = vunpack.c.l.b16 %v1412
        %v1604 = vunpack.c.l.b16 %v1413
        %v1605 = vunpack.c.h.b16 %v1413
        %v1606 = vunpack.c.l.b16 %v1414
        %v1607 = vunpack.c.l.b16 %v1415
        %v1608 = vunpack.c.h.b16 %v1415
        %v1609 = vunpack.c.l.b16 %v1416
        %v1610 = vunpack.c.l.b16 %v1417
        %v1611 = vunpack.c.h.b16 %v1417
        %v1612 = vunpack.c.l.b16 %v1418
        %v1613 = vunpack.c.l.b16 %v1419
        %v1614 = vunpack.c.h.b16 %v1419
        %v1615 = vunpack.c.l.b16 %v1420
        %v1616 = vunpack.c.l.b16 %v1421
        %v1617 = vunpack.c.h.b16 %v1421
        %v1618 = vunpack.c.l.b16 %v1422
        %v1619 = vunpack.c.l.b16 %v1423
        %v1620 = vunpack.c.h.b16 %v1423
        %v1621 = vunpack.c.l.b16 %v1424
        %v1622 = vunpack.c.l.b16 %v1425
        %v1623 = vunpack.c.h.b16 %v1425
        %v1624 = vunpack.c.l.b16 %v1426
        %v1625 = vunpack.c.l.b16 %v1427
        %v1626 = vunpack.c.h.b16 %v1427
        %v1627 = vunpack.c.l.b16 %v1428
        %v1628 = vunpack.c.l.b16 %v1429
        %v1629 = vunpack.c.h.b16 %v1429
        %v1630 = vunpack.c.l.b16 %v1430
        %v1631 = vunpack.c.l.b16 %v1431
        %v1632 = vunpack.c.h.b16 %v1431
        %v1633 = vunpack.c.l.b16 %v1432
        %v1634 = vunpack.c.l.b16 %v1433
        %v1635 = vunpack.c.h.b16 %v1433
        %v1636 = vunpack.c.l.b16 %v1434
        %v1637 = vunpack.c.l.b16 %v1435
        %v1638 = vunpack.c.h.b16 %v1435
        %v1639 = vunpack.c.l.b16 %v1436
        %v1640 = vunpack.c.l.b16 %v1437
        %v1641 = vunpack.c.h.b16 %v1437
        %v1642 = vunpack.c.l.b16 %v1438
        %v1643 = vunpack.c.l.b16 %v1439
        %v1644 = vunpack.c.h.b16 %v1439
        %v1645 = vunpack.c.l.b16 %v1440
        %v1646 = vunpack.c.l.b16 %v1441
        %v1647 = vunpack.c.h.b16 %v1441
        %v1648 = vunpack.c.l.b16 %v1442
        %v1649 = vunpack.c.l.b16 %v1443
        %v1650 = vunpack.c.h.b16 %v1443
        %v1651 = vunpack.c.l.b16 %v1444
        %v1652 = vunpack.c.l.b16 %v1445
        %v1653 = vunpack.c.h.b16 %v1445
        %v1654 = vunpack.c.l.b16 %v1446
        %v1655 = vunpack.c.l.b16 %v1447
        %v1656 = vunpack.c.h.b16 %v1447
        %v1657 = vunpack.c.l.b16 %v1448
        %v1658 = vpack.c.b16 %v1565, %v1562
        %v1659 = vpack.c.b16 %v1566, %v1563
        %v1660 = vpack.c.b16 %v1567, %v1564
        %v1661 = vpack.c.b16 %v1571, %v1568
        %v1662 = vpack.c.b16 %v1572, %v1569
        %v1663 = vpack.c.b16 %v1573, %v1570
        %v1664 = vpack.c.b16 %v1577, %v1574
        %v1665 = vpack.c.b16 %v1578, %v1575
        %v1666 = vpack.c.b16 %v1579, %v1576
        %v1667 = vpack.c.b16 %v1583, %v1580
        %v1668 = vpack.c.b16 %v1584, %v1581
        %v1669 = vpack.c.b16 %v1585, %v1582
        %v1670 = vpack.c.b16 %v1589, %v1586
        %v1671 = vpack.c.b16 %v1590, %v1587
        %v1672 = vpack.c.b16 %v1591, %v1588
        %v1673 = vpack.c.b16 %v1595, %v1592
        %v1674 = vpack.c.b16 %v1596, %v1593
        %v1675 = vpack.c.b16 %v1597, %v1594
        %v1676 = vpack.c.b16 %v1601, %v1598
        %v1677 = vpack.c.b16 %v1602, %v1599
        %v1678 = vpack.c.b16 %v1603, %v1600
        %v1679 = vpack.c.b16 %v1607, %v1604
        %v1680 = vpack.c.b16 %v1608, %v1605
        %v1681 = vpack.c.b16 %v1609, %v1606
        %v1682 = vpack.c.b16 %v1613, %v1610
        %v1683 = vpack.c.b16 %v1614, %v1611
        %v1684 = vpack.c.b16 %v1615, %v1612
        %v1685 = vpack.c.b16 %v1619, %v1616
        %v1686 = vpack.c.b16 %v1620, %v1617
        %v1687 = vpack.c.b16 %v1621, %v1618
        %v1688 = vpack.c.b16 %v1625, %v1622
        %v1689 = vpack.c.b16 %v1626, %v1623
        %v1690 = vpack.c.b16 %v1627, %v1624
        %v1691 = vpack.c.b16 %v1631, %v1628
        %v1692 = vpack.c.b16 %v1632, %v1629
        %v1693 = vpack.c.b16 %v1633, %v1630
        %v1694 = vpack.c.b16 %v1637, %v1634
        %v1695 = vpack.c.b16 %v1638, %v1635
        %v1696 = vpack.c.b16 %v1639, %v1636
        %v1697 = vpack.c.b16 %v1643, %v1640
        %v1698 = vpack.c.b16 %v1644, %v1641
        %v1699 = vpack.c.b16 %v1645, %v1642
        %v1700 = vpack.c.b16 %v1649, %v1646
        %v1701 = vpack.c.b16 %v1650, %v1647
        %v1702 = vpack.c.b16 %v1651, %v1648
        %v1703 = vpack.c.b16 %v1655, %v1652
        %v1704 = vpack.c.b16 %v1656, %v1653
        %v1705 = vpack.c.b16 %v1657, %v1654
        %v1802 = vunpack.c.l.b16 %v1450
        %v1803 = vunpack.c.l.b16 %v1451
        %v1804 = vunpack.c.l.b16 %v1452
        %v1805 = vunpack.c.l.b16 %v1453
        %v1806 = vunpack.c.l.b16 %v1454
        %v1807 = vunpack.c.l.b16 %v1455
        %v1808 = vunpack.c.l.b16 %v1456
        %v1809 = vunpack.c.l.b16 %v1457
        %v1810 = vunpack.c.l.b16 %v1458
        %v1811 = vunpack.c.l.b16 %v1459
        %v1812 = vunpack.c.l.b16 %v1460
        %v1813 = vunpack.c.l.b16 %v1461
        %v1814 = vunpack.c.l.b16 %v1462
        %v1815 = vunpack.c.l.b16 %v1463
        %v1816 = vunpack.c.l.b16 %v1464
        %v1817 = vunpack.c.l.b16 %v1465
        %v1818 = vunpack.c.l.b16 %v1466
        %v1819 = vunpack.c.l.b16 %v1467
        %v1820 = vunpack.c.l.b16 %v1468
        %v1821 = vunpack.c.l.b16 %v1469
        %v1822 = vunpack.c.l.b16 %v1470
        %v1823 = vunpack.c.l.b16 %v1471
        %v1824 = vunpack.c.l.b16 %v1472
        %v1825 = vunpack.c.l.b16 %v1473
        %v1826 = vunpack.c.l.b16 %v1474
        %v1827 = vunpack.c.l.b16 %v1475
        %v1828 = vunpack.c.l.b16 %v1476
        %v1829 = vunpack.c.l.b16 %v1477
        %v1830 = vunpack.c.l.b16 %v1478
        %v1831 = vunpack.c.l.b16 %v1479
        %v1832 = vunpack.c.l.b16 %v1480
        %v1833 = vunpack.c.l.b16 %v1481
        %v1834 = vunpack.c.l.b16 %v1482
        %v1835 = vunpack.c.l.b16 %v1483
        %v1836 = vunpack.c.l.b16 %v1484
        %v1837 = vunpack.c.l.b16 %v1485
        %v1838 = vunpack.c.l.b16 %v1486
        %v1839 = vunpack.c.l.b16 %v1487
        %v1840 = vunpack.c.l.b16 %v1488
        %v1841 = vunpack.c.l.b16 %v1489
        %v1842 = vunpack.c.l.b16 %v1490
        %v1843 = vunpack.c.l.b16 %v1491
        %v1844 = vunpack.c.l.b16 %v1492
        %v1845 = vunpack.c.l.b16 %v1493
        %v1846 = vunpack.c.l.b16 %v1494
        %v1847 = vunpack.c.l.b16 %v1495
        %v1848 = vunpack.c.l.b16 %v1496
        %v1849 = vunpack.c.l.b16 %v1497
        %v1850 = vpack.c.b16 %v1803, %v1802
        %v1851 = vpack.c.b16 %v1805, %v1804
        %v1852 = vpack.c.b16 %v1807, %v1806
        %v1853 = vpack.c.b16 %v1809, %v1808
        %v1854 = vpack.c.b16 %v1811, %v1810
        %v1855 = vpack.c.b16 %v1813, %v1812
        %v1856 = vpack.c.b16 %v1815, %v1814
        %v1857 = vpack.c.b16 %v1817, %v1816
        %v1858 = vpack.c.b16 %v1819, %v1818
        %v1859 = vpack.c.b16 %v1821, %v1820
        %v1860 = vpack.c.b16 %v1823, %v1822
        %v1861 = vpack.c.b16 %v1825, %v1824
        %v1862 = vpack.c.b16 %v1827, %v1826
        %v1863 = vpack.c.b16 %v1829, %v1828
        %v1864 = vpack.c.b16 %v1831, %v1830
        %v1865 = vpack.c.b16 %v1833, %v1832
        %v1866 = vpack.c.b16 %v1835, %v1834
        %v1867 = vpack.c.b16 %v1837, %v1836
        %v1868 = vpack.c.b16 %v1839, %v1838
        %v1869 = vpack.c.b16 %v1841, %v1840
        %v1870 = vpack.c.b16 %v1843, %v1842
        %v1871 = vpack.c.b16 %v1845, %v1844
        %v1872 = vpack.c.b16 %v1847, %v1846
        %v1873 = vpack.c.b16 %v1849, %v1848
        %1898 = vmatpush.bf16.msra.mxu0 %v1857
        %1899 = vmatpush.bf16.msra.mxu0 %v1856
        %1900 = vmatpush.bf16.msra.mxu0 %v1855
        %1901 = vmatpush.bf16.msra.mxu0 %v1854
        %1902 = vmatpush.bf16.msra.mxu0 %v1853
        %1903 = vmatpush.bf16.msra.mxu0 %v1852
        %1904 = vmatpush.bf16.msra.mxu0 %v1851
        %1905 = vmatpush.bf16.msra.mxu0 %v1850
        %1906 = vmatmul.bf16.gmra.mxu0 %v1658
        %v1907 = vpop.f32.mrf.mxu0
        %v1908 = vadd.f32 0.0, %v1907
        %v1909 = vpop.f32.mrf.mxu0
        %v1910 = vadd.f32 0.0, %v1909
        %1911 = vmatmul.bf16.gmra.mxu0 %v1661
        %v1912 = vpop.f32.mrf.mxu0
        %v1913 = vadd.f32 0.0, %v1912
        %v1914 = vpop.f32.mrf.mxu0
        %v1915 = vadd.f32 0.0, %v1914
        %1916 = vmatmul.bf16.gmra.mxu0 %v1664
        %v1917 = vpop.f32.mrf.mxu0
        %v1918 = vadd.f32 0.0, %v1917
        %v1919 = vpop.f32.mrf.mxu0
        %v1920 = vadd.f32 0.0, %v1919
        %1921 = vmatmul.bf16.gmra.mxu0 %v1667
        %v1922 = vpop.f32.mrf.mxu0
        %v1923 = vadd.f32 0.0, %v1922
        %v1924 = vpop.f32.mrf.mxu0
        %v1925 = vadd.f32 0.0, %v1924
        %1926 = vmatmul.bf16.gmra.mxu0 %v1670
        %v1927 = vpop.f32.mrf.mxu0
        %v1928 = vadd.f32 0.0, %v1927
        %v1929 = vpop.f32.mrf.mxu0
        %v1930 = vadd.f32 0.0, %v1929
        %1931 = vmatmul.bf16.gmra.mxu0 %v1673
        %v1932 = vpop.f32.mrf.mxu0
        %v1933 = vadd.f32 0.0, %v1932
        %v1934 = vpop.f32.mrf.mxu0
        %v1935 = vadd.f32 0.0, %v1934
        %1936 = vmatmul.bf16.gmra.mxu0 %v1676
        %v1937 = vpop.f32.mrf.mxu0
        %v1938 = vadd.f32 0.0, %v1937
        %v1939 = vpop.f32.mrf.mxu0
        %v1940 = vadd.f32 0.0, %v1939
        %1941 = vmatmul.bf16.gmra.mxu0 %v1679
        %v1942 = vpop.f32.mrf.mxu0
        %v1943 = vadd.f32 0.0, %v1942
        %v1944 = vpop.f32.mrf.mxu0
        %v1945 = vadd.f32 0.0, %v1944
        %1946 = vmatmul.bf16.gmra.mxu0 %v1682
        %v1947 = vpop.f32.mrf.mxu0
        %v1948 = vadd.f32 0.0, %v1947
        %v1949 = vpop.f32.mrf.mxu0
        %v1950 = vadd.f32 0.0, %v1949
        %1951 = vmatmul.bf16.gmra.mxu0 %v1685
        %v1952 = vpop.f32.mrf.mxu0
        %v1953 = vadd.f32 0.0, %v1952
        %v1954 = vpop.f32.mrf.mxu0
        %v1955 = vadd.f32 0.0, %v1954
        %1956 = vmatmul.bf16.gmra.mxu0 %v1688
        %v1957 = vpop.f32.mrf.mxu0
        %v1958 = vadd.f32 0.0, %v1957
        %v1959 = vpop.f32.mrf.mxu0
        %v1960 = vadd.f32 0.0, %v1959
        %1961 = vmatmul.bf16.gmra.mxu0 %v1691
        %v1962 = vpop.f32.mrf.mxu0
        %v1963 = vadd.f32 0.0, %v1962
        %v1964 = vpop.f32.mrf.mxu0
        %v1965 = vadd.f32 0.0, %v1964
        %1966 = vmatmul.bf16.gmra.mxu0 %v1694
        %v1967 = vpop.f32.mrf.mxu0
        %v1968 = vadd.f32 0.0, %v1967
        %v1969 = vpop.f32.mrf.mxu0
        %v1970 = vadd.f32 0.0, %v1969
        %1971 = vmatmul.bf16.gmra.mxu0 %v1697
        %v1972 = vpop.f32.mrf.mxu0
        %v1973 = vadd.f32 0.0, %v1972
        %v1974 = vpop.f32.mrf.mxu0
        %v1975 = vadd.f32 0.0, %v1974
        %1976 = vmatmul.bf16.gmra.mxu0 %v1700
        %v1977 = vpop.f32.mrf.mxu0
        %v1978 = vadd.f32 0.0, %v1977
        %v1979 = vpop.f32.mrf.mxu0
        %v1980 = vadd.f32 0.0, %v1979
        %1981 = vmatmul.bf16.gmra.mxu0 %v1703
        %v1982 = vpop.f32.mrf.mxu0
        %v1983 = vadd.f32 0.0, %v1982
        %v1984 = vpop.f32.mrf.mxu0
        %v1985 = vadd.f32 0.0, %v1984
        %1986 = vdwg.mxu0
        %1987 = vmatpush.bf16.msra.mxu0 %v1865
        %1988 = vmatpush.bf16.msra.mxu0 %v1864
        %1989 = vmatpush.bf16.msra.mxu0 %v1863
        %1990 = vmatpush.bf16.msra.mxu0 %v1862
        %1991 = vmatpush.bf16.msra.mxu0 %v1861
        %1992 = vmatpush.bf16.msra.mxu0 %v1860
        %1993 = vmatpush.bf16.msra.mxu0 %v1859
        %1994 = vmatpush.bf16.msra.mxu0 %v1858
        %1995 = vmatmul.bf16.gmra.mxu0 %v1659
        %v1996 = vpop.f32.mrf.mxu0
        %v1997 = vadd.f32 %v1908, %v1996
        %v1998 = vpop.f32.mrf.mxu0
        %v1999 = vadd.f32 %v1910, %v1998
        %2000 = vmatmul.bf16.gmra.mxu0 %v1662
        %v2001 = vpop.f32.mrf.mxu0
        %v2002 = vadd.f32 %v1913, %v2001
        %v2003 = vpop.f32.mrf.mxu0
        %v2004 = vadd.f32 %v1915, %v2003
        %2005 = vmatmul.bf16.gmra.mxu0 %v1665
        %v2006 = vpop.f32.mrf.mxu0
        %v2007 = vadd.f32 %v1918, %v2006
        %v2008 = vpop.f32.mrf.mxu0
        %v2009 = vadd.f32 %v1920, %v2008
        %2010 = vmatmul.bf16.gmra.mxu0 %v1668
        %v2011 = vpop.f32.mrf.mxu0
        %v2012 = vadd.f32 %v1923, %v2011
        %v2013 = vpop.f32.mrf.mxu0
        %v2014 = vadd.f32 %v1925, %v2013
        %2015 = vmatmul.bf16.gmra.mxu0 %v1671
        %v2016 = vpop.f32.mrf.mxu0
        %v2017 = vadd.f32 %v1928, %v2016
        %v2018 = vpop.f32.mrf.mxu0
        %v2019 = vadd.f32 %v1930, %v2018
        %2020 = vmatmul.bf16.gmra.mxu0 %v1674
        %v2021 = vpop.f32.mrf.mxu0
        %v2022 = vadd.f32 %v1933, %v2021
        %v2023 = vpop.f32.mrf.mxu0
        %v2024 = vadd.f32 %v1935, %v2023
        %2025 = vmatmul.bf16.gmra.mxu0 %v1677
        %v2026 = vpop.f32.mrf.mxu0
        %v2027 = vadd.f32 %v1938, %v2026
        %v2028 = vpop.f32.mrf.mxu0
        %v2029 = vadd.f32 %v1940, %v2028
        %2030 = vmatmul.bf16.gmra.mxu0 %v1680
        %v2031 = vpop.f32.mrf.mxu0
        %v2032 = vadd.f32 %v1943, %v2031
        %v2033 = vpop.f32.mrf.mxu0
        %v2034 = vadd.f32 %v1945, %v2033
        %2035 = vmatmul.bf16.gmra.mxu0 %v1683
        %v2036 = vpop.f32.mrf.mxu0
        %v2037 = vadd.f32 %v1948, %v2036
        %v2038 = vpop.f32.mrf.mxu0
        %v2039 = vadd.f32 %v1950, %v2038
        %2040 = vmatmul.bf16.gmra.mxu0 %v1686
        %v2041 = vpop.f32.mrf.mxu0
        %v2042 = vadd.f32 %v1953, %v2041
        %v2043 = vpop.f32.mrf.mxu0
        %v2044 = vadd.f32 %v1955, %v2043
        %2045 = vmatmul.bf16.gmra.mxu0 %v1689
        %v2046 = vpop.f32.mrf.mxu0
        %v2047 = vadd.f32 %v1958, %v2046
        %v2048 = vpop.f32.mrf.mxu0
        %v2049 = vadd.f32 %v1960, %v2048
        %2050 = vmatmul.bf16.gmra.mxu0 %v1692
        %v2051 = vpop.f32.mrf.mxu0
        %v2052 = vadd.f32 %v1963, %v2051
        %v2053 = vpop.f32.mrf.mxu0
        %v2054 = vadd.f32 %v1965, %v2053
        %2055 = vmatmul.bf16.gmra.mxu0 %v1695
        %v2056 = vpop.f32.mrf.mxu0
        %v2057 = vadd.f32 %v1968, %v2056
        %v2058 = vpop.f32.mrf.mxu0
        %v2059 = vadd.f32 %v1970, %v2058
        %2060 = vmatmul.bf16.gmra.mxu0 %v1698
        %v2061 = vpop.f32.mrf.mxu0
        %v2062 = vadd.f32 %v1973, %v2061
        %v2063 = vpop.f32.mrf.mxu0
        %v2064 = vadd.f32 %v1975, %v2063
        %2065 = vmatmul.bf16.gmra.mxu0 %v1701
        %v2066 = vpop.f32.mrf.mxu0
        %v2067 = vadd.f32 %v1978, %v2066
        %v2068 = vpop.f32.mrf.mxu0
        %v2069 = vadd.f32 %v1980, %v2068
        %2070 = vmatmul.bf16.gmra.mxu0 %v1704
        %v2071 = vpop.f32.mrf.mxu0
        %v2072 = vadd.f32 %v1983, %v2071
        %v2073 = vpop.f32.mrf.mxu0
        %v2074 = vadd.f32 %v1985, %v2073
        %2075 = vdwg.mxu0
        %2076 = vmatpush.bf16.msra.mxu0 %v1873
        %2077 = vmatpush.bf16.msra.mxu0 %v1872
        %2078 = vmatpush.bf16.msra.mxu0 %v1871
        %2079 = vmatpush.bf16.msra.mxu0 %v1870
        %2080 = vmatpush.bf16.msra.mxu0 %v1869
        %2081 = vmatpush.bf16.msra.mxu0 %v1868
        %2082 = vmatpush.bf16.msra.mxu0 %v1867
        %2083 = vmatpush.bf16.msra.mxu0 %v1866
        %2084 = vmatmul.bf16.gmra.mxu0 %v1660
        %v2085 = vpop.f32.mrf.mxu0
        %v2086 = vadd.f32 %v1997, %v2085
        %v2087 = vpop.f32.mrf.mxu0
        %v2088 = vadd.f32 %v1999, %v2087
        %2089 = vmatmul.bf16.gmra.mxu0 %v1663
        %v2090 = vpop.f32.mrf.mxu0
        %v2091 = vadd.f32 %v2002, %v2090
        %v2092 = vpop.f32.mrf.mxu0
        %v2093 = vadd.f32 %v2004, %v2092
        %2094 = vmatmul.bf16.gmra.mxu0 %v1666
        %v2095 = vpop.f32.mrf.mxu0
        %v2096 = vadd.f32 %v2007, %v2095
        %v2097 = vpop.f32.mrf.mxu0
        %v2098 = vadd.f32 %v2009, %v2097
        %2099 = vmatmul.bf16.gmra.mxu0 %v1669
        %v2100 = vpop.f32.mrf.mxu0
        %v2101 = vadd.f32 %v2012, %v2100
        %v2102 = vpop.f32.mrf.mxu0
        %v2103 = vadd.f32 %v2014, %v2102
        %2104 = vmatmul.bf16.gmra.mxu0 %v1672
        %v2105 = vpop.f32.mrf.mxu0
        %v2106 = vadd.f32 %v2017, %v2105
        %v2107 = vpop.f32.mrf.mxu0
        %v2108 = vadd.f32 %v2019, %v2107
        %2109 = vmatmul.bf16.gmra.mxu0 %v1675
        %v2110 = vpop.f32.mrf.mxu0
        %v2111 = vadd.f32 %v2022, %v2110
        %v2112 = vpop.f32.mrf.mxu0
        %v2113 = vadd.f32 %v2024, %v2112
        %2114 = vmatmul.bf16.gmra.mxu0 %v1678
        %v2115 = vpop.f32.mrf.mxu0
        %v2116 = vadd.f32 %v2027, %v2115
        %v2117 = vpop.f32.mrf.mxu0
        %v2118 = vadd.f32 %v2029, %v2117
        %2119 = vmatmul.bf16.gmra.mxu0 %v1681
        %v2120 = vpop.f32.mrf.mxu0
        %v2121 = vadd.f32 %v2032, %v2120
        %v2122 = vpop.f32.mrf.mxu0
        %v2123 = vadd.f32 %v2034, %v2122
        %2124 = vmatmul.bf16.gmra.mxu0 %v1684
        %v2125 = vpop.f32.mrf.mxu0
        %v2126 = vadd.f32 %v2037, %v2125
        %v2127 = vpop.f32.mrf.mxu0
        %v2128 = vadd.f32 %v2039, %v2127
        %2129 = vmatmul.bf16.gmra.mxu0 %v1687
        %v2130 = vpop.f32.mrf.mxu0
        %v2131 = vadd.f32 %v2042, %v2130
        %v2132 = vpop.f32.mrf.mxu0
        %v2133 = vadd.f32 %v2044, %v2132
        %2134 = vmatmul.bf16.gmra.mxu0 %v1690
        %v2135 = vpop.f32.mrf.mxu0
        %v2136 = vadd.f32 %v2047, %v2135
        %v2137 = vpop.f32.mrf.mxu0
        %v2138 = vadd.f32 %v2049, %v2137
        %2139 = vmatmul.bf16.gmra.mxu0 %v1693
        %v2140 = vpop.f32.mrf.mxu0
        %v2141 = vadd.f32 %v2052, %v2140
        %v2142 = vpop.f32.mrf.mxu0
        %v2143 = vadd.f32 %v2054, %v2142
        %2144 = vmatmul.bf16.gmra.mxu0 %v1696
        %v2145 = vpop.f32.mrf.mxu0
        %v2146 = vadd.f32 %v2057, %v2145
        %v2147 = vpop.f32.mrf.mxu0
        %v2148 = vadd.f32 %v2059, %v2147
        %2149 = vmatmul.bf16.gmra.mxu0 %v1699
        %v2150 = vpop.f32.mrf.mxu0
        %v2151 = vadd.f32 %v2062, %v2150
        %v2152 = vpop.f32.mrf.mxu0
        %v2153 = vadd.f32 %v2064, %v2152
        %2154 = vmatmul.bf16.gmra.mxu0 %v1702
        %v2155 = vpop.f32.mrf.mxu0
        %v2156 = vadd.f32 %v2067, %v2155
        %v2157 = vpop.f32.mrf.mxu0
        %v2158 = vadd.f32 %v2069, %v2157
        %2159 = vmatmul.bf16.gmra.mxu0 %v1705
        %v2160 = vpop.f32.mrf.mxu0
        %v2161 = vadd.f32 %v2072, %v2160
        %v2162 = vpop.f32.mrf.mxu0
        %v2163 = vadd.f32 %v2074, %v2162
        %2164 = vdwg.mxu0
        %v2229 = vunpack.c.l.b16 %v1273
        %v2230 = vunpack.c.h.b16 %v1273
        %v2231 = vunpack.c.l.b16 %v1274
        %v2232 = vunpack.c.l.b16 %v1275
        %v2233 = vunpack.c.h.b16 %v1275
        %v2234 = vunpack.c.l.b16 %v1276
        %v2235 = vunpack.c.l.b16 %v1277
        %v2236 = vunpack.c.h.b16 %v1277
        %v2237 = vunpack.c.l.b16 %v1278
        %v2238 = vunpack.c.l.b16 %v1279
        %v2239 = vunpack.c.h.b16 %v1279
        %v2240 = vunpack.c.l.b16 %v1280
        %v2241 = vunpack.c.l.b16 %v1281
        %v2242 = vunpack.c.h.b16 %v1281
        %v2243 = vunpack.c.l.b16 %v1282
        %v2244 = vunpack.c.l.b16 %v1283
        %v2245 = vunpack.c.h.b16 %v1283
        %v2246 = vunpack.c.l.b16 %v1284
        %v2247 = vunpack.c.l.b16 %v1285
        %v2248 = vunpack.c.h.b16 %v1285
        %v2249 = vunpack.c.l.b16 %v1286
        %v2250 = vunpack.c.l.b16 %v1287
        %v2251 = vunpack.c.h.b16 %v1287
        %v2252 = vunpack.c.l.b16 %v1288
        %v2253 = vunpack.c.l.b16 %v1289
        %v2254 = vunpack.c.h.b16 %v1289
        %v2255 = vunpack.c.l.b16 %v1290
        %v2256 = vunpack.c.l.b16 %v1291
        %v2257 = vunpack.c.h.b16 %v1291
        %v2258 = vunpack.c.l.b16 %v1292
        %v2259 = vunpack.c.l.b16 %v1293
        %v2260 = vunpack.c.h.b16 %v1293
        %v2261 = vunpack.c.l.b16 %v1294
        %v2262 = vunpack.c.l.b16 %v1295
        %v2263 = vunpack.c.h.b16 %v1295
        %v2264 = vunpack.c.l.b16 %v1296
        %v2265 = vunpack.c.l.b16 %v1297
        %v2266 = vunpack.c.h.b16 %v1297
        %v2267 = vunpack.c.l.b16 %v1298
        %v2268 = vunpack.c.l.b16 %v1299
        %v2269 = vunpack.c.h.b16 %v1299
        %v2270 = vunpack.c.l.b16 %v1300
        %v2271 = vunpack.c.l.b16 %v1301
        %v2272 = vunpack.c.h.b16 %v1301
        %v2273 = vunpack.c.l.b16 %v1302
        %v2274 = vunpack.c.l.b16 %v1303
        %v2275 = vunpack.c.h.b16 %v1303
        %v2276 = vunpack.c.l.b16 %v1304
        %v2277 = vunpack.c.l.b16 %v1305
        %v2278 = vunpack.c.h.b16 %v1305
        %v2279 = vunpack.c.l.b16 %v1306
        %v2280 = vunpack.c.l.b16 %v1307
        %v2281 = vunpack.c.h.b16 %v1307
        %v2282 = vunpack.c.l.b16 %v1308
        %v2283 = vunpack.c.l.b16 %v1309
        %v2284 = vunpack.c.h.b16 %v1309
        %v2285 = vunpack.c.l.b16 %v1310
        %v2286 = vunpack.c.l.b16 %v1311
        %v2287 = vunpack.c.h.b16 %v1311
        %v2288 = vunpack.c.l.b16 %v1312
        %v2289 = vunpack.c.l.b16 %v1313
        %v2290 = vunpack.c.h.b16 %v1313
        %v2291 = vunpack.c.l.b16 %v1314
        %v2292 = vunpack.c.l.b16 %v1315
        %v2293 = vunpack.c.h.b16 %v1315
        %v2294 = vunpack.c.l.b16 %v1316
        %v2295 = vunpack.c.l.b16 %v1317
        %v2296 = vunpack.c.h.b16 %v1317
        %v2297 = vunpack.c.l.b16 %v1318
        %v2298 = vunpack.c.l.b16 %v1319
        %v2299 = vunpack.c.h.b16 %v1319
        %v2300 = vunpack.c.l.b16 %v1320
        %v2301 = vunpack.c.l.b16 %v1321
        %v2302 = vunpack.c.h.b16 %v1321
        %v2303 = vunpack.c.l.b16 %v1322
        %v2304 = vunpack.c.l.b16 %v1323
        %v2305 = vunpack.c.h.b16 %v1323
        %v2306 = vunpack.c.l.b16 %v1324
        %v2307 = vunpack.c.l.b16 %v1325
        %v2308 = vunpack.c.h.b16 %v1325
        %v2309 = vunpack.c.l.b16 %v1326
        %v2310 = vunpack.c.l.b16 %v1327
        %v2311 = vunpack.c.h.b16 %v1327
        %v2312 = vunpack.c.l.b16 %v1328
        %v2313 = vunpack.c.l.b16 %v1329
        %v2314 = vunpack.c.h.b16 %v1329
        %v2315 = vunpack.c.l.b16 %v1330
        %v2316 = vunpack.c.l.b16 %v1331
        %v2317 = vunpack.c.h.b16 %v1331
        %v2318 = vunpack.c.l.b16 %v1332
        %v2319 = vunpack.c.l.b16 %v1333
        %v2320 = vunpack.c.h.b16 %v1333
        %v2321 = vunpack.c.l.b16 %v1334
        %v2322 = vunpack.c.l.b16 %v1335
        %v2323 = vunpack.c.h.b16 %v1335
        %v2324 = vunpack.c.l.b16 %v1336
        %v2325 = vpack.c.b16 %v2232, %v2229
        %v2326 = vpack.c.b16 %v2233, %v2230
        %v2327 = vpack.c.b16 %v2234, %v2231
        %v2328 = vpack.c.b16 %v2238, %v2235
        %v2329 = vpack.c.b16 %v2239, %v2236
        %v2330 = vpack.c.b16 %v2240, %v2237
        %v2331 = vpack.c.b16 %v2244, %v2241
        %v2332 = vpack.c.b16 %v2245, %v2242
        %v2333 = vpack.c.b16 %v2246, %v2243
        %v2334 = vpack.c.b16 %v2250, %v2247
        %v2335 = vpack.c.b16 %v2251, %v2248
        %v2336 = vpack.c.b16 %v2252, %v2249
        %v2337 = vpack.c.b16 %v2256, %v2253
        %v2338 = vpack.c.b16 %v2257, %v2254
        %v2339 = vpack.c.b16 %v2258, %v2255
        %v2340 = vpack.c.b16 %v2262, %v2259
        %v2341 = vpack.c.b16 %v2263, %v2260
        %v2342 = vpack.c.b16 %v2264, %v2261
        %v2343 = vpack.c.b16 %v2268, %v2265
        %v2344 = vpack.c.b16 %v2269, %v2266
        %v2345 = vpack.c.b16 %v2270, %v2267
        %v2346 = vpack.c.b16 %v2274, %v2271
        %v2347 = vpack.c.b16 %v2275, %v2272
        %v2348 = vpack.c.b16 %v2276, %v2273
        %v2349 = vpack.c.b16 %v2280, %v2277
        %v2350 = vpack.c.b16 %v2281, %v2278
        %v2351 = vpack.c.b16 %v2282, %v2279
        %v2352 = vpack.c.b16 %v2286, %v2283
        %v2353 = vpack.c.b16 %v2287, %v2284
        %v2354 = vpack.c.b16 %v2288, %v2285
        %v2355 = vpack.c.b16 %v2292, %v2289
        %v2356 = vpack.c.b16 %v2293, %v2290
        %v2357 = vpack.c.b16 %v2294, %v2291
        %v2358 = vpack.c.b16 %v2298, %v2295
        %v2359 = vpack.c.b16 %v2299, %v2296
        %v2360 = vpack.c.b16 %v2300, %v2297
        %v2361 = vpack.c.b16 %v2304, %v2301
        %v2362 = vpack.c.b16 %v2305, %v2302
        %v2363 = vpack.c.b16 %v2306, %v2303
        %v2364 = vpack.c.b16 %v2310, %v2307
        %v2365 = vpack.c.b16 %v2311, %v2308
        %v2366 = vpack.c.b16 %v2312, %v2309
        %v2367 = vpack.c.b16 %v2316, %v2313
        %v2368 = vpack.c.b16 %v2317, %v2314
        %v2369 = vpack.c.b16 %v2318, %v2315
        %v2370 = vpack.c.b16 %v2322, %v2319
        %v2371 = vpack.c.b16 %v2323, %v2320
        %v2372 = vpack.c.b16 %v2324, %v2321
        %v2469 = vunpack.c.l.b16 %v1337
        %v2470 = vunpack.c.l.b16 %v1338
        %v2471 = vunpack.c.l.b16 %v1339
        %v2472 = vunpack.c.l.b16 %v1340
        %v2473 = vunpack.c.l.b16 %v1341
        %v2474 = vunpack.c.l.b16 %v1342
        %v2475 = vunpack.c.l.b16 %v1343
        %v2476 = vunpack.c.l.b16 %v1344
        %v2477 = vunpack.c.l.b16 %v1345
        %v2478 = vunpack.c.l.b16 %v1346
        %v2479 = vunpack.c.l.b16 %v1347
        %v2480 = vunpack.c.l.b16 %v1348
        %v2481 = vunpack.c.l.b16 %v1349
        %v2482 = vunpack.c.l.b16 %v1350
        %v2483 = vunpack.c.l.b16 %v1351
        %v2484 = vunpack.c.l.b16 %v1352
        %v2485 = vunpack.c.l.b16 %v1353
        %v2486 = vunpack.c.l.b16 %v1354
        %v2487 = vunpack.c.l.b16 %v1355
        %v2488 = vunpack.c.l.b16 %v1356
        %v2489 = vunpack.c.l.b16 %v1357
        %v2490 = vunpack.c.l.b16 %v1358
        %v2491 = vunpack.c.l.b16 %v1359
        %v2492 = vunpack.c.l.b16 %v1360
        %v2493 = vunpack.c.l.b16 %v1361
        %v2494 = vunpack.c.l.b16 %v1362
        %v2495 = vunpack.c.l.b16 %v1363
        %v2496 = vunpack.c.l.b16 %v1364
        %v2497 = vunpack.c.l.b16 %v1365
        %v2498 = vunpack.c.l.b16 %v1366
        %v2499 = vunpack.c.l.b16 %v1367
        %v2500 = vunpack.c.l.b16 %v1368
        %v2501 = vunpack.c.l.b16 %v1369
        %v2502 = vunpack.c.l.b16 %v1370
        %v2503 = vunpack.c.l.b16 %v1371
        %v2504 = vunpack.c.l.b16 %v1372
        %v2505 = vunpack.c.l.b16 %v1373
        %v2506 = vunpack.c.l.b16 %v1374
        %v2507 = vunpack.c.l.b16 %v1375
        %v2508 = vunpack.c.l.b16 %v1376
        %v2509 = vunpack.c.l.b16 %v1377
        %v2510 = vunpack.c.l.b16 %v1378
        %v2511 = vunpack.c.l.b16 %v1379
        %v2512 = vunpack.c.l.b16 %v1380
        %v2513 = vunpack.c.l.b16 %v1381
        %v2514 = vunpack.c.l.b16 %v1382
        %v2515 = vunpack.c.l.b16 %v1383
        %v2516 = vunpack.c.l.b16 %v1384
        %v2517 = vpack.c.b16 %v2470, %v2469
        %v2518 = vpack.c.b16 %v2472, %v2471
        %v2519 = vpack.c.b16 %v2474, %v2473
        %v2520 = vpack.c.b16 %v2476, %v2475
        %v2521 = vpack.c.b16 %v2478, %v2477
        %v2522 = vpack.c.b16 %v2480, %v2479
        %v2523 = vpack.c.b16 %v2482, %v2481
        %v2524 = vpack.c.b16 %v2484, %v2483
        %v2525 = vpack.c.b16 %v2486, %v2485
        %v2526 = vpack.c.b16 %v2488, %v2487
        %v2527 = vpack.c.b16 %v2490, %v2489
        %v2528 = vpack.c.b16 %v2492, %v2491
        %v2529 = vpack.c.b16 %v2494, %v2493
        %v2530 = vpack.c.b16 %v2496, %v2495
        %v2531 = vpack.c.b16 %v2498, %v2497
        %v2532 = vpack.c.b16 %v2500, %v2499
        %v2533 = vpack.c.b16 %v2502, %v2501
        %v2534 = vpack.c.b16 %v2504, %v2503
        %v2535 = vpack.c.b16 %v2506, %v2505
        %v2536 = vpack.c.b16 %v2508, %v2507
        %v2537 = vpack.c.b16 %v2510, %v2509
        %v2538 = vpack.c.b16 %v2512, %v2511
        %v2539 = vpack.c.b16 %v2514, %v2513
        %v2540 = vpack.c.b16 %v2516, %v2515
        %2565 = vmatpush.bf16.msra.mxu0 %v2524
        %2566 = vmatpush.bf16.msra.mxu0 %v2523
        %2567 = vmatpush.bf16.msra.mxu0 %v2522
        %2568 = vmatpush.bf16.msra.mxu0 %v2521
        %2569 = vmatpush.bf16.msra.mxu0 %v2520
        %2570 = vmatpush.bf16.msra.mxu0 %v2519
        %2571 = vmatpush.bf16.msra.mxu0 %v2518
        %2572 = vmatpush.bf16.msra.mxu0 %v2517
        %2573 = vmatmul.bf16.gmra.mxu0 %v2325
        %v2574 = vpop.f32.mrf.mxu0
        %v2575 = vadd.f32 %v2086, %v2574
        %v2576 = vpop.f32.mrf.mxu0
        %v2577 = vadd.f32 %v2088, %v2576
        %2578 = vmatmul.bf16.gmra.mxu0 %v2328
        %v2579 = vpop.f32.mrf.mxu0
        %v2580 = vadd.f32 %v2091, %v2579
        %v2581 = vpop.f32.mrf.mxu0
        %v2582 = vadd.f32 %v2093, %v2581
        %2583 = vmatmul.bf16.gmra.mxu0 %v2331
        %v2584 = vpop.f32.mrf.mxu0
        %v2585 = vadd.f32 %v2096, %v2584
        %v2586 = vpop.f32.mrf.mxu0
        %v2587 = vadd.f32 %v2098, %v2586
        %2588 = vmatmul.bf16.gmra.mxu0 %v2334
        %v2589 = vpop.f32.mrf.mxu0
        %v2590 = vadd.f32 %v2101, %v2589
        %v2591 = vpop.f32.mrf.mxu0
        %v2592 = vadd.f32 %v2103, %v2591
        %2593 = vmatmul.bf16.gmra.mxu0 %v2337
        %v2594 = vpop.f32.mrf.mxu0
        %v2595 = vadd.f32 %v2106, %v2594
        %v2596 = vpop.f32.mrf.mxu0
        %v2597 = vadd.f32 %v2108, %v2596
        %2598 = vmatmul.bf16.gmra.mxu0 %v2340
        %v2599 = vpop.f32.mrf.mxu0
        %v2600 = vadd.f32 %v2111, %v2599
        %v2601 = vpop.f32.mrf.mxu0
        %v2602 = vadd.f32 %v2113, %v2601
        %2603 = vmatmul.bf16.gmra.mxu0 %v2343
        %v2604 = vpop.f32.mrf.mxu0
        %v2605 = vadd.f32 %v2116, %v2604
        %v2606 = vpop.f32.mrf.mxu0
        %v2607 = vadd.f32 %v2118, %v2606
        %2608 = vmatmul.bf16.gmra.mxu0 %v2346
        %v2609 = vpop.f32.mrf.mxu0
        %v2610 = vadd.f32 %v2121, %v2609
        %v2611 = vpop.f32.mrf.mxu0
        %v2612 = vadd.f32 %v2123, %v2611
        %2613 = vmatmul.bf16.gmra.mxu0 %v2349
        %v2614 = vpop.f32.mrf.mxu0
        %v2615 = vadd.f32 %v2126, %v2614
        %v2616 = vpop.f32.mrf.mxu0
        %v2617 = vadd.f32 %v2128, %v2616
        %2618 = vmatmul.bf16.gmra.mxu0 %v2352
        %v2619 = vpop.f32.mrf.mxu0
        %v2620 = vadd.f32 %v2131, %v2619
        %v2621 = vpop.f32.mrf.mxu0
        %v2622 = vadd.f32 %v2133, %v2621
        %2623 = vmatmul.bf16.gmra.mxu0 %v2355
        %v2624 = vpop.f32.mrf.mxu0
        %v2625 = vadd.f32 %v2136, %v2624
        %v2626 = vpop.f32.mrf.mxu0
        %v2627 = vadd.f32 %v2138, %v2626
        %2628 = vmatmul.bf16.gmra.mxu0 %v2358
        %v2629 = vpop.f32.mrf.mxu0
        %v2630 = vadd.f32 %v2141, %v2629
        %v2631 = vpop.f32.mrf.mxu0
        %v2632 = vadd.f32 %v2143, %v2631
        %2633 = vmatmul.bf16.gmra.mxu0 %v2361
        %v2634 = vpop.f32.mrf.mxu0
        %v2635 = vadd.f32 %v2146, %v2634
        %v2636 = vpop.f32.mrf.mxu0
        %v2637 = vadd.f32 %v2148, %v2636
        %2638 = vmatmul.bf16.gmra.mxu0 %v2364
        %v2639 = vpop.f32.mrf.mxu0
        %v2640 = vadd.f32 %v2151, %v2639
        %v2641 = vpop.f32.mrf.mxu0
        %v2642 = vadd.f32 %v2153, %v2641
        %2643 = vmatmul.bf16.gmra.mxu0 %v2367
        %v2644 = vpop.f32.mrf.mxu0
        %v2645 = vadd.f32 %v2156, %v2644
        %v2646 = vpop.f32.mrf.mxu0
        %v2647 = vadd.f32 %v2158, %v2646
        %2648 = vmatmul.bf16.gmra.mxu0 %v2370
        %v2649 = vpop.f32.mrf.mxu0
        %v2650 = vadd.f32 %v2161, %v2649
        %v2651 = vpop.f32.mrf.mxu0
        %v2652 = vadd.f32 %v2163, %v2651
        %2653 = vdwg.mxu0
        %2654 = vmatpush.bf16.msra.mxu0 %v2532
        %2655 = vmatpush.bf16.msra.mxu0 %v2531
        %2656 = vmatpush.bf16.msra.mxu0 %v2530
        %2657 = vmatpush.bf16.msra.mxu0 %v2529
        %2658 = vmatpush.bf16.msra.mxu0 %v2528
        %2659 = vmatpush.bf16.msra.mxu0 %v2527
        %2660 = vmatpush.bf16.msra.mxu0 %v2526
        %2661 = vmatpush.bf16.msra.mxu0 %v2525
        %2662 = vmatmul.bf16.gmra.mxu0 %v2326
        %v2663 = vpop.f32.mrf.mxu0
        %v2664 = vadd.f32 %v2575, %v2663
        %v2665 = vpop.f32.mrf.mxu0
        %v2666 = vadd.f32 %v2577, %v2665
        %2667 = vmatmul.bf16.gmra.mxu0 %v2329
        %v2668 = vpop.f32.mrf.mxu0
        %v2669 = vadd.f32 %v2580, %v2668
        %v2670 = vpop.f32.mrf.mxu0
        %v2671 = vadd.f32 %v2582, %v2670
        %2672 = vmatmul.bf16.gmra.mxu0 %v2332
        %v2673 = vpop.f32.mrf.mxu0
        %v2674 = vadd.f32 %v2585, %v2673
        %v2675 = vpop.f32.mrf.mxu0
        %v2676 = vadd.f32 %v2587, %v2675
        %2677 = vmatmul.bf16.gmra.mxu0 %v2335
        %v2678 = vpop.f32.mrf.mxu0
        %v2679 = vadd.f32 %v2590, %v2678
        %v2680 = vpop.f32.mrf.mxu0
        %v2681 = vadd.f32 %v2592, %v2680
        %2682 = vmatmul.bf16.gmra.mxu0 %v2338
        %v2683 = vpop.f32.mrf.mxu0
        %v2684 = vadd.f32 %v2595, %v2683
        %v2685 = vpop.f32.mrf.mxu0
        %v2686 = vadd.f32 %v2597, %v2685
        %2687 = vmatmul.bf16.gmra.mxu0 %v2341
        %v2688 = vpop.f32.mrf.mxu0
        %v2689 = vadd.f32 %v2600, %v2688
        %v2690 = vpop.f32.mrf.mxu0
        %v2691 = vadd.f32 %v2602, %v2690
        %2692 = vmatmul.bf16.gmra.mxu0 %v2344
        %v2693 = vpop.f32.mrf.mxu0
        %v2694 = vadd.f32 %v2605, %v2693
        %v2695 = vpop.f32.mrf.mxu0
        %v2696 = vadd.f32 %v2607, %v2695
        %2697 = vmatmul.bf16.gmra.mxu0 %v2347
        %v2698 = vpop.f32.mrf.mxu0
        %v2699 = vadd.f32 %v2610, %v2698
        %v2700 = vpop.f32.mrf.mxu0
        %v2701 = vadd.f32 %v2612, %v2700
        %2702 = vmatmul.bf16.gmra.mxu0 %v2350
        %v2703 = vpop.f32.mrf.mxu0
        %v2704 = vadd.f32 %v2615, %v2703
        %v2705 = vpop.f32.mrf.mxu0
        %v2706 = vadd.f32 %v2617, %v2705
        %2707 = vmatmul.bf16.gmra.mxu0 %v2353
        %v2708 = vpop.f32.mrf.mxu0
        %v2709 = vadd.f32 %v2620, %v2708
        %v2710 = vpop.f32.mrf.mxu0
        %v2711 = vadd.f32 %v2622, %v2710
        %2712 = vmatmul.bf16.gmra.mxu0 %v2356
        %v2713 = vpop.f32.mrf.mxu0
        %v2714 = vadd.f32 %v2625, %v2713
        %v2715 = vpop.f32.mrf.mxu0
        %v2716 = vadd.f32 %v2627, %v2715
        %2717 = vmatmul.bf16.gmra.mxu0 %v2359
        %v2718 = vpop.f32.mrf.mxu0
        %v2719 = vadd.f32 %v2630, %v2718
        %v2720 = vpop.f32.mrf.mxu0
        %v2721 = vadd.f32 %v2632, %v2720
        %2722 = vmatmul.bf16.gmra.mxu0 %v2362
        %v2723 = vpop.f32.mrf.mxu0
        %v2724 = vadd.f32 %v2635, %v2723
        %v2725 = vpop.f32.mrf.mxu0
        %v2726 = vadd.f32 %v2637, %v2725
        %2727 = vmatmul.bf16.gmra.mxu0 %v2365
        %v2728 = vpop.f32.mrf.mxu0
        %v2729 = vadd.f32 %v2640, %v2728
        %v2730 = vpop.f32.mrf.mxu0
        %v2731 = vadd.f32 %v2642, %v2730
        %2732 = vmatmul.bf16.gmra.mxu0 %v2368
        %v2733 = vpop.f32.mrf.mxu0
        %v2734 = vadd.f32 %v2645, %v2733
        %v2735 = vpop.f32.mrf.mxu0
        %v2736 = vadd.f32 %v2647, %v2735
        %2737 = vmatmul.bf16.gmra.mxu0 %v2371
        %v2738 = vpop.f32.mrf.mxu0
        %v2739 = vadd.f32 %v2650, %v2738
        %v2740 = vpop.f32.mrf.mxu0
        %v2741 = vadd.f32 %v2652, %v2740
        %2742 = vdwg.mxu0
        %2743 = vmatpush.bf16.msra.mxu0 %v2540
        %2744 = vmatpush.bf16.msra.mxu0 %v2539
        %2745 = vmatpush.bf16.msra.mxu0 %v2538
        %2746 = vmatpush.bf16.msra.mxu0 %v2537
        %2747 = vmatpush.bf16.msra.mxu0 %v2536
        %2748 = vmatpush.bf16.msra.mxu0 %v2535
        %2749 = vmatpush.bf16.msra.mxu0 %v2534
        %2750 = vmatpush.bf16.msra.mxu0 %v2533
        %2751 = vmatmul.bf16.gmra.mxu0 %v2327
        %v2752 = vpop.f32.mrf.mxu0
        %v2753 = vadd.f32 %v2664, %v2752
        %v2754 = vpop.f32.mrf.mxu0
        %v2755 = vadd.f32 %v2666, %v2754
        %2756 = vmatmul.bf16.gmra.mxu0 %v2330
        %v2757 = vpop.f32.mrf.mxu0
        %v2758 = vadd.f32 %v2669, %v2757
        %v2759 = vpop.f32.mrf.mxu0
        %v2760 = vadd.f32 %v2671, %v2759
        %2761 = vmatmul.bf16.gmra.mxu0 %v2333
        %v2762 = vpop.f32.mrf.mxu0
        %v2763 = vadd.f32 %v2674, %v2762
        %v2764 = vpop.f32.mrf.mxu0
        %v2765 = vadd.f32 %v2676, %v2764
        %2766 = vmatmul.bf16.gmra.mxu0 %v2336
        %v2767 = vpop.f32.mrf.mxu0
        %v2768 = vadd.f32 %v2679, %v2767
        %v2769 = vpop.f32.mrf.mxu0
        %v2770 = vadd.f32 %v2681, %v2769
        %2771 = vmatmul.bf16.gmra.mxu0 %v2339
        %v2772 = vpop.f32.mrf.mxu0
        %v2773 = vadd.f32 %v2684, %v2772
        %v2774 = vpop.f32.mrf.mxu0
        %v2775 = vadd.f32 %v2686, %v2774
        %2776 = vmatmul.bf16.gmra.mxu0 %v2342
        %v2777 = vpop.f32.mrf.mxu0
        %v2778 = vadd.f32 %v2689, %v2777
        %v2779 = vpop.f32.mrf.mxu0
        %v2780 = vadd.f32 %v2691, %v2779
        %2781 = vmatmul.bf16.gmra.mxu0 %v2345
        %v2782 = vpop.f32.mrf.mxu0
        %v2783 = vadd.f32 %v2694, %v2782
        %v2784 = vpop.f32.mrf.mxu0
        %v2785 = vadd.f32 %v2696, %v2784
        %2786 = vmatmul.bf16.gmra.mxu0 %v2348
        %v2787 = vpop.f32.mrf.mxu0
        %v2788 = vadd.f32 %v2699, %v2787
        %v2789 = vpop.f32.mrf.mxu0
        %v2790 = vadd.f32 %v2701, %v2789
        %2791 = vmatmul.bf16.gmra.mxu0 %v2351
        %v2792 = vpop.f32.mrf.mxu0
        %v2793 = vadd.f32 %v2704, %v2792
        %v2794 = vpop.f32.mrf.mxu0
        %v2795 = vadd.f32 %v2706, %v2794
        %2796 = vmatmul.bf16.gmra.mxu0 %v2354
        %v2797 = vpop.f32.mrf.mxu0
        %v2798 = vadd.f32 %v2709, %v2797
        %v2799 = vpop.f32.mrf.mxu0
        %v2800 = vadd.f32 %v2711, %v2799
        %2801 = vmatmul.bf16.gmra.mxu0 %v2357
        %v2802 = vpop.f32.mrf.mxu0
        %v2803 = vadd.f32 %v2714, %v2802
        %v2804 = vpop.f32.mrf.mxu0
        %v2805 = vadd.f32 %v2716, %v2804
        %2806 = vmatmul.bf16.gmra.mxu0 %v2360
        %v2807 = vpop.f32.mrf.mxu0
        %v2808 = vadd.f32 %v2719, %v2807
        %v2809 = vpop.f32.mrf.mxu0
        %v2810 = vadd.f32 %v2721, %v2809
        %2811 = vmatmul.bf16.gmra.mxu0 %v2363
        %v2812 = vpop.f32.mrf.mxu0
        %v2813 = vadd.f32 %v2724, %v2812
        %v2814 = vpop.f32.mrf.mxu0
        %v2815 = vadd.f32 %v2726, %v2814
        %2816 = vmatmul.bf16.gmra.mxu0 %v2366
        %v2817 = vpop.f32.mrf.mxu0
        %v2818 = vadd.f32 %v2729, %v2817
        %v2819 = vpop.f32.mrf.mxu0
        %v2820 = vadd.f32 %v2731, %v2819
        %2821 = vmatmul.bf16.gmra.mxu0 %v2369
        %v2822 = vpop.f32.mrf.mxu0
        %v2823 = vadd.f32 %v2734, %v2822
        %v2824 = vpop.f32.mrf.mxu0
        %v2825 = vadd.f32 %v2736, %v2824
        %2826 = vmatmul.bf16.gmra.mxu0 %v2372
        %v2827 = vpop.f32.mrf.mxu0
        %v2828 = vadd.f32 %v2739, %v2827
        %v2829 = vpop.f32.mrf.mxu0
        %v2830 = vadd.f32 %v2741, %v2829
        %2831 = vdwg.mxu0
        %s2832 = scalar_lea.vmem [#allocation2], 48
        %v2833 = vld [vmem:[%s2832] sm:$0xff]
        %v2834 = vld [vmem:[%s2832 + $0x8] sm:$0xf]
        %v2835 = vld [vmem:[%s2832 + $0xc] sm:$0xff]
        %v2836 = vld [vmem:[%s2832 + $0x14] sm:$0xf]
        %v2837 = vld [vmem:[%s2832 + $0x18] sm:$0xff]
        %v2838 = vld [vmem:[%s2832 + $0x20] sm:$0xf]
        %v2839 = vld [vmem:[%s2832 + $0x24] sm:$0xff]
        %v2840 = vld [vmem:[%s2832 + $0x2c] sm:$0xf]
        %v2841 = vld [vmem:[%s2832 + $0x30] sm:$0xff]
        %v2842 = vld [vmem:[%s2832 + $0x38] sm:$0xf]
        %v2843 = vld [vmem:[%s2832 + $0x3c] sm:$0xff]
        %v2844 = vld [vmem:[%s2832 + $0x44] sm:$0xf]
        %v2845 = vld [vmem:[%s2832 + $0x48] sm:$0xff]
        %v2846 = vld [vmem:[%s2832 + $0x50] sm:$0xf]
        %v2847 = vld [vmem:[%s2832 + $0x54] sm:$0xff]
        %v2848 = vld [vmem:[%s2832 + $0x5c] sm:$0xf]
        %v2849 = vld [vmem:[%s2832 + $0x60] sm:$0xff]
        %v2850 = vld [vmem:[%s2832 + $0x68] sm:$0xf]
        %v2851 = vld [vmem:[%s2832 + $0x6c] sm:$0xff]
        %v2852 = vld [vmem:[%s2832 + $0x74] sm:$0xf]
        %v2853 = vld [vmem:[%s2832 + $0x78] sm:$0xff]
        %v2854 = vld [vmem:[%s2832 + $0x80] sm:$0xf]
        %v2855 = vld [vmem:[%s2832 + $0x84] sm:$0xff]
        %v2856 = vld [vmem:[%s2832 + $0x8c] sm:$0xf]
        %v2857 = vld [vmem:[%s2832 + $0x90] sm:$0xff]
        %v2858 = vld [vmem:[%s2832 + $0x98] sm:$0xf]
        %v2859 = vld [vmem:[%s2832 + $0x9c] sm:$0xff]
        %v2860 = vld [vmem:[%s2832 + $0xa4] sm:$0xf]
        %v2861 = vld [vmem:[%s2832 + $0xa8] sm:$0xff]
        %v2862 = vld [vmem:[%s2832 + $0xb0] sm:$0xf]
        %v2863 = vld [vmem:[%s2832 + $0xb4] sm:$0xff]
        %v2864 = vld [vmem:[%s2832 + $0xbc] sm:$0xf]
        %v2865 = vld [vmem:[%s2832 + $0xc0] sm:$0xff]
        %v2866 = vld [vmem:[%s2832 + $0xc8] sm:$0xf]
        %v2867 = vld [vmem:[%s2832 + $0xcc] sm:$0xff]
        %v2868 = vld [vmem:[%s2832 + $0xd4] sm:$0xf]
        %v2869 = vld [vmem:[%s2832 + $0xd8] sm:$0xff]
        %v2870 = vld [vmem:[%s2832 + $0xe0] sm:$0xf]
        %v2871 = vld [vmem:[%s2832 + $0xe4] sm:$0xff]
        %v2872 = vld [vmem:[%s2832 + $0xec] sm:$0xf]
        %v2873 = vld [vmem:[%s2832 + $0xf0] sm:$0xff]
        %v2874 = vld [vmem:[%s2832 + $0xf8] sm:$0xf]
        %v2875 = vld [vmem:[%s2832 + $0xfc] sm:$0xff]
        %v2876 = vld [vmem:[%s2832 + $0x104] sm:$0xf]
        %v2877 = vld [vmem:[%s2832 + $0x108] sm:$0xff]
        %v2878 = vld [vmem:[%s2832 + $0x110] sm:$0xf]
        %v2879 = vld [vmem:[%s2832 + $0x114] sm:$0xff]
        %v2880 = vld [vmem:[%s2832 + $0x11c] sm:$0xf]
        %v2881 = vld [vmem:[%s2832 + $0x120] sm:$0xff]
        %v2882 = vld [vmem:[%s2832 + $0x128] sm:$0xf]
        %v2883 = vld [vmem:[%s2832 + $0x12c] sm:$0xff]
        %v2884 = vld [vmem:[%s2832 + $0x134] sm:$0xf]
        %v2885 = vld [vmem:[%s2832 + $0x138] sm:$0xff]
        %v2886 = vld [vmem:[%s2832 + $0x140] sm:$0xf]
        %v2887 = vld [vmem:[%s2832 + $0x144] sm:$0xff]
        %v2888 = vld [vmem:[%s2832 + $0x14c] sm:$0xf]
        %v2889 = vld [vmem:[%s2832 + $0x150] sm:$0xff]
        %v2890 = vld [vmem:[%s2832 + $0x158] sm:$0xf]
        %v2891 = vld [vmem:[%s2832 + $0x15c] sm:$0xff]
        %v2892 = vld [vmem:[%s2832 + $0x164] sm:$0xf]
        %v2893 = vld [vmem:[%s2832 + $0x168] sm:$0xff]
        %v2894 = vld [vmem:[%s2832 + $0x170] sm:$0xf]
        %v2895 = vld [vmem:[%s2832 + $0x174] sm:$0xff]
        %v2896 = vld [vmem:[%s2832 + $0x17c] sm:$0xf]
        %s2897 = scalar_lea.vmem [#allocation7], 384
        %v2898 = vld [vmem:[%s2897] sm:$0xf]
        %v2899 = vld [vmem:[%s2897 + $0x4] sm:$0xf]
        %v2900 = vld [vmem:[%s2897 + $0x8] sm:$0xf]
        %v2901 = vld [vmem:[%s2897 + $0xc] sm:$0xf]
        %v2902 = vld [vmem:[%s2897 + $0x10] sm:$0xf]
        %v2903 = vld [vmem:[%s2897 + $0x14] sm:$0xf]
        %v2904 = vld [vmem:[%s2897 + $0x18] sm:$0xf]
        %v2905 = vld [vmem:[%s2897 + $0x1c] sm:$0xf]
        %v2906 = vld [vmem:[%s2897 + $0x20] sm:$0xf]
        %v2907 = vld [vmem:[%s2897 + $0x24] sm:$0xf]
        %v2908 = vld [vmem:[%s2897 + $0x28] sm:$0xf]
        %v2909 = vld [vmem:[%s2897 + $0x2c] sm:$0xf]
        %v2910 = vld [vmem:[%s2897 + $0x30] sm:$0xf]
        %v2911 = vld [vmem:[%s2897 + $0x34] sm:$0xf]
        %v2912 = vld [vmem:[%s2897 + $0x38] sm:$0xf]
        %v2913 = vld [vmem:[%s2897 + $0x3c] sm:$0xf]
        %v2914 = vld [vmem:[%s2897 + $0x40] sm:$0xf]
        %v2915 = vld [vmem:[%s2897 + $0x44] sm:$0xf]
        %v2916 = vld [vmem:[%s2897 + $0x48] sm:$0xf]
        %v2917 = vld [vmem:[%s2897 + $0x4c] sm:$0xf]
        %v2918 = vld [vmem:[%s2897 + $0x50] sm:$0xf]
        %v2919 = vld [vmem:[%s2897 + $0x54] sm:$0xf]
        %v2920 = vld [vmem:[%s2897 + $0x58] sm:$0xf]
        %v2921 = vld [vmem:[%s2897 + $0x5c] sm:$0xf]
        %v2922 = vld [vmem:[%s2897 + $0x60] sm:$0xf]
        %v2923 = vld [vmem:[%s2897 + $0x64] sm:$0xf]
        %v2924 = vld [vmem:[%s2897 + $0x68] sm:$0xf]
        %v2925 = vld [vmem:[%s2897 + $0x6c] sm:$0xf]
        %v2926 = vld [vmem:[%s2897 + $0x70] sm:$0xf]
        %v2927 = vld [vmem:[%s2897 + $0x74] sm:$0xf]
        %v2928 = vld [vmem:[%s2897 + $0x78] sm:$0xf]
        %v2929 = vld [vmem:[%s2897 + $0x7c] sm:$0xf]
        %v2930 = vld [vmem:[%s2897 + $0x80] sm:$0xf]
        %v2931 = vld [vmem:[%s2897 + $0x84] sm:$0xf]
        %v2932 = vld [vmem:[%s2897 + $0x88] sm:$0xf]
        %v2933 = vld [vmem:[%s2897 + $0x8c] sm:$0xf]
        %v2934 = vld [vmem:[%s2897 + $0x90] sm:$0xf]
        %v2935 = vld [vmem:[%s2897 + $0x94] sm:$0xf]
        %v2936 = vld [vmem:[%s2897 + $0x98] sm:$0xf]
        %v2937 = vld [vmem:[%s2897 + $0x9c] sm:$0xf]
        %v2938 = vld [vmem:[%s2897 + $0xa0] sm:$0xf]
        %v2939 = vld [vmem:[%s2897 + $0xa4] sm:$0xf]
        %v2940 = vld [vmem:[%s2897 + $0xa8] sm:$0xf]
        %v2941 = vld [vmem:[%s2897 + $0xac] sm:$0xf]
        %v2942 = vld [vmem:[%s2897 + $0xb0] sm:$0xf]
        %v2943 = vld [vmem:[%s2897 + $0xb4] sm:$0xf]
        %v2944 = vld [vmem:[%s2897 + $0xb8] sm:$0xf]
        %v2945 = vld [vmem:[%s2897 + $0xbc] sm:$0xf]
        %v3010 = vunpack.c.l.b16 %v2833
        %v3011 = vunpack.c.h.b16 %v2833
        %v3012 = vunpack.c.l.b16 %v2834
        %v3013 = vunpack.c.l.b16 %v2835
        %v3014 = vunpack.c.h.b16 %v2835
        %v3015 = vunpack.c.l.b16 %v2836
        %v3016 = vunpack.c.l.b16 %v2837
        %v3017 = vunpack.c.h.b16 %v2837
        %v3018 = vunpack.c.l.b16 %v2838
        %v3019 = vunpack.c.l.b16 %v2839
        %v3020 = vunpack.c.h.b16 %v2839
        %v3021 = vunpack.c.l.b16 %v2840
        %v3022 = vunpack.c.l.b16 %v2841
        %v3023 = vunpack.c.h.b16 %v2841
        %v3024 = vunpack.c.l.b16 %v2842
        %v3025 = vunpack.c.l.b16 %v2843
        %v3026 = vunpack.c.h.b16 %v2843
        %v3027 = vunpack.c.l.b16 %v2844
        %v3028 = vunpack.c.l.b16 %v2845
        %v3029 = vunpack.c.h.b16 %v2845
        %v3030 = vunpack.c.l.b16 %v2846
        %v3031 = vunpack.c.l.b16 %v2847
        %v3032 = vunpack.c.h.b16 %v2847
        %v3033 = vunpack.c.l.b16 %v2848
        %v3034 = vunpack.c.l.b16 %v2849
        %v3035 = vunpack.c.h.b16 %v2849
        %v3036 = vunpack.c.l.b16 %v2850
        %v3037 = vunpack.c.l.b16 %v2851
        %v3038 = vunpack.c.h.b16 %v2851
        %v3039 = vunpack.c.l.b16 %v2852
        %v3040 = vunpack.c.l.b16 %v2853
        %v3041 = vunpack.c.h.b16 %v2853
        %v3042 = vunpack.c.l.b16 %v2854
        %v3043 = vunpack.c.l.b16 %v2855
        %v3044 = vunpack.c.h.b16 %v2855
        %v3045 = vunpack.c.l.b16 %v2856
        %v3046 = vunpack.c.l.b16 %v2857
        %v3047 = vunpack.c.h.b16 %v2857
        %v3048 = vunpack.c.l.b16 %v2858
        %v3049 = vunpack.c.l.b16 %v2859
        %v3050 = vunpack.c.h.b16 %v2859
        %v3051 = vunpack.c.l.b16 %v2860
        %v3052 = vunpack.c.l.b16 %v2861
        %v3053 = vunpack.c.h.b16 %v2861
        %v3054 = vunpack.c.l.b16 %v2862
        %v3055 = vunpack.c.l.b16 %v2863
        %v3056 = vunpack.c.h.b16 %v2863
        %v3057 = vunpack.c.l.b16 %v2864
        %v3058 = vunpack.c.l.b16 %v2865
        %v3059 = vunpack.c.h.b16 %v2865
        %v3060 = vunpack.c.l.b16 %v2866
        %v3061 = vunpack.c.l.b16 %v2867
        %v3062 = vunpack.c.h.b16 %v2867
        %v3063 = vunpack.c.l.b16 %v2868
        %v3064 = vunpack.c.l.b16 %v2869
        %v3065 = vunpack.c.h.b16 %v2869
        %v3066 = vunpack.c.l.b16 %v2870
        %v3067 = vunpack.c.l.b16 %v2871
        %v3068 = vunpack.c.h.b16 %v2871
        %v3069 = vunpack.c.l.b16 %v2872
        %v3070 = vunpack.c.l.b16 %v2873
        %v3071 = vunpack.c.h.b16 %v2873
        %v3072 = vunpack.c.l.b16 %v2874
        %v3073 = vunpack.c.l.b16 %v2875
        %v3074 = vunpack.c.h.b16 %v2875
        %v3075 = vunpack.c.l.b16 %v2876
        %v3076 = vunpack.c.l.b16 %v2877
        %v3077 = vunpack.c.h.b16 %v2877
        %v3078 = vunpack.c.l.b16 %v2878
        %v3079 = vunpack.c.l.b16 %v2879
        %v3080 = vunpack.c.h.b16 %v2879
        %v3081 = vunpack.c.l.b16 %v2880
        %v3082 = vunpack.c.l.b16 %v2881
        %v3083 = vunpack.c.h.b16 %v2881
        %v3084 = vunpack.c.l.b16 %v2882
        %v3085 = vunpack.c.l.b16 %v2883
        %v3086 = vunpack.c.h.b16 %v2883
        %v3087 = vunpack.c.l.b16 %v2884
        %v3088 = vunpack.c.l.b16 %v2885
        %v3089 = vunpack.c.h.b16 %v2885
        %v3090 = vunpack.c.l.b16 %v2886
        %v3091 = vunpack.c.l.b16 %v2887
        %v3092 = vunpack.c.h.b16 %v2887
        %v3093 = vunpack.c.l.b16 %v2888
        %v3094 = vunpack.c.l.b16 %v2889
        %v3095 = vunpack.c.h.b16 %v2889
        %v3096 = vunpack.c.l.b16 %v2890
        %v3097 = vunpack.c.l.b16 %v2891
        %v3098 = vunpack.c.h.b16 %v2891
        %v3099 = vunpack.c.l.b16 %v2892
        %v3100 = vunpack.c.l.b16 %v2893
        %v3101 = vunpack.c.h.b16 %v2893
        %v3102 = vunpack.c.l.b16 %v2894
        %v3103 = vunpack.c.l.b16 %v2895
        %v3104 = vunpack.c.h.b16 %v2895
        %v3105 = vunpack.c.l.b16 %v2896
        %v3106 = vpack.c.b16 %v3013, %v3010
        %v3107 = vpack.c.b16 %v3014, %v3011
        %v3108 = vpack.c.b16 %v3015, %v3012
        %v3109 = vpack.c.b16 %v3019, %v3016
        %v3110 = vpack.c.b16 %v3020, %v3017
        %v3111 = vpack.c.b16 %v3021, %v3018
        %v3112 = vpack.c.b16 %v3025, %v3022
        %v3113 = vpack.c.b16 %v3026, %v3023
        %v3114 = vpack.c.b16 %v3027, %v3024
        %v3115 = vpack.c.b16 %v3031, %v3028
        %v3116 = vpack.c.b16 %v3032, %v3029
        %v3117 = vpack.c.b16 %v3033, %v3030
        %v3118 = vpack.c.b16 %v3037, %v3034
        %v3119 = vpack.c.b16 %v3038, %v3035
        %v3120 = vpack.c.b16 %v3039, %v3036
        %v3121 = vpack.c.b16 %v3043, %v3040
        %v3122 = vpack.c.b16 %v3044, %v3041
        %v3123 = vpack.c.b16 %v3045, %v3042
        %v3124 = vpack.c.b16 %v3049, %v3046
        %v3125 = vpack.c.b16 %v3050, %v3047
        %v3126 = vpack.c.b16 %v3051, %v3048
        %v3127 = vpack.c.b16 %v3055, %v3052
        %v3128 = vpack.c.b16 %v3056, %v3053
        %v3129 = vpack.c.b16 %v3057, %v3054
        %v3130 = vpack.c.b16 %v3061, %v3058
        %v3131 = vpack.c.b16 %v3062, %v3059
        %v3132 = vpack.c.b16 %v3063, %v3060
        %v3133 = vpack.c.b16 %v3067, %v3064
        %v3134 = vpack.c.b16 %v3068, %v3065
        %v3135 = vpack.c.b16 %v3069, %v3066
        %v3136 = vpack.c.b16 %v3073, %v3070
        %v3137 = vpack.c.b16 %v3074, %v3071
        %v3138 = vpack.c.b16 %v3075, %v3072
        %v3139 = vpack.c.b16 %v3079, %v3076
        %v3140 = vpack.c.b16 %v3080, %v3077
        %v3141 = vpack.c.b16 %v3081, %v3078
        %v3142 = vpack.c.b16 %v3085, %v3082
        %v3143 = vpack.c.b16 %v3086, %v3083
        %v3144 = vpack.c.b16 %v3087, %v3084
        %v3145 = vpack.c.b16 %v3091, %v3088
        %v3146 = vpack.c.b16 %v3092, %v3089
        %v3147 = vpack.c.b16 %v3093, %v3090
        %v3148 = vpack.c.b16 %v3097, %v3094
        %v3149 = vpack.c.b16 %v3098, %v3095
        %v3150 = vpack.c.b16 %v3099, %v3096
        %v3151 = vpack.c.b16 %v3103, %v3100
        %v3152 = vpack.c.b16 %v3104, %v3101
        %v3153 = vpack.c.b16 %v3105, %v3102
        %v3250 = vunpack.c.l.b16 %v2898
        %v3251 = vunpack.c.l.b16 %v2899
        %v3252 = vunpack.c.l.b16 %v2900
        %v3253 = vunpack.c.l.b16 %v2901
        %v3254 = vunpack.c.l.b16 %v2902
        %v3255 = vunpack.c.l.b16 %v2903
        %v3256 = vunpack.c.l.b16 %v2904
        %v3257 = vunpack.c.l.b16 %v2905
        %v3258 = vunpack.c.l.b16 %v2906
        %v3259 = vunpack.c.l.b16 %v2907
        %v3260 = vunpack.c.l.b16 %v2908
        %v3261 = vunpack.c.l.b16 %v2909
        %v3262 = vunpack.c.l.b16 %v2910
        %v3263 = vunpack.c.l.b16 %v2911
        %v3264 = vunpack.c.l.b16 %v2912
        %v3265 = vunpack.c.l.b16 %v2913
        %v3266 = vunpack.c.l.b16 %v2914
        %v3267 = vunpack.c.l.b16 %v2915
        %v3268 = vunpack.c.l.b16 %v2916
        %v3269 = vunpack.c.l.b16 %v2917
        %v3270 = vunpack.c.l.b16 %v2918
        %v3271 = vunpack.c.l.b16 %v2919
        %v3272 = vunpack.c.l.b16 %v2920
        %v3273 = vunpack.c.l.b16 %v2921
        %v3274 = vunpack.c.l.b16 %v2922
        %v3275 = vunpack.c.l.b16 %v2923
        %v3276 = vunpack.c.l.b16 %v2924
        %v3277 = vunpack.c.l.b16 %v2925
        %v3278 = vunpack.c.l.b16 %v2926
        %v3279 = vunpack.c.l.b16 %v2927
        %v3280 = vunpack.c.l.b16 %v2928
        %v3281 = vunpack.c.l.b16 %v2929
        %v3282 = vunpack.c.l.b16 %v2930
        %v3283 = vunpack.c.l.b16 %v2931
        %v3284 = vunpack.c.l.b16 %v2932
        %v3285 = vunpack.c.l.b16 %v2933
        %v3286 = vunpack.c.l.b16 %v2934
        %v3287 = vunpack.c.l.b16 %v2935
        %v3288 = vunpack.c.l.b16 %v2936
        %v3289 = vunpack.c.l.b16 %v2937
        %v3290 = vunpack.c.l.b16 %v2938
        %v3291 = vunpack.c.l.b16 %v2939
        %v3292 = vunpack.c.l.b16 %v2940
        %v3293 = vunpack.c.l.b16 %v2941
        %v3294 = vunpack.c.l.b16 %v2942
        %v3295 = vunpack.c.l.b16 %v2943
        %v3296 = vunpack.c.l.b16 %v2944
        %v3297 = vunpack.c.l.b16 %v2945
        %v3298 = vpack.c.b16 %v3251, %v3250
        %v3299 = vpack.c.b16 %v3253, %v3252
        %v3300 = vpack.c.b16 %v3255, %v3254
        %v3301 = vpack.c.b16 %v3257, %v3256
        %v3302 = vpack.c.b16 %v3259, %v3258
        %v3303 = vpack.c.b16 %v3261, %v3260
        %v3304 = vpack.c.b16 %v3263, %v3262
        %v3305 = vpack.c.b16 %v3265, %v3264
        %v3306 = vpack.c.b16 %v3267, %v3266
        %v3307 = vpack.c.b16 %v3269, %v3268
        %v3308 = vpack.c.b16 %v3271, %v3270
        %v3309 = vpack.c.b16 %v3273, %v3272
        %v3310 = vpack.c.b16 %v3275, %v3274
        %v3311 = vpack.c.b16 %v3277, %v3276
        %v3312 = vpack.c.b16 %v3279, %v3278
        %v3313 = vpack.c.b16 %v3281, %v3280
        %v3314 = vpack.c.b16 %v3283, %v3282
        %v3315 = vpack.c.b16 %v3285, %v3284
        %v3316 = vpack.c.b16 %v3287, %v3286
        %v3317 = vpack.c.b16 %v3289, %v3288
        %v3318 = vpack.c.b16 %v3291, %v3290
        %v3319 = vpack.c.b16 %v3293, %v3292
        %v3320 = vpack.c.b16 %v3295, %v3294
        %v3321 = vpack.c.b16 %v3297, %v3296
        %3346 = vmatpush.bf16.msra.mxu0 %v3305
        %3347 = vmatpush.bf16.msra.mxu0 %v3304
        %3348 = vmatpush.bf16.msra.mxu0 %v3303
        %3349 = vmatpush.bf16.msra.mxu0 %v3302
        %3350 = vmatpush.bf16.msra.mxu0 %v3301
        %3351 = vmatpush.bf16.msra.mxu0 %v3300
        %3352 = vmatpush.bf16.msra.mxu0 %v3299
        %3353 = vmatpush.bf16.msra.mxu0 %v3298
        %3354 = vmatmul.bf16.gmra.mxu0 %v3106
        %v3355 = vpop.f32.mrf.mxu0
        %v3356 = vadd.f32 0.0, %v3355
        %v3357 = vpop.f32.mrf.mxu0
        %v3358 = vadd.f32 0.0, %v3357
        %3359 = vmatmul.bf16.gmra.mxu0 %v3109
        %v3360 = vpop.f32.mrf.mxu0
        %v3361 = vadd.f32 0.0, %v3360
        %v3362 = vpop.f32.mrf.mxu0
        %v3363 = vadd.f32 0.0, %v3362
        %3364 = vmatmul.bf16.gmra.mxu0 %v3112
        %v3365 = vpop.f32.mrf.mxu0
        %v3366 = vadd.f32 0.0, %v3365
        %v3367 = vpop.f32.mrf.mxu0
        %v3368 = vadd.f32 0.0, %v3367
        %3369 = vmatmul.bf16.gmra.mxu0 %v3115
        %v3370 = vpop.f32.mrf.mxu0
        %v3371 = vadd.f32 0.0, %v3370
        %v3372 = vpop.f32.mrf.mxu0
        %v3373 = vadd.f32 0.0, %v3372
        %3374 = vmatmul.bf16.gmra.mxu0 %v3118
        %v3375 = vpop.f32.mrf.mxu0
        %v3376 = vadd.f32 0.0, %v3375
        %v3377 = vpop.f32.mrf.mxu0
        %v3378 = vadd.f32 0.0, %v3377
        %3379 = vmatmul.bf16.gmra.mxu0 %v3121
        %v3380 = vpop.f32.mrf.mxu0
        %v3381 = vadd.f32 0.0, %v3380
        %v3382 = vpop.f32.mrf.mxu0
        %v3383 = vadd.f32 0.0, %v3382
        %3384 = vmatmul.bf16.gmra.mxu0 %v3124
        %v3385 = vpop.f32.mrf.mxu0
        %v3386 = vadd.f32 0.0, %v3385
        %v3387 = vpop.f32.mrf.mxu0
        %v3388 = vadd.f32 0.0, %v3387
        %3389 = vmatmul.bf16.gmra.mxu0 %v3127
        %v3390 = vpop.f32.mrf.mxu0
        %v3391 = vadd.f32 0.0, %v3390
        %v3392 = vpop.f32.mrf.mxu0
        %v3393 = vadd.f32 0.0, %v3392
        %3394 = vmatmul.bf16.gmra.mxu0 %v3130
        %v3395 = vpop.f32.mrf.mxu0
        %v3396 = vadd.f32 0.0, %v3395
        %v3397 = vpop.f32.mrf.mxu0
        %v3398 = vadd.f32 0.0, %v3397
        %3399 = vmatmul.bf16.gmra.mxu0 %v3133
        %v3400 = vpop.f32.mrf.mxu0
        %v3401 = vadd.f32 0.0, %v3400
        %v3402 = vpop.f32.mrf.mxu0
        %v3403 = vadd.f32 0.0, %v3402
        %3404 = vmatmul.bf16.gmra.mxu0 %v3136
        %v3405 = vpop.f32.mrf.mxu0
        %v3406 = vadd.f32 0.0, %v3405
        %v3407 = vpop.f32.mrf.mxu0
        %v3408 = vadd.f32 0.0, %v3407
        %3409 = vmatmul.bf16.gmra.mxu0 %v3139
        %v3410 = vpop.f32.mrf.mxu0
        %v3411 = vadd.f32 0.0, %v3410
        %v3412 = vpop.f32.mrf.mxu0
        %v3413 = vadd.f32 0.0, %v3412
        %3414 = vmatmul.bf16.gmra.mxu0 %v3142
        %v3415 = vpop.f32.mrf.mxu0
        %v3416 = vadd.f32 0.0, %v3415
        %v3417 = vpop.f32.mrf.mxu0
        %v3418 = vadd.f32 0.0, %v3417
        %3419 = vmatmul.bf16.gmra.mxu0 %v3145
        %v3420 = vpop.f32.mrf.mxu0
        %v3421 = vadd.f32 0.0, %v3420
        %v3422 = vpop.f32.mrf.mxu0
        %v3423 = vadd.f32 0.0, %v3422
        %3424 = vmatmul.bf16.gmra.mxu0 %v3148
        %v3425 = vpop.f32.mrf.mxu0
        %v3426 = vadd.f32 0.0, %v3425
        %v3427 = vpop.f32.mrf.mxu0
        %v3428 = vadd.f32 0.0, %v3427
        %3429 = vmatmul.bf16.gmra.mxu0 %v3151
        %v3430 = vpop.f32.mrf.mxu0
        %v3431 = vadd.f32 0.0, %v3430
        %v3432 = vpop.f32.mrf.mxu0
        %v3433 = vadd.f32 0.0, %v3432
        %3434 = vdwg.mxu0
        %3435 = vmatpush.bf16.msra.mxu0 %v3313
        %3436 = vmatpush.bf16.msra.mxu0 %v3312
        %3437 = vmatpush.bf16.msra.mxu0 %v3311
        %3438 = vmatpush.bf16.msra.mxu0 %v3310
        %3439 = vmatpush.bf16.msra.mxu0 %v3309
        %3440 = vmatpush.bf16.msra.mxu0 %v3308
        %3441 = vmatpush.bf16.msra.mxu0 %v3307
        %3442 = vmatpush.bf16.msra.mxu0 %v3306
        %3443 = vmatmul.bf16.gmra.mxu0 %v3107
        %v3444 = vpop.f32.mrf.mxu0
        %v3445 = vadd.f32 %v3356, %v3444
        %v3446 = vpop.f32.mrf.mxu0
        %v3447 = vadd.f32 %v3358, %v3446
        %3448 = vmatmul.bf16.gmra.mxu0 %v3110
        %v3449 = vpop.f32.mrf.mxu0
        %v3450 = vadd.f32 %v3361, %v3449
        %v3451 = vpop.f32.mrf.mxu0
        %v3452 = vadd.f32 %v3363, %v3451
        %3453 = vmatmul.bf16.gmra.mxu0 %v3113
        %v3454 = vpop.f32.mrf.mxu0
        %v3455 = vadd.f32 %v3366, %v3454
        %v3456 = vpop.f32.mrf.mxu0
        %v3457 = vadd.f32 %v3368, %v3456
        %3458 = vmatmul.bf16.gmra.mxu0 %v3116
        %v3459 = vpop.f32.mrf.mxu0
        %v3460 = vadd.f32 %v3371, %v3459
        %v3461 = vpop.f32.mrf.mxu0
        %v3462 = vadd.f32 %v3373, %v3461
        %3463 = vmatmul.bf16.gmra.mxu0 %v3119
        %v3464 = vpop.f32.mrf.mxu0
        %v3465 = vadd.f32 %v3376, %v3464
        %v3466 = vpop.f32.mrf.mxu0
        %v3467 = vadd.f32 %v3378, %v3466
        %3468 = vmatmul.bf16.gmra.mxu0 %v3122
        %v3469 = vpop.f32.mrf.mxu0
        %v3470 = vadd.f32 %v3381, %v3469
        %v3471 = vpop.f32.mrf.mxu0
        %v3472 = vadd.f32 %v3383, %v3471
        %3473 = vmatmul.bf16.gmra.mxu0 %v3125
        %v3474 = vpop.f32.mrf.mxu0
        %v3475 = vadd.f32 %v3386, %v3474
        %v3476 = vpop.f32.mrf.mxu0
        %v3477 = vadd.f32 %v3388, %v3476
        %3478 = vmatmul.bf16.gmra.mxu0 %v3128
        %v3479 = vpop.f32.mrf.mxu0
        %v3480 = vadd.f32 %v3391, %v3479
        %v3481 = vpop.f32.mrf.mxu0
        %v3482 = vadd.f32 %v3393, %v3481
        %3483 = vmatmul.bf16.gmra.mxu0 %v3131
        %v3484 = vpop.f32.mrf.mxu0
        %v3485 = vadd.f32 %v3396, %v3484
        %v3486 = vpop.f32.mrf.mxu0
        %v3487 = vadd.f32 %v3398, %v3486
        %3488 = vmatmul.bf16.gmra.mxu0 %v3134
        %v3489 = vpop.f32.mrf.mxu0
        %v3490 = vadd.f32 %v3401, %v3489
        %v3491 = vpop.f32.mrf.mxu0
        %v3492 = vadd.f32 %v3403, %v3491
        %3493 = vmatmul.bf16.gmra.mxu0 %v3137
        %v3494 = vpop.f32.mrf.mxu0
        %v3495 = vadd.f32 %v3406, %v3494
        %v3496 = vpop.f32.mrf.mxu0
        %v3497 = vadd.f32 %v3408, %v3496
        %3498 = vmatmul.bf16.gmra.mxu0 %v3140
        %v3499 = vpop.f32.mrf.mxu0
        %v3500 = vadd.f32 %v3411, %v3499
        %v3501 = vpop.f32.mrf.mxu0
        %v3502 = vadd.f32 %v3413, %v3501
        %3503 = vmatmul.bf16.gmra.mxu0 %v3143
        %v3504 = vpop.f32.mrf.mxu0
        %v3505 = vadd.f32 %v3416, %v3504
        %v3506 = vpop.f32.mrf.mxu0
        %v3507 = vadd.f32 %v3418, %v3506
        %3508 = vmatmul.bf16.gmra.mxu0 %v3146
        %v3509 = vpop.f32.mrf.mxu0
        %v3510 = vadd.f32 %v3421, %v3509
        %v3511 = vpop.f32.mrf.mxu0
        %v3512 = vadd.f32 %v3423, %v3511
        %3513 = vmatmul.bf16.gmra.mxu0 %v3149
        %v3514 = vpop.f32.mrf.mxu0
        %v3515 = vadd.f32 %v3426, %v3514
        %v3516 = vpop.f32.mrf.mxu0
        %v3517 = vadd.f32 %v3428, %v3516
        %3518 = vmatmul.bf16.gmra.mxu0 %v3152
        %v3519 = vpop.f32.mrf.mxu0
        %v3520 = vadd.f32 %v3431, %v3519
        %v3521 = vpop.f32.mrf.mxu0
        %v3522 = vadd.f32 %v3433, %v3521
        %3523 = vdwg.mxu0
        %3524 = vmatpush.bf16.msra.mxu0 %v3321
        %3525 = vmatpush.bf16.msra.mxu0 %v3320
        %3526 = vmatpush.bf16.msra.mxu0 %v3319
        %3527 = vmatpush.bf16.msra.mxu0 %v3318
        %3528 = vmatpush.bf16.msra.mxu0 %v3317
        %3529 = vmatpush.bf16.msra.mxu0 %v3316
        %3530 = vmatpush.bf16.msra.mxu0 %v3315
        %3531 = vmatpush.bf16.msra.mxu0 %v3314
        %3532 = vmatmul.bf16.gmra.mxu0 %v3108
        %v3533 = vpop.f32.mrf.mxu0
        %v3534 = vadd.f32 %v3445, %v3533
        %v3535 = vpop.f32.mrf.mxu0
        %v3536 = vadd.f32 %v3447, %v3535
        %3537 = vmatmul.bf16.gmra.mxu0 %v3111
        %v3538 = vpop.f32.mrf.mxu0
        %v3539 = vadd.f32 %v3450, %v3538
        %v3540 = vpop.f32.mrf.mxu0
        %v3541 = vadd.f32 %v3452, %v3540
        %3542 = vmatmul.bf16.gmra.mxu0 %v3114
        %v3543 = vpop.f32.mrf.mxu0
        %v3544 = vadd.f32 %v3455, %v3543
        %v3545 = vpop.f32.mrf.mxu0
        %v3546 = vadd.f32 %v3457, %v3545
        %3547 = vmatmul.bf16.gmra.mxu0 %v3117
        %v3548 = vpop.f32.mrf.mxu0
        %v3549 = vadd.f32 %v3460, %v3548
        %v3550 = vpop.f32.mrf.mxu0
        %v3551 = vadd.f32 %v3462, %v3550
        %3552 = vmatmul.bf16.gmra.mxu0 %v3120
        %v3553 = vpop.f32.mrf.mxu0
        %v3554 = vadd.f32 %v3465, %v3553
        %v3555 = vpop.f32.mrf.mxu0
        %v3556 = vadd.f32 %v3467, %v3555
        %3557 = vmatmul.bf16.gmra.mxu0 %v3123
        %v3558 = vpop.f32.mrf.mxu0
        %v3559 = vadd.f32 %v3470, %v3558
        %v3560 = vpop.f32.mrf.mxu0
        %v3561 = vadd.f32 %v3472, %v3560
        %3562 = vmatmul.bf16.gmra.mxu0 %v3126
        %v3563 = vpop.f32.mrf.mxu0
        %v3564 = vadd.f32 %v3475, %v3563
        %v3565 = vpop.f32.mrf.mxu0
        %v3566 = vadd.f32 %v3477, %v3565
        %3567 = vmatmul.bf16.gmra.mxu0 %v3129
        %v3568 = vpop.f32.mrf.mxu0
        %v3569 = vadd.f32 %v3480, %v3568
        %v3570 = vpop.f32.mrf.mxu0
        %v3571 = vadd.f32 %v3482, %v3570
        %3572 = vmatmul.bf16.gmra.mxu0 %v3132
        %v3573 = vpop.f32.mrf.mxu0
        %v3574 = vadd.f32 %v3485, %v3573
        %v3575 = vpop.f32.mrf.mxu0
        %v3576 = vadd.f32 %v3487, %v3575
        %3577 = vmatmul.bf16.gmra.mxu0 %v3135
        %v3578 = vpop.f32.mrf.mxu0
        %v3579 = vadd.f32 %v3490, %v3578
        %v3580 = vpop.f32.mrf.mxu0
        %v3581 = vadd.f32 %v3492, %v3580
        %3582 = vmatmul.bf16.gmra.mxu0 %v3138
        %v3583 = vpop.f32.mrf.mxu0
        %v3584 = vadd.f32 %v3495, %v3583
        %v3585 = vpop.f32.mrf.mxu0
        %v3586 = vadd.f32 %v3497, %v3585
        %3587 = vmatmul.bf16.gmra.mxu0 %v3141
        %v3588 = vpop.f32.mrf.mxu0
        %v3589 = vadd.f32 %v3500, %v3588
        %v3590 = vpop.f32.mrf.mxu0
        %v3591 = vadd.f32 %v3502, %v3590
        %3592 = vmatmul.bf16.gmra.mxu0 %v3144
        %v3593 = vpop.f32.mrf.mxu0
        %v3594 = vadd.f32 %v3505, %v3593
        %v3595 = vpop.f32.mrf.mxu0
        %v3596 = vadd.f32 %v3507, %v3595
        %3597 = vmatmul.bf16.gmra.mxu0 %v3147
        %v3598 = vpop.f32.mrf.mxu0
        %v3599 = vadd.f32 %v3510, %v3598
        %v3600 = vpop.f32.mrf.mxu0
        %v3601 = vadd.f32 %v3512, %v3600
        %3602 = vmatmul.bf16.gmra.mxu0 %v3150
        %v3603 = vpop.f32.mrf.mxu0
        %v3604 = vadd.f32 %v3515, %v3603
        %v3605 = vpop.f32.mrf.mxu0
        %v3606 = vadd.f32 %v3517, %v3605
        %3607 = vmatmul.bf16.gmra.mxu0 %v3153
        %v3608 = vpop.f32.mrf.mxu0
        %v3609 = vadd.f32 %v3520, %v3608
        %v3610 = vpop.f32.mrf.mxu0
        %v3611 = vadd.f32 %v3522, %v3610
        %3612 = vdwg.mxu0
        %v3613 = vadd.f32 %v2753, %v3534
        %v3614 = vadd.f32 %v2755, %v3536
        %v3615 = vadd.f32 %v2758, %v3539
        %v3616 = vadd.f32 %v2760, %v3541
        %v3617 = vadd.f32 %v2763, %v3544
        %v3618 = vadd.f32 %v2765, %v3546
        %v3619 = vadd.f32 %v2768, %v3549
        %v3620 = vadd.f32 %v2770, %v3551
        %v3621 = vadd.f32 %v2773, %v3554
        %v3622 = vadd.f32 %v2775, %v3556
        %v3623 = vadd.f32 %v2778, %v3559
        %v3624 = vadd.f32 %v2780, %v3561
        %v3625 = vadd.f32 %v2783, %v3564
        %v3626 = vadd.f32 %v2785, %v3566
        %v3627 = vadd.f32 %v2788, %v3569
        %v3628 = vadd.f32 %v2790, %v3571
        %v3629 = vadd.f32 %v2793, %v3574
        %v3630 = vadd.f32 %v2795, %v3576
        %v3631 = vadd.f32 %v2798, %v3579
        %v3632 = vadd.f32 %v2800, %v3581
        %v3633 = vadd.f32 %v2803, %v3584
        %v3634 = vadd.f32 %v2805, %v3586
        %v3635 = vadd.f32 %v2808, %v3589
        %v3636 = vadd.f32 %v2810, %v3591
        %v3637 = vadd.f32 %v2813, %v3594
        %v3638 = vadd.f32 %v2815, %v3596
        %v3639 = vadd.f32 %v2818, %v3599
        %v3640 = vadd.f32 %v2820, %v3601
        %v3641 = vadd.f32 %v2823, %v3604
        %v3642 = vadd.f32 %v2825, %v3606
        %v3643 = vadd.f32 %v2828, %v3609
        %v3644 = vadd.f32 %v2830, %v3611
        %v3646 = vperm.slane %v1271, 0
        %v3648 = vmul.f32 %v3613, %v3646
        %v3649 = vmul.f32 %v3614, %v3646
        %v3650 = vmul.f32 %v3615, %v3646
        %v3651 = vmul.f32 %v3616, %v3646
        %v3652 = vmul.f32 %v3617, %v3646
        %v3653 = vmul.f32 %v3618, %v3646
        %v3654 = vmul.f32 %v3619, %v3646
        %v3655 = vmul.f32 %v3620, %v3646
        %v3656 = vmul.f32 %v3621, %v3646
        %v3657 = vmul.f32 %v3622, %v3646
        %v3658 = vmul.f32 %v3623, %v3646
        %v3659 = vmul.f32 %v3624, %v3646
        %v3660 = vmul.f32 %v3625, %v3646
        %v3661 = vmul.f32 %v3626, %v3646
        %v3662 = vmul.f32 %v3627, %v3646
        %v3663 = vmul.f32 %v3628, %v3646
        %v3664 = vmul.f32 %v3629, %v3646
        %v3665 = vmul.f32 %v3630, %v3646
        %v3666 = vmul.f32 %v3631, %v3646
        %v3667 = vmul.f32 %v3632, %v3646
        %v3668 = vmul.f32 %v3633, %v3646
        %v3669 = vmul.f32 %v3634, %v3646
        %v3670 = vmul.f32 %v3635, %v3646
        %v3671 = vmul.f32 %v3636, %v3646
        %v3672 = vmul.f32 %v3637, %v3646
        %v3673 = vmul.f32 %v3638, %v3646
        %v3674 = vmul.f32 %v3639, %v3646
        %v3675 = vmul.f32 %v3640, %v3646
        %v3676 = vmul.f32 %v3641, %v3646
        %v3677 = vmul.f32 %v3642, %v3646
        %v3678 = vmul.f32 %v3643, %v3646
        %v3679 = vmul.f32 %v3644, %v3646
        %v3681 = vperm.slane %v1272, 0
        %v3683 = vadd.f32 %v3648, %v3681
        %v3684 = vadd.f32 %v3649, %v3681
        %v3685 = vadd.f32 %v3650, %v3681
        %v3686 = vadd.f32 %v3651, %v3681
        %v3687 = vadd.f32 %v3652, %v3681
        %v3688 = vadd.f32 %v3653, %v3681
        %v3689 = vadd.f32 %v3654, %v3681
        %v3690 = vadd.f32 %v3655, %v3681
        %v3691 = vadd.f32 %v3656, %v3681
        %v3692 = vadd.f32 %v3657, %v3681
        %v3693 = vadd.f32 %v3658, %v3681
        %v3694 = vadd.f32 %v3659, %v3681
        %v3695 = vadd.f32 %v3660, %v3681
        %v3696 = vadd.f32 %v3661, %v3681
        %v3697 = vadd.f32 %v3662, %v3681
        %v3698 = vadd.f32 %v3663, %v3681
        %v3699 = vadd.f32 %v3664, %v3681
        %v3700 = vadd.f32 %v3665, %v3681
        %v3701 = vadd.f32 %v3666, %v3681
        %v3702 = vadd.f32 %v3667, %v3681
        %v3703 = vadd.f32 %v3668, %v3681
        %v3704 = vadd.f32 %v3669, %v3681
        %v3705 = vadd.f32 %v3670, %v3681
        %v3706 = vadd.f32 %v3671, %v3681
        %v3707 = vadd.f32 %v3672, %v3681
        %v3708 = vadd.f32 %v3673, %v3681
        %v3709 = vadd.f32 %v3674, %v3681
        %v3710 = vadd.f32 %v3675, %v3681
        %v3711 = vadd.f32 %v3676, %v3681
        %v3712 = vadd.f32 %v3677, %v3681
        %v3713 = vadd.f32 %v3678, %v3681
        %v3714 = vadd.f32 %v3679, %v3681
        %v3715 = vmax.f32 %v3683, 0.0
        %v3716 = vmax.f32 %v3684, 0.0
        %v3717 = vmax.f32 %v3685, 0.0
        %v3718 = vmax.f32 %v3686, 0.0
        %v3719 = vmax.f32 %v3687, 0.0
        %v3720 = vmax.f32 %v3688, 0.0
        %v3721 = vmax.f32 %v3689, 0.0
        %v3722 = vmax.f32 %v3690, 0.0
        %v3723 = vmax.f32 %v3691, 0.0
        %v3724 = vmax.f32 %v3692, 0.0
        %v3725 = vmax.f32 %v3693, 0.0
        %v3726 = vmax.f32 %v3694, 0.0
        %v3727 = vmax.f32 %v3695, 0.0
        %v3728 = vmax.f32 %v3696, 0.0
        %v3729 = vmax.f32 %v3697, 0.0
        %v3730 = vmax.f32 %v3698, 0.0
        %v3731 = vmax.f32 %v3699, 0.0
        %v3732 = vmax.f32 %v3700, 0.0
        %v3733 = vmax.f32 %v3701, 0.0
        %v3734 = vmax.f32 %v3702, 0.0
        %v3735 = vmax.f32 %v3703, 0.0
        %v3736 = vmax.f32 %v3704, 0.0
        %v3737 = vmax.f32 %v3705, 0.0
        %v3738 = vmax.f32 %v3706, 0.0
        %v3739 = vmax.f32 %v3707, 0.0
        %v3740 = vmax.f32 %v3708, 0.0
        %v3741 = vmax.f32 %v3709, 0.0
        %v3742 = vmax.f32 %v3710, 0.0
        %v3743 = vmax.f32 %v3711, 0.0
        %v3744 = vmax.f32 %v3712, 0.0
        %v3745 = vmax.f32 %v3713, 0.0
        %v3746 = vmax.f32 %v3714, 0.0
        %v3747 = vpack.c.bf16 %v3715, %v3715
        %v3748 = vpack.c.bf16 %v3716, %v3716
        %v3749 = vpack.c.bf16 %v3717, %v3717
        %v3750 = vpack.c.bf16 %v3718, %v3718
        %v3751 = vpack.c.bf16 %v3719, %v3719
        %v3752 = vpack.c.bf16 %v3720, %v3720
        %v3753 = vpack.c.bf16 %v3721, %v3721
        %v3754 = vpack.c.bf16 %v3722, %v3722
        %v3755 = vpack.c.bf16 %v3723, %v3723
        %v3756 = vpack.c.bf16 %v3724, %v3724
        %v3757 = vpack.c.bf16 %v3725, %v3725
        %v3758 = vpack.c.bf16 %v3726, %v3726
        %v3759 = vpack.c.bf16 %v3727, %v3727
        %v3760 = vpack.c.bf16 %v3728, %v3728
        %v3761 = vpack.c.bf16 %v3729, %v3729
        %v3762 = vpack.c.bf16 %v3730, %v3730
        %v3763 = vpack.c.bf16 %v3731, %v3731
        %v3764 = vpack.c.bf16 %v3732, %v3732
        %v3765 = vpack.c.bf16 %v3733, %v3733
        %v3766 = vpack.c.bf16 %v3734, %v3734
        %v3767 = vpack.c.bf16 %v3735, %v3735
        %v3768 = vpack.c.bf16 %v3736, %v3736
        %v3769 = vpack.c.bf16 %v3737, %v3737
        %v3770 = vpack.c.bf16 %v3738, %v3738
        %v3771 = vpack.c.bf16 %v3739, %v3739
        %v3772 = vpack.c.bf16 %v3740, %v3740
        %v3773 = vpack.c.bf16 %v3741, %v3741
        %v3774 = vpack.c.bf16 %v3742, %v3742
        %v3775 = vpack.c.bf16 %v3743, %v3743
        %v3776 = vpack.c.bf16 %v3744, %v3744
        %v3777 = vpack.c.bf16 %v3745, %v3745
        %v3778 = vpack.c.bf16 %v3746, %v3746
        %s3779 = scalar_lea.vmem [#allocation3], 24
        %3780 = vst [vmem:[%s3779 + $0x4] sm:$0xf] %v3747
        %3781 = vst [vmem:[%s3779 + $0x10] sm:$0xf] %v3748
        %3782 = vst [vmem:[%s3779 + $0x1c] sm:$0xf] %v3749
        %3783 = vst [vmem:[%s3779 + $0x28] sm:$0xf] %v3750
        %3784 = vst [vmem:[%s3779 + $0x34] sm:$0xf] %v3751
        %3785 = vst [vmem:[%s3779 + $0x40] sm:$0xf] %v3752
        %3786 = vst [vmem:[%s3779 + $0x4c] sm:$0xf] %v3753
        %3787 = vst [vmem:[%s3779 + $0x58] sm:$0xf] %v3754
        %3788 = vst [vmem:[%s3779 + $0x64] sm:$0xf] %v3755
        %3789 = vst [vmem:[%s3779 + $0x70] sm:$0xf] %v3756
        %3790 = vst [vmem:[%s3779 + $0x7c] sm:$0xf] %v3757
        %3791 = vst [vmem:[%s3779 + $0x88] sm:$0xf] %v3758
        %3792 = vst [vmem:[%s3779 + $0x94] sm:$0xf] %v3759
        %3793 = vst [vmem:[%s3779 + $0xa0] sm:$0xf] %v3760
        %3794 = vst [vmem:[%s3779 + $0xac] sm:$0xf] %v3761
        %3795 = vst [vmem:[%s3779 + $0xb8] sm:$0xf] %v3762
        %3796 = vst [vmem:[%s3779 + $0xc4] sm:$0xf] %v3763
        %3797 = vst [vmem:[%s3779 + $0xd0] sm:$0xf] %v3764
        %3798 = vst [vmem:[%s3779 + $0xdc] sm:$0xf] %v3765
        %3799 = vst [vmem:[%s3779 + $0xe8] sm:$0xf] %v3766
        %3800 = vst [vmem:[%s3779 + $0xf4] sm:$0xf] %v3767
        %3801 = vst [vmem:[%s3779 + $0x100] sm:$0xf] %v3768
        %3802 = vst [vmem:[%s3779 + $0x10c] sm:$0xf] %v3769
        %3803 = vst [vmem:[%s3779 + $0x118] sm:$0xf] %v3770
        %3804 = vst [vmem:[%s3779 + $0x124] sm:$0xf] %v3771
        %3805 = vst [vmem:[%s3779 + $0x130] sm:$0xf] %v3772
        %3806 = vst [vmem:[%s3779 + $0x13c] sm:$0xf] %v3773
        %3807 = vst [vmem:[%s3779 + $0x148] sm:$0xf] %v3774
        %3808 = vst [vmem:[%s3779 + $0x154] sm:$0xf] %v3775
        %3809 = vst [vmem:[%s3779 + $0x160] sm:$0xf] %v3776
        %3810 = vst [vmem:[%s3779 + $0x16c] sm:$0xf] %v3777
        %3811 = vst [vmem:[%s3779 + $0x178] sm:$0xf] %v3778
        %v3813 = vshrl.u32 %v3747, 16
        %v3815 = vrot.slane %v3813, 7
        %v3816 = vshll.u32 %v3747, 16
        %v3818 = vor.u32 %v3815, %v3816
        %v3819 = vrot.slane %v3815, 4
        %v3821 = vshrl.u32 %v3748, 16
        %v3823 = vrot.slane %v3821, 7
        %v3824 = vshll.u32 %v3748, 16
        %v3826 = vor.u32 %v3823, %v3824
        %v3827 = vsel %vm671, %v3819, %v3826
        %v3829 = vshrl.u32 %v3749, 16
        %v3831 = vrot.slane %v3829, 7
        %v3832 = vshll.u32 %v3749, 16
        %v3834 = vor.u32 %v3831, %v3832
        %v3835 = vrot.slane %v3831, 4
        %v3837 = vshrl.u32 %v3750, 16
        %v3839 = vrot.slane %v3837, 7
        %v3840 = vshll.u32 %v3750, 16
        %v3842 = vor.u32 %v3839, %v3840
        %v3843 = vsel %vm671, %v3835, %v3842
        %v3845 = vshrl.u32 %v3751, 16
        %v3847 = vrot.slane %v3845, 7
        %v3848 = vshll.u32 %v3751, 16
        %v3850 = vor.u32 %v3847, %v3848
        %v3851 = vrot.slane %v3847, 4
        %v3853 = vshrl.u32 %v3752, 16
        %v3855 = vrot.slane %v3853, 7
        %v3856 = vshll.u32 %v3752, 16
        %v3858 = vor.u32 %v3855, %v3856
        %v3859 = vsel %vm671, %v3851, %v3858
        %v3861 = vshrl.u32 %v3753, 16
        %v3863 = vrot.slane %v3861, 7
        %v3864 = vshll.u32 %v3753, 16
        %v3866 = vor.u32 %v3863, %v3864
        %v3867 = vrot.slane %v3863, 4
        %v3869 = vshrl.u32 %v3754, 16
        %v3871 = vrot.slane %v3869, 7
        %v3872 = vshll.u32 %v3754, 16
        %v3874 = vor.u32 %v3871, %v3872
        %v3875 = vsel %vm671, %v3867, %v3874
        %v3877 = vshrl.u32 %v3755, 16
        %v3879 = vrot.slane %v3877, 7
        %v3880 = vshll.u32 %v3755, 16
        %v3882 = vor.u32 %v3879, %v3880
        %v3883 = vrot.slane %v3879, 4
        %v3885 = vshrl.u32 %v3756, 16
        %v3887 = vrot.slane %v3885, 7
        %v3888 = vshll.u32 %v3756, 16
        %v3890 = vor.u32 %v3887, %v3888
        %v3891 = vsel %vm671, %v3883, %v3890
        %v3893 = vshrl.u32 %v3757, 16
        %v3895 = vrot.slane %v3893, 7
        %v3896 = vshll.u32 %v3757, 16
        %v3898 = vor.u32 %v3895, %v3896
        %v3899 = vrot.slane %v3895, 4
        %v3901 = vshrl.u32 %v3758, 16
        %v3903 = vrot.slane %v3901, 7
        %v3904 = vshll.u32 %v3758, 16
        %v3906 = vor.u32 %v3903, %v3904
        %v3907 = vsel %vm671, %v3899, %v3906
        %v3909 = vshrl.u32 %v3759, 16
        %v3911 = vrot.slane %v3909, 7
        %v3912 = vshll.u32 %v3759, 16
        %v3914 = vor.u32 %v3911, %v3912
        %v3915 = vrot.slane %v3911, 4
        %v3917 = vshrl.u32 %v3760, 16
        %v3919 = vrot.slane %v3917, 7
        %v3920 = vshll.u32 %v3760, 16
        %v3922 = vor.u32 %v3919, %v3920
        %v3923 = vsel %vm671, %v3915, %v3922
        %v3925 = vshrl.u32 %v3761, 16
        %v3927 = vrot.slane %v3925, 7
        %v3928 = vshll.u32 %v3761, 16
        %v3930 = vor.u32 %v3927, %v3928
        %v3931 = vrot.slane %v3927, 4
        %v3933 = vshrl.u32 %v3762, 16
        %v3935 = vrot.slane %v3933, 7
        %v3936 = vshll.u32 %v3762, 16
        %v3938 = vor.u32 %v3935, %v3936
        %v3939 = vsel %vm671, %v3931, %v3938
        %v3941 = vshrl.u32 %v3763, 16
        %v3943 = vrot.slane %v3941, 7
        %v3944 = vshll.u32 %v3763, 16
        %v3946 = vor.u32 %v3943, %v3944
        %v3947 = vrot.slane %v3943, 4
        %v3949 = vshrl.u32 %v3764, 16
        %v3951 = vrot.slane %v3949, 7
        %v3952 = vshll.u32 %v3764, 16
        %v3954 = vor.u32 %v3951, %v3952
        %v3955 = vsel %vm671, %v3947, %v3954
        %v3957 = vshrl.u32 %v3765, 16
        %v3959 = vrot.slane %v3957, 7
        %v3960 = vshll.u32 %v3765, 16
        %v3962 = vor.u32 %v3959, %v3960
        %v3963 = vrot.slane %v3959, 4
        %v3965 = vshrl.u32 %v3766, 16
        %v3967 = vrot.slane %v3965, 7
        %v3968 = vshll.u32 %v3766, 16
        %v3970 = vor.u32 %v3967, %v3968
        %v3971 = vsel %vm671, %v3963, %v3970
        %v3973 = vshrl.u32 %v3767, 16
        %v3975 = vrot.slane %v3973, 7
        %v3976 = vshll.u32 %v3767, 16
        %v3978 = vor.u32 %v3975, %v3976
        %v3979 = vrot.slane %v3975, 4
        %v3981 = vshrl.u32 %v3768, 16
        %v3983 = vrot.slane %v3981, 7
        %v3984 = vshll.u32 %v3768, 16
        %v3986 = vor.u32 %v3983, %v3984
        %v3987 = vsel %vm671, %v3979, %v3986
        %v3989 = vshrl.u32 %v3769, 16
        %v3991 = vrot.slane %v3989, 7
        %v3992 = vshll.u32 %v3769, 16
        %v3994 = vor.u32 %v3991, %v3992
        %v3995 = vrot.slane %v3991, 4
        %v3997 = vshrl.u32 %v3770, 16
        %v3999 = vrot.slane %v3997, 7
        %v4000 = vshll.u32 %v3770, 16
        %v4002 = vor.u32 %v3999, %v4000
        %v4003 = vsel %vm671, %v3995, %v4002
        %v4005 = vshrl.u32 %v3771, 16
        %v4007 = vrot.slane %v4005, 7
        %v4008 = vshll.u32 %v3771, 16
        %v4010 = vor.u32 %v4007, %v4008
        %v4011 = vrot.slane %v4007, 4
        %v4013 = vshrl.u32 %v3772, 16
        %v4015 = vrot.slane %v4013, 7
        %v4016 = vshll.u32 %v3772, 16
        %v4018 = vor.u32 %v4015, %v4016
        %v4019 = vsel %vm671, %v4011, %v4018
        %v4021 = vshrl.u32 %v3773, 16
        %v4023 = vrot.slane %v4021, 7
        %v4024 = vshll.u32 %v3773, 16
        %v4026 = vor.u32 %v4023, %v4024
        %v4027 = vrot.slane %v4023, 4
        %v4029 = vshrl.u32 %v3774, 16
        %v4031 = vrot.slane %v4029, 7
        %v4032 = vshll.u32 %v3774, 16
        %v4034 = vor.u32 %v4031, %v4032
        %v4035 = vsel %vm671, %v4027, %v4034
        %v4037 = vshrl.u32 %v3775, 16
        %v4039 = vrot.slane %v4037, 7
        %v4040 = vshll.u32 %v3775, 16
        %v4042 = vor.u32 %v4039, %v4040
        %v4043 = vrot.slane %v4039, 4
        %v4045 = vshrl.u32 %v3776, 16
        %v4047 = vrot.slane %v4045, 7
        %v4048 = vshll.u32 %v3776, 16
        %v4050 = vor.u32 %v4047, %v4048
        %v4051 = vsel %vm671, %v4043, %v4050
        %v4053 = vshrl.u32 %v3777, 16
        %v4055 = vrot.slane %v4053, 7
        %v4056 = vshll.u32 %v3777, 16
        %v4058 = vor.u32 %v4055, %v4056
        %v4059 = vrot.slane %v4055, 4
        %v4061 = vshrl.u32 %v3778, 16
        %v4063 = vrot.slane %v4061, 7
        %v4064 = vshll.u32 %v3778, 16
        %v4066 = vor.u32 %v4063, %v4064
        %v4067 = vsel %vm671, %v4059, %v4066
        %v4100 = vld [vmem:[%s3779] sm:$0xf]
        %v4101 = vsel %vm962, %v3818, %v4100
        %4102 = vst [vmem:[%s3779] sm:$0xf] %v4101
        %4103 = vst [vmem:[%s3779 + $0xc] sm:$0xf] %v3827
        %v4104 = vld [vmem:[%s3779 + $0x18] sm:$0xf]
        %v4105 = vsel %vm962, %v3834, %v4104
        %4106 = vst [vmem:[%s3779 + $0x18] sm:$0xf] %v4105
        %4107 = vst [vmem:[%s3779 + $0x24] sm:$0xf] %v3843
        %v4108 = vld [vmem:[%s3779 + $0x30] sm:$0xf]
        %v4109 = vsel %vm962, %v3850, %v4108
        %4110 = vst [vmem:[%s3779 + $0x30] sm:$0xf] %v4109
        %4111 = vst [vmem:[%s3779 + $0x3c] sm:$0xf] %v3859
        %v4112 = vld [vmem:[%s3779 + $0x48] sm:$0xf]
        %v4113 = vsel %vm962, %v3866, %v4112
        %4114 = vst [vmem:[%s3779 + $0x48] sm:$0xf] %v4113
        %4115 = vst [vmem:[%s3779 + $0x54] sm:$0xf] %v3875
        %v4116 = vld [vmem:[%s3779 + $0x60] sm:$0xf]
        %v4117 = vsel %vm962, %v3882, %v4116
        %4118 = vst [vmem:[%s3779 + $0x60] sm:$0xf] %v4117
        %4119 = vst [vmem:[%s3779 + $0x6c] sm:$0xf] %v3891
        %v4120 = vld [vmem:[%s3779 + $0x78] sm:$0xf]
        %v4121 = vsel %vm962, %v3898, %v4120
        %4122 = vst [vmem:[%s3779 + $0x78] sm:$0xf] %v4121
        %4123 = vst [vmem:[%s3779 + $0x84] sm:$0xf] %v3907
        %v4124 = vld [vmem:[%s3779 + $0x90] sm:$0xf]
        %v4125 = vsel %vm962, %v3914, %v4124
        %4126 = vst [vmem:[%s3779 + $0x90] sm:$0xf] %v4125
        %4127 = vst [vmem:[%s3779 + $0x9c] sm:$0xf] %v3923
        %v4128 = vld [vmem:[%s3779 + $0xa8] sm:$0xf]
        %v4129 = vsel %vm962, %v3930, %v4128
        %4130 = vst [vmem:[%s3779 + $0xa8] sm:$0xf] %v4129
        %4131 = vst [vmem:[%s3779 + $0xb4] sm:$0xf] %v3939
        %v4132 = vld [vmem:[%s3779 + $0xc0] sm:$0xf]
        %v4133 = vsel %vm962, %v3946, %v4132
        %4134 = vst [vmem:[%s3779 + $0xc0] sm:$0xf] %v4133
        %4135 = vst [vmem:[%s3779 + $0xcc] sm:$0xf] %v3955
        %v4136 = vld [vmem:[%s3779 + $0xd8] sm:$0xf]
        %v4137 = vsel %vm962, %v3962, %v4136
        %4138 = vst [vmem:[%s3779 + $0xd8] sm:$0xf] %v4137
        %4139 = vst [vmem:[%s3779 + $0xe4] sm:$0xf] %v3971
        %v4140 = vld [vmem:[%s3779 + $0xf0] sm:$0xf]
        %v4141 = vsel %vm962, %v3978, %v4140
        %4142 = vst [vmem:[%s3779 + $0xf0] sm:$0xf] %v4141
        %4143 = vst [vmem:[%s3779 + $0xfc] sm:$0xf] %v3987
        %v4144 = vld [vmem:[%s3779 + $0x108] sm:$0xf]
        %v4145 = vsel %vm962, %v3994, %v4144
        %4146 = vst [vmem:[%s3779 + $0x108] sm:$0xf] %v4145
        %4147 = vst [vmem:[%s3779 + $0x114] sm:$0xf] %v4003
        %v4148 = vld [vmem:[%s3779 + $0x120] sm:$0xf]
        %v4149 = vsel %vm962, %v4010, %v4148
        %4150 = vst [vmem:[%s3779 + $0x120] sm:$0xf] %v4149
        %4151 = vst [vmem:[%s3779 + $0x12c] sm:$0xf] %v4019
        %v4152 = vld [vmem:[%s3779 + $0x138] sm:$0xf]
        %v4153 = vsel %vm962, %v4026, %v4152
        %4154 = vst [vmem:[%s3779 + $0x138] sm:$0xf] %v4153
        %4155 = vst [vmem:[%s3779 + $0x144] sm:$0xf] %v4035
        %v4156 = vld [vmem:[%s3779 + $0x150] sm:$0xf]
        %v4157 = vsel %vm962, %v4042, %v4156
        %4158 = vst [vmem:[%s3779 + $0x150] sm:$0xf] %v4157
        %4159 = vst [vmem:[%s3779 + $0x15c] sm:$0xf] %v4051
        %v4160 = vld [vmem:[%s3779 + $0x168] sm:$0xf]
        %v4161 = vsel %vm962, %v4058, %v4160
        %4162 = vst [vmem:[%s3779 + $0x168] sm:$0xf] %v4161
        %4163 = vst [vmem:[%s3779 + $0x174] sm:$0xf] %v4067
        %v4164 = vrot.slane %v3813, 4
        %v4165 = vrot.slane %v3816, 5
        %v4166 = vor.u32 %v4164, %v4165
        %v4167 = vrot.slane %v4166, 4
        %v4168 = vrot.slane %v3824, 5
        %v4169 = vsel %vm1029, %v4167, %v4168
        %v4170 = vrot.slane %v3821, 4
        %v4171 = vor.u32 %v4170, %v4168
        %v4172 = vrot.slane %v4171, 4
        %v4173 = vrot.slane %v3829, 4
        %v4174 = vrot.slane %v3832, 5
        %v4175 = vor.u32 %v4173, %v4174
        %v4176 = vrot.slane %v4175, 4
        %v4177 = vrot.slane %v3840, 5
        %v4178 = vsel %vm1029, %v4176, %v4177
        %v4179 = vrot.slane %v3837, 4
        %v4180 = vor.u32 %v4179, %v4177
        %v4181 = vrot.slane %v4180, 4
        %v4182 = vrot.slane %v3845, 4
        %v4183 = vrot.slane %v3848, 5
        %v4184 = vor.u32 %v4182, %v4183
        %v4185 = vrot.slane %v4184, 4
        %v4186 = vrot.slane %v3856, 5
        %v4187 = vsel %vm1029, %v4185, %v4186
        %v4188 = vrot.slane %v3853, 4
        %v4189 = vor.u32 %v4188, %v4186
        %v4190 = vrot.slane %v4189, 4
        %v4191 = vrot.slane %v3861, 4
        %v4192 = vrot.slane %v3864, 5
        %v4193 = vor.u32 %v4191, %v4192
        %v4194 = vrot.slane %v4193, 4
        %v4195 = vrot.slane %v3872, 5
        %v4196 = vsel %vm1029, %v4194, %v4195
        %v4197 = vrot.slane %v3869, 4
        %v4198 = vor.u32 %v4197, %v4195
        %v4199 = vrot.slane %v4198, 4
        %v4200 = vrot.slane %v3877, 4
        %v4201 = vrot.slane %v3880, 5
        %v4202 = vor.u32 %v4200, %v4201
        %v4203 = vrot.slane %v4202, 4
        %v4204 = vrot.slane %v3888, 5
        %v4205 = vsel %vm1029, %v4203, %v4204
        %v4206 = vrot.slane %v3885, 4
        %v4207 = vor.u32 %v4206, %v4204
        %v4208 = vrot.slane %v4207, 4
        %v4209 = vrot.slane %v3893, 4
        %v4210 = vrot.slane %v3896, 5
        %v4211 = vor.u32 %v4209, %v4210
        %v4212 = vrot.slane %v4211, 4
        %v4213 = vrot.slane %v3904, 5
        %v4214 = vsel %vm1029, %v4212, %v4213
        %v4215 = vrot.slane %v3901, 4
        %v4216 = vor.u32 %v4215, %v4213
        %v4217 = vrot.slane %v4216, 4
        %v4218 = vrot.slane %v3909, 4
        %v4219 = vrot.slane %v3912, 5
        %v4220 = vor.u32 %v4218, %v4219
        %v4221 = vrot.slane %v4220, 4
        %v4222 = vrot.slane %v3920, 5
        %v4223 = vsel %vm1029, %v4221, %v4222
        %v4224 = vrot.slane %v3917, 4
        %v4225 = vor.u32 %v4224, %v4222
        %v4226 = vrot.slane %v4225, 4
        %v4227 = vrot.slane %v3925, 4
        %v4228 = vrot.slane %v3928, 5
        %v4229 = vor.u32 %v4227, %v4228
        %v4230 = vrot.slane %v4229, 4
        %v4231 = vrot.slane %v3936, 5
        %v4232 = vsel %vm1029, %v4230, %v4231
        %v4233 = vrot.slane %v3933, 4
        %v4234 = vor.u32 %v4233, %v4231
        %v4235 = vrot.slane %v4234, 4
        %v4236 = vrot.slane %v3941, 4
        %v4237 = vrot.slane %v3944, 5
        %v4238 = vor.u32 %v4236, %v4237
        %v4239 = vrot.slane %v4238, 4
        %v4240 = vrot.slane %v3952, 5
        %v4241 = vsel %vm1029, %v4239, %v4240
        %v4242 = vrot.slane %v3949, 4
        %v4243 = vor.u32 %v4242, %v4240
        %v4244 = vrot.slane %v4243, 4
        %v4245 = vrot.slane %v3957, 4
        %v4246 = vrot.slane %v3960, 5
        %v4247 = vor.u32 %v4245, %v4246
        %v4248 = vrot.slane %v4247, 4
        %v4249 = vrot.slane %v3968, 5
        %v4250 = vsel %vm1029, %v4248, %v4249
        %v4251 = vrot.slane %v3965, 4
        %v4252 = vor.u32 %v4251, %v4249
        %v4253 = vrot.slane %v4252, 4
        %v4254 = vrot.slane %v3973, 4
        %v4255 = vrot.slane %v3976, 5
        %v4256 = vor.u32 %v4254, %v4255
        %v4257 = vrot.slane %v4256, 4
        %v4258 = vrot.slane %v3984, 5
        %v4259 = vsel %vm1029, %v4257, %v4258
        %v4260 = vrot.slane %v3981, 4
        %v4261 = vor.u32 %v4260, %v4258
        %v4262 = vrot.slane %v4261, 4
        %v4263 = vrot.slane %v3989, 4
        %v4264 = vrot.slane %v3992, 5
        %v4265 = vor.u32 %v4263, %v4264
        %v4266 = vrot.slane %v4265, 4
        %v4267 = vrot.slane %v4000, 5
        %v4268 = vsel %vm1029, %v4266, %v4267
        %v4269 = vrot.slane %v3997, 4
        %v4270 = vor.u32 %v4269, %v4267
        %v4271 = vrot.slane %v4270, 4
        %v4272 = vrot.slane %v4005, 4
        %v4273 = vrot.slane %v4008, 5
        %v4274 = vor.u32 %v4272, %v4273
        %v4275 = vrot.slane %v4274, 4
        %v4276 = vrot.slane %v4016, 5
        %v4277 = vsel %vm1029, %v4275, %v4276
        %v4278 = vrot.slane %v4013, 4
        %v4279 = vor.u32 %v4278, %v4276
        %v4280 = vrot.slane %v4279, 4
        %v4281 = vrot.slane %v4021, 4
        %v4282 = vrot.slane %v4024, 5
        %v4283 = vor.u32 %v4281, %v4282
        %v4284 = vrot.slane %v4283, 4
        %v4285 = vrot.slane %v4032, 5
        %v4286 = vsel %vm1029, %v4284, %v4285
        %v4287 = vrot.slane %v4029, 4
        %v4288 = vor.u32 %v4287, %v4285
        %v4289 = vrot.slane %v4288, 4
        %v4290 = vrot.slane %v4037, 4
        %v4291 = vrot.slane %v4040, 5
        %v4292 = vor.u32 %v4290, %v4291
        %v4293 = vrot.slane %v4292, 4
        %v4294 = vrot.slane %v4048, 5
        %v4295 = vsel %vm1029, %v4293, %v4294
        %v4296 = vrot.slane %v4045, 4
        %v4297 = vor.u32 %v4296, %v4294
        %v4298 = vrot.slane %v4297, 4
        %v4299 = vrot.slane %v4053, 4
        %v4300 = vrot.slane %v4056, 5
        %v4301 = vor.u32 %v4299, %v4300
        %v4302 = vrot.slane %v4301, 4
        %v4303 = vrot.slane %v4064, 5
        %v4304 = vsel %vm1029, %v4302, %v4303
        %v4305 = vrot.slane %v4061, 4
        %v4306 = vor.u32 %v4305, %v4303
        %v4307 = vrot.slane %v4306, 4
        %4340 = vst [vmem:[%s3779 + $0x8] sm:$0xf] %v4169
        %v4341 = vld [vmem:[%s3779 + $0x14] sm:$0xf]
        %v4342 = vsel %vm1207, %v4172, %v4341
        %4343 = vst [vmem:[%s3779 + $0x14] sm:$0xf] %v4342
        %4344 = vst [vmem:[%s3779 + $0x20] sm:$0xf] %v4178
        %v4345 = vld [vmem:[%s3779 + $0x2c] sm:$0xf]
        %v4346 = vsel %vm1207, %v4181, %v4345
        %4347 = vst [vmem:[%s3779 + $0x2c] sm:$0xf] %v4346
        %4348 = vst [vmem:[%s3779 + $0x38] sm:$0xf] %v4187
        %v4349 = vld [vmem:[%s3779 + $0x44] sm:$0xf]
        %v4350 = vsel %vm1207, %v4190, %v4349
        %4351 = vst [vmem:[%s3779 + $0x44] sm:$0xf] %v4350
        %4352 = vst [vmem:[%s3779 + $0x50] sm:$0xf] %v4196
        %v4353 = vld [vmem:[%s3779 + $0x5c] sm:$0xf]
        %v4354 = vsel %vm1207, %v4199, %v4353
        %4355 = vst [vmem:[%s3779 + $0x5c] sm:$0xf] %v4354
        %4356 = vst [vmem:[%s3779 + $0x68] sm:$0xf] %v4205
        %v4357 = vld [vmem:[%s3779 + $0x74] sm:$0xf]
        %v4358 = vsel %vm1207, %v4208, %v4357
        %4359 = vst [vmem:[%s3779 + $0x74] sm:$0xf] %v4358
        %4360 = vst [vmem:[%s3779 + $0x80] sm:$0xf] %v4214
        %v4361 = vld [vmem:[%s3779 + $0x8c] sm:$0xf]
        %v4362 = vsel %vm1207, %v4217, %v4361
        %4363 = vst [vmem:[%s3779 + $0x8c] sm:$0xf] %v4362
        %4364 = vst [vmem:[%s3779 + $0x98] sm:$0xf] %v4223
        %v4365 = vld [vmem:[%s3779 + $0xa4] sm:$0xf]
        %v4366 = vsel %vm1207, %v4226, %v4365
        %4367 = vst [vmem:[%s3779 + $0xa4] sm:$0xf] %v4366
        %4368 = vst [vmem:[%s3779 + $0xb0] sm:$0xf] %v4232
        %v4369 = vld [vmem:[%s3779 + $0xbc] sm:$0xf]
        %v4370 = vsel %vm1207, %v4235, %v4369
        %4371 = vst [vmem:[%s3779 + $0xbc] sm:$0xf] %v4370
        %4372 = vst [vmem:[%s3779 + $0xc8] sm:$0xf] %v4241
        %v4373 = vld [vmem:[%s3779 + $0xd4] sm:$0xf]
        %v4374 = vsel %vm1207, %v4244, %v4373
        %4375 = vst [vmem:[%s3779 + $0xd4] sm:$0xf] %v4374
        %4376 = vst [vmem:[%s3779 + $0xe0] sm:$0xf] %v4250
        %v4377 = vld [vmem:[%s3779 + $0xec] sm:$0xf]
        %v4378 = vsel %vm1207, %v4253, %v4377
        %4379 = vst [vmem:[%s3779 + $0xec] sm:$0xf] %v4378
        %4380 = vst [vmem:[%s3779 + $0xf8] sm:$0xf] %v4259
        %v4381 = vld [vmem:[%s3779 + $0x104] sm:$0xf]
        %v4382 = vsel %vm1207, %v4262, %v4381
        %4383 = vst [vmem:[%s3779 + $0x104] sm:$0xf] %v4382
        %4384 = vst [vmem:[%s3779 + $0x110] sm:$0xf] %v4268
        %v4385 = vld [vmem:[%s3779 + $0x11c] sm:$0xf]
        %v4386 = vsel %vm1207, %v4271, %v4385
        %4387 = vst [vmem:[%s3779 + $0x11c] sm:$0xf] %v4386
        %4388 = vst [vmem:[%s3779 + $0x128] sm:$0xf] %v4277
        %v4389 = vld [vmem:[%s3779 + $0x134] sm:$0xf]
        %v4390 = vsel %vm1207, %v4280, %v4389
        %4391 = vst [vmem:[%s3779 + $0x134] sm:$0xf] %v4390
        %4392 = vst [vmem:[%s3779 + $0x140] sm:$0xf] %v4286
        %v4393 = vld [vmem:[%s3779 + $0x14c] sm:$0xf]
        %v4394 = vsel %vm1207, %v4289, %v4393
        %4395 = vst [vmem:[%s3779 + $0x14c] sm:$0xf] %v4394
        %4396 = vst [vmem:[%s3779 + $0x158] sm:$0xf] %v4295
        %v4397 = vld [vmem:[%s3779 + $0x164] sm:$0xf]
        %v4398 = vsel %vm1207, %v4298, %v4397
        %4399 = vst [vmem:[%s3779 + $0x164] sm:$0xf] %v4398
        %4400 = vst [vmem:[%s3779 + $0x170] sm:$0xf] %v4304
        %v4401 = vld [vmem:[%s3779 + $0x17c] sm:$0xf]
        %v4402 = vsel %vm1207, %v4307, %v4401
        %4403 = vst [vmem:[%s3779 + $0x17c] sm:$0xf] %v4402
        %v4404 = vld [vmem:[%s5] sm:$0x1]
        %v4405 = vld [vmem:[%s6] sm:$0x1]
        %v4406 = vld [vmem:[#allocation3] sm:$0xff]
        %v4407 = vld [vmem:[#allocation3 + $0x8] sm:$0xf]
        %v4408 = vld [vmem:[#allocation3 + $0xc] sm:$0xff]
        %v4409 = vld [vmem:[#allocation3 + $0x14] sm:$0xf]
        %v4410 = vld [vmem:[#allocation3 + $0x18] sm:$0xff]
        %v4411 = vld [vmem:[#allocation3 + $0x20] sm:$0xf]
        %v4412 = vld [vmem:[#allocation3 + $0x24] sm:$0xff]
        %v4413 = vld [vmem:[#allocation3 + $0x2c] sm:$0xf]
        %v4414 = vld [vmem:[#allocation3 + $0x30] sm:$0xff]
        %v4415 = vld [vmem:[#allocation3 + $0x38] sm:$0xf]
        %v4416 = vld [vmem:[#allocation3 + $0x3c] sm:$0xff]
        %v4417 = vld [vmem:[#allocation3 + $0x44] sm:$0xf]
        %v4418 = vld [vmem:[#allocation3 + $0x48] sm:$0xff]
        %v4419 = vld [vmem:[#allocation3 + $0x50] sm:$0xf]
        %v4420 = vld [vmem:[#allocation3 + $0x54] sm:$0xff]
        %v4421 = vld [vmem:[#allocation3 + $0x5c] sm:$0xf]
        %v4422 = vld [vmem:[#allocation3 + $0x60] sm:$0xff]
        %v4423 = vld [vmem:[#allocation3 + $0x68] sm:$0xf]
        %v4424 = vld [vmem:[#allocation3 + $0x6c] sm:$0xff]
        %v4425 = vld [vmem:[#allocation3 + $0x74] sm:$0xf]
        %v4426 = vld [vmem:[#allocation3 + $0x78] sm:$0xff]
        %v4427 = vld [vmem:[#allocation3 + $0x80] sm:$0xf]
        %v4428 = vld [vmem:[#allocation3 + $0x84] sm:$0xff]
        %v4429 = vld [vmem:[#allocation3 + $0x8c] sm:$0xf]
        %v4430 = vld [vmem:[#allocation3 + $0x90] sm:$0xff]
        %v4431 = vld [vmem:[#allocation3 + $0x98] sm:$0xf]
        %v4432 = vld [vmem:[#allocation3 + $0x9c] sm:$0xff]
        %v4433 = vld [vmem:[#allocation3 + $0xa4] sm:$0xf]
        %v4434 = vld [vmem:[#allocation3 + $0xa8] sm:$0xff]
        %v4435 = vld [vmem:[#allocation3 + $0xb0] sm:$0xf]
        %v4436 = vld [vmem:[#allocation3 + $0xb4] sm:$0xff]
        %v4437 = vld [vmem:[#allocation3 + $0xbc] sm:$0xf]
        %v4438 = vld [vmem:[#allocation3 + $0xc0] sm:$0xff]
        %v4439 = vld [vmem:[#allocation3 + $0xc8] sm:$0xf]
        %v4440 = vld [vmem:[#allocation3 + $0xcc] sm:$0xff]
        %v4441 = vld [vmem:[#allocation3 + $0xd4] sm:$0xf]
        %v4442 = vld [vmem:[#allocation3 + $0xd8] sm:$0xff]
        %v4443 = vld [vmem:[#allocation3 + $0xe0] sm:$0xf]
        %v4444 = vld [vmem:[#allocation3 + $0xe4] sm:$0xff]
        %v4445 = vld [vmem:[#allocation3 + $0xec] sm:$0xf]
        %v4446 = vld [vmem:[#allocation3 + $0xf0] sm:$0xff]
        %v4447 = vld [vmem:[#allocation3 + $0xf8] sm:$0xf]
        %v4448 = vld [vmem:[#allocation3 + $0xfc] sm:$0xff]
        %v4449 = vld [vmem:[#allocation3 + $0x104] sm:$0xf]
        %v4450 = vld [vmem:[#allocation3 + $0x108] sm:$0xff]
        %v4451 = vld [vmem:[#allocation3 + $0x110] sm:$0xf]
        %v4452 = vld [vmem:[#allocation3 + $0x114] sm:$0xff]
        %v4453 = vld [vmem:[#allocation3 + $0x11c] sm:$0xf]
        %v4454 = vld [vmem:[#allocation3 + $0x120] sm:$0xff]
        %v4455 = vld [vmem:[#allocation3 + $0x128] sm:$0xf]
        %v4456 = vld [vmem:[#allocation3 + $0x12c] sm:$0xff]
        %v4457 = vld [vmem:[#allocation3 + $0x134] sm:$0xf]
        %v4458 = vld [vmem:[#allocation3 + $0x138] sm:$0xff]
        %v4459 = vld [vmem:[#allocation3 + $0x140] sm:$0xf]
        %v4460 = vld [vmem:[#allocation3 + $0x144] sm:$0xff]
        %v4461 = vld [vmem:[#allocation3 + $0x14c] sm:$0xf]
        %v4462 = vld [vmem:[#allocation3 + $0x150] sm:$0xff]
        %v4463 = vld [vmem:[#allocation3 + $0x158] sm:$0xf]
        %v4464 = vld [vmem:[#allocation3 + $0x15c] sm:$0xff]
        %v4465 = vld [vmem:[#allocation3 + $0x164] sm:$0xf]
        %v4466 = vld [vmem:[#allocation3 + $0x168] sm:$0xff]
        %v4467 = vld [vmem:[#allocation3 + $0x170] sm:$0xf]
        %v4468 = vld [vmem:[#allocation3 + $0x174] sm:$0xff]
        %v4469 = vld [vmem:[#allocation3 + $0x17c] sm:$0xf]
        %v4470 = vld [vmem:[#allocation9] sm:$0xf]
        %v4471 = vld [vmem:[#allocation9 + $0x4] sm:$0xf]
        %v4472 = vld [vmem:[#allocation9 + $0x8] sm:$0xf]
        %v4473 = vld [vmem:[#allocation9 + $0xc] sm:$0xf]
        %v4474 = vld [vmem:[#allocation9 + $0x10] sm:$0xf]
        %v4475 = vld [vmem:[#allocation9 + $0x14] sm:$0xf]
        %v4476 = vld [vmem:[#allocation9 + $0x18] sm:$0xf]
        %v4477 = vld [vmem:[#allocation9 + $0x1c] sm:$0xf]
        %v4478 = vld [vmem:[#allocation9 + $0x20] sm:$0xf]
        %v4479 = vld [vmem:[#allocation9 + $0x24] sm:$0xf]
        %v4480 = vld [vmem:[#allocation9 + $0x28] sm:$0xf]
        %v4481 = vld [vmem:[#allocation9 + $0x2c] sm:$0xf]
        %v4482 = vld [vmem:[#allocation9 + $0x30] sm:$0xf]
        %v4483 = vld [vmem:[#allocation9 + $0x34] sm:$0xf]
        %v4484 = vld [vmem:[#allocation9 + $0x38] sm:$0xf]
        %v4485 = vld [vmem:[#allocation9 + $0x3c] sm:$0xf]
        %v4486 = vld [vmem:[#allocation9 + $0x40] sm:$0xf]
        %v4487 = vld [vmem:[#allocation9 + $0x44] sm:$0xf]
        %v4488 = vld [vmem:[#allocation9 + $0x48] sm:$0xf]
        %v4489 = vld [vmem:[#allocation9 + $0x4c] sm:$0xf]
        %v4490 = vld [vmem:[#allocation9 + $0x50] sm:$0xf]
        %v4491 = vld [vmem:[#allocation9 + $0x54] sm:$0xf]
        %v4492 = vld [vmem:[#allocation9 + $0x58] sm:$0xf]
        %v4493 = vld [vmem:[#allocation9 + $0x5c] sm:$0xf]
        %v4494 = vld [vmem:[#allocation9 + $0x60] sm:$0xf]
        %v4495 = vld [vmem:[#allocation9 + $0x64] sm:$0xf]
        %v4496 = vld [vmem:[#allocation9 + $0x68] sm:$0xf]
        %v4497 = vld [vmem:[#allocation9 + $0x6c] sm:$0xf]
        %v4498 = vld [vmem:[#allocation9 + $0x70] sm:$0xf]
        %v4499 = vld [vmem:[#allocation9 + $0x74] sm:$0xf]
        %v4500 = vld [vmem:[#allocation9 + $0x78] sm:$0xf]
        %v4501 = vld [vmem:[#allocation9 + $0x7c] sm:$0xf]
        %v4502 = vld [vmem:[#allocation9 + $0x80] sm:$0xf]
        %v4503 = vld [vmem:[#allocation9 + $0x84] sm:$0xf]
        %v4504 = vld [vmem:[#allocation9 + $0x88] sm:$0xf]
        %v4505 = vld [vmem:[#allocation9 + $0x8c] sm:$0xf]
        %v4506 = vld [vmem:[#allocation9 + $0x90] sm:$0xf]
        %v4507 = vld [vmem:[#allocation9 + $0x94] sm:$0xf]
        %v4508 = vld [vmem:[#allocation9 + $0x98] sm:$0xf]
        %v4509 = vld [vmem:[#allocation9 + $0x9c] sm:$0xf]
        %v4510 = vld [vmem:[#allocation9 + $0xa0] sm:$0xf]
        %v4511 = vld [vmem:[#allocation9 + $0xa4] sm:$0xf]
        %v4512 = vld [vmem:[#allocation9 + $0xa8] sm:$0xf]
        %v4513 = vld [vmem:[#allocation9 + $0xac] sm:$0xf]
        %v4514 = vld [vmem:[#allocation9 + $0xb0] sm:$0xf]
        %v4515 = vld [vmem:[#allocation9 + $0xb4] sm:$0xf]
        %v4516 = vld [vmem:[#allocation9 + $0xb8] sm:$0xf]
        %v4517 = vld [vmem:[#allocation9 + $0xbc] sm:$0xf]
        %v4518 = vld [vmem:[%s3779] sm:$0xff]
        %v4519 = vld [vmem:[%s3779 + $0x8] sm:$0xf]
        %v4520 = vld [vmem:[%s3779 + $0xc] sm:$0xff]
        %v4521 = vld [vmem:[%s3779 + $0x14] sm:$0xf]
        %v4522 = vld [vmem:[%s3779 + $0x18] sm:$0xff]
        %v4523 = vld [vmem:[%s3779 + $0x20] sm:$0xf]
        %v4524 = vld [vmem:[%s3779 + $0x24] sm:$0xff]
        %v4525 = vld [vmem:[%s3779 + $0x2c] sm:$0xf]
        %v4526 = vld [vmem:[%s3779 + $0x30] sm:$0xff]
        %v4527 = vld [vmem:[%s3779 + $0x38] sm:$0xf]
        %v4528 = vld [vmem:[%s3779 + $0x3c] sm:$0xff]
        %v4529 = vld [vmem:[%s3779 + $0x44] sm:$0xf]
        %v4530 = vld [vmem:[%s3779 + $0x48] sm:$0xff]
        %v4531 = vld [vmem:[%s3779 + $0x50] sm:$0xf]
        %v4532 = vld [vmem:[%s3779 + $0x54] sm:$0xff]
        %v4533 = vld [vmem:[%s3779 + $0x5c] sm:$0xf]
        %v4534 = vld [vmem:[%s3779 + $0x60] sm:$0xff]
        %v4535 = vld [vmem:[%s3779 + $0x68] sm:$0xf]
        %v4536 = vld [vmem:[%s3779 + $0x6c] sm:$0xff]
        %v4537 = vld [vmem:[%s3779 + $0x74] sm:$0xf]
        %v4538 = vld [vmem:[%s3779 + $0x78] sm:$0xff]
        %v4539 = vld [vmem:[%s3779 + $0x80] sm:$0xf]
        %v4540 = vld [vmem:[%s3779 + $0x84] sm:$0xff]
        %v4541 = vld [vmem:[%s3779 + $0x8c] sm:$0xf]
        %v4542 = vld [vmem:[%s3779 + $0x90] sm:$0xff]
        %v4543 = vld [vmem:[%s3779 + $0x98] sm:$0xf]
        %v4544 = vld [vmem:[%s3779 + $0x9c] sm:$0xff]
        %v4545 = vld [vmem:[%s3779 + $0xa4] sm:$0xf]
        %v4546 = vld [vmem:[%s3779 + $0xa8] sm:$0xff]
        %v4547 = vld [vmem:[%s3779 + $0xb0] sm:$0xf]
        %v4548 = vld [vmem:[%s3779 + $0xb4] sm:$0xff]
        %v4549 = vld [vmem:[%s3779 + $0xbc] sm:$0xf]
        %v4550 = vld [vmem:[%s3779 + $0xc0] sm:$0xff]
        %v4551 = vld [vmem:[%s3779 + $0xc8] sm:$0xf]
        %v4552 = vld [vmem:[%s3779 + $0xcc] sm:$0xff]
        %v4553 = vld [vmem:[%s3779 + $0xd4] sm:$0xf]
        %v4554 = vld [vmem:[%s3779 + $0xd8] sm:$0xff]
        %v4555 = vld [vmem:[%s3779 + $0xe0] sm:$0xf]
        %v4556 = vld [vmem:[%s3779 + $0xe4] sm:$0xff]
        %v4557 = vld [vmem:[%s3779 + $0xec] sm:$0xf]
        %v4558 = vld [vmem:[%s3779 + $0xf0] sm:$0xff]
        %v4559 = vld [vmem:[%s3779 + $0xf8] sm:$0xf]
        %v4560 = vld [vmem:[%s3779 + $0xfc] sm:$0xff]
        %v4561 = vld [vmem:[%s3779 + $0x104] sm:$0xf]
        %v4562 = vld [vmem:[%s3779 + $0x108] sm:$0xff]
        %v4563 = vld [vmem:[%s3779 + $0x110] sm:$0xf]
        %v4564 = vld [vmem:[%s3779 + $0x114] sm:$0xff]
        %v4565 = vld [vmem:[%s3779 + $0x11c] sm:$0xf]
        %v4566 = vld [vmem:[%s3779 + $0x120] sm:$0xff]
        %v4567 = vld [vmem:[%s3779 + $0x128] sm:$0xf]
        %v4568 = vld [vmem:[%s3779 + $0x12c] sm:$0xff]
        %v4569 = vld [vmem:[%s3779 + $0x134] sm:$0xf]
        %v4570 = vld [vmem:[%s3779 + $0x138] sm:$0xff]
        %v4571 = vld [vmem:[%s3779 + $0x140] sm:$0xf]
        %v4572 = vld [vmem:[%s3779 + $0x144] sm:$0xff]
        %v4573 = vld [vmem:[%s3779 + $0x14c] sm:$0xf]
        %v4574 = vld [vmem:[%s3779 + $0x150] sm:$0xff]
        %v4575 = vld [vmem:[%s3779 + $0x158] sm:$0xf]
        %v4576 = vld [vmem:[%s3779 + $0x15c] sm:$0xff]
        %v4577 = vld [vmem:[%s3779 + $0x164] sm:$0xf]
        %v4578 = vld [vmem:[%s3779 + $0x168] sm:$0xff]
        %v4579 = vld [vmem:[%s3779 + $0x170] sm:$0xf]
        %v4580 = vld [vmem:[%s3779 + $0x174] sm:$0xff]
        %v4581 = vld [vmem:[%s3779 + $0x17c] sm:$0xf]
        %s4582 = scalar_lea.vmem [#allocation9], 192
        %v4583 = vld [vmem:[%s4582] sm:$0xf]
        %v4584 = vld [vmem:[%s4582 + $0x4] sm:$0xf]
        %v4585 = vld [vmem:[%s4582 + $0x8] sm:$0xf]
        %v4586 = vld [vmem:[%s4582 + $0xc] sm:$0xf]
        %v4587 = vld [vmem:[%s4582 + $0x10] sm:$0xf]
        %v4588 = vld [vmem:[%s4582 + $0x14] sm:$0xf]
        %v4589 = vld [vmem:[%s4582 + $0x18] sm:$0xf]
        %v4590 = vld [vmem:[%s4582 + $0x1c] sm:$0xf]
        %v4591 = vld [vmem:[%s4582 + $0x20] sm:$0xf]
        %v4592 = vld [vmem:[%s4582 + $0x24] sm:$0xf]
        %v4593 = vld [vmem:[%s4582 + $0x28] sm:$0xf]
        %v4594 = vld [vmem:[%s4582 + $0x2c] sm:$0xf]
        %v4595 = vld [vmem:[%s4582 + $0x30] sm:$0xf]
        %v4596 = vld [vmem:[%s4582 + $0x34] sm:$0xf]
        %v4597 = vld [vmem:[%s4582 + $0x38] sm:$0xf]
        %v4598 = vld [vmem:[%s4582 + $0x3c] sm:$0xf]
        %v4599 = vld [vmem:[%s4582 + $0x40] sm:$0xf]
        %v4600 = vld [vmem:[%s4582 + $0x44] sm:$0xf]
        %v4601 = vld [vmem:[%s4582 + $0x48] sm:$0xf]
        %v4602 = vld [vmem:[%s4582 + $0x4c] sm:$0xf]
        %v4603 = vld [vmem:[%s4582 + $0x50] sm:$0xf]
        %v4604 = vld [vmem:[%s4582 + $0x54] sm:$0xf]
        %v4605 = vld [vmem:[%s4582 + $0x58] sm:$0xf]
        %v4606 = vld [vmem:[%s4582 + $0x5c] sm:$0xf]
        %v4607 = vld [vmem:[%s4582 + $0x60] sm:$0xf]
        %v4608 = vld [vmem:[%s4582 + $0x64] sm:$0xf]
        %v4609 = vld [vmem:[%s4582 + $0x68] sm:$0xf]
        %v4610 = vld [vmem:[%s4582 + $0x6c] sm:$0xf]
        %v4611 = vld [vmem:[%s4582 + $0x70] sm:$0xf]
        %v4612 = vld [vmem:[%s4582 + $0x74] sm:$0xf]
        %v4613 = vld [vmem:[%s4582 + $0x78] sm:$0xf]
        %v4614 = vld [vmem:[%s4582 + $0x7c] sm:$0xf]
        %v4615 = vld [vmem:[%s4582 + $0x80] sm:$0xf]
        %v4616 = vld [vmem:[%s4582 + $0x84] sm:$0xf]
        %v4617 = vld [vmem:[%s4582 + $0x88] sm:$0xf]
        %v4618 = vld [vmem:[%s4582 + $0x8c] sm:$0xf]
        %v4619 = vld [vmem:[%s4582 + $0x90] sm:$0xf]
        %v4620 = vld [vmem:[%s4582 + $0x94] sm:$0xf]
        %v4621 = vld [vmem:[%s4582 + $0x98] sm:$0xf]
        %v4622 = vld [vmem:[%s4582 + $0x9c] sm:$0xf]
        %v4623 = vld [vmem:[%s4582 + $0xa0] sm:$0xf]
        %v4624 = vld [vmem:[%s4582 + $0xa4] sm:$0xf]
        %v4625 = vld [vmem:[%s4582 + $0xa8] sm:$0xf]
        %v4626 = vld [vmem:[%s4582 + $0xac] sm:$0xf]
        %v4627 = vld [vmem:[%s4582 + $0xb0] sm:$0xf]
        %v4628 = vld [vmem:[%s4582 + $0xb4] sm:$0xf]
        %v4629 = vld [vmem:[%s4582 + $0xb8] sm:$0xf]
        %v4630 = vld [vmem:[%s4582 + $0xbc] sm:$0xf]
        %v4695 = vunpack.c.l.b16 %v4518
        %v4696 = vunpack.c.h.b16 %v4518
        %v4697 = vunpack.c.l.b16 %v4519
        %v4698 = vunpack.c.l.b16 %v4520
        %v4699 = vunpack.c.h.b16 %v4520
        %v4700 = vunpack.c.l.b16 %v4521
        %v4701 = vunpack.c.l.b16 %v4522
        %v4702 = vunpack.c.h.b16 %v4522
        %v4703 = vunpack.c.l.b16 %v4523
        %v4704 = vunpack.c.l.b16 %v4524
        %v4705 = vunpack.c.h.b16 %v4524
        %v4706 = vunpack.c.l.b16 %v4525
        %v4707 = vunpack.c.l.b16 %v4526
        %v4708 = vunpack.c.h.b16 %v4526
        %v4709 = vunpack.c.l.b16 %v4527
        %v4710 = vunpack.c.l.b16 %v4528
        %v4711 = vunpack.c.h.b16 %v4528
        %v4712 = vunpack.c.l.b16 %v4529
        %v4713 = vunpack.c.l.b16 %v4530
        %v4714 = vunpack.c.h.b16 %v4530
        %v4715 = vunpack.c.l.b16 %v4531
        %v4716 = vunpack.c.l.b16 %v4532
        %v4717 = vunpack.c.h.b16 %v4532
        %v4718 = vunpack.c.l.b16 %v4533
        %v4719 = vunpack.c.l.b16 %v4534
        %v4720 = vunpack.c.h.b16 %v4534
        %v4721 = vunpack.c.l.b16 %v4535
        %v4722 = vunpack.c.l.b16 %v4536
        %v4723 = vunpack.c.h.b16 %v4536
        %v4724 = vunpack.c.l.b16 %v4537
        %v4725 = vunpack.c.l.b16 %v4538
        %v4726 = vunpack.c.h.b16 %v4538
        %v4727 = vunpack.c.l.b16 %v4539
        %v4728 = vunpack.c.l.b16 %v4540
        %v4729 = vunpack.c.h.b16 %v4540
        %v4730 = vunpack.c.l.b16 %v4541
        %v4731 = vunpack.c.l.b16 %v4542
        %v4732 = vunpack.c.h.b16 %v4542
        %v4733 = vunpack.c.l.b16 %v4543
        %v4734 = vunpack.c.l.b16 %v4544
        %v4735 = vunpack.c.h.b16 %v4544
        %v4736 = vunpack.c.l.b16 %v4545
        %v4737 = vunpack.c.l.b16 %v4546
        %v4738 = vunpack.c.h.b16 %v4546
        %v4739 = vunpack.c.l.b16 %v4547
        %v4740 = vunpack.c.l.b16 %v4548
        %v4741 = vunpack.c.h.b16 %v4548
        %v4742 = vunpack.c.l.b16 %v4549
        %v4743 = vunpack.c.l.b16 %v4550
        %v4744 = vunpack.c.h.b16 %v4550
        %v4745 = vunpack.c.l.b16 %v4551
        %v4746 = vunpack.c.l.b16 %v4552
        %v4747 = vunpack.c.h.b16 %v4552
        %v4748 = vunpack.c.l.b16 %v4553
        %v4749 = vunpack.c.l.b16 %v4554
        %v4750 = vunpack.c.h.b16 %v4554
        %v4751 = vunpack.c.l.b16 %v4555
        %v4752 = vunpack.c.l.b16 %v4556
        %v4753 = vunpack.c.h.b16 %v4556
        %v4754 = vunpack.c.l.b16 %v4557
        %v4755 = vunpack.c.l.b16 %v4558
        %v4756 = vunpack.c.h.b16 %v4558
        %v4757 = vunpack.c.l.b16 %v4559
        %v4758 = vunpack.c.l.b16 %v4560
        %v4759 = vunpack.c.h.b16 %v4560
        %v4760 = vunpack.c.l.b16 %v4561
        %v4761 = vunpack.c.l.b16 %v4562
        %v4762 = vunpack.c.h.b16 %v4562
        %v4763 = vunpack.c.l.b16 %v4563
        %v4764 = vunpack.c.l.b16 %v4564
        %v4765 = vunpack.c.h.b16 %v4564
        %v4766 = vunpack.c.l.b16 %v4565
        %v4767 = vunpack.c.l.b16 %v4566
        %v4768 = vunpack.c.h.b16 %v4566
        %v4769 = vunpack.c.l.b16 %v4567
        %v4770 = vunpack.c.l.b16 %v4568
        %v4771 = vunpack.c.h.b16 %v4568
        %v4772 = vunpack.c.l.b16 %v4569
        %v4773 = vunpack.c.l.b16 %v4570
        %v4774 = vunpack.c.h.b16 %v4570
        %v4775 = vunpack.c.l.b16 %v4571
        %v4776 = vunpack.c.l.b16 %v4572
        %v4777 = vunpack.c.h.b16 %v4572
        %v4778 = vunpack.c.l.b16 %v4573
        %v4779 = vunpack.c.l.b16 %v4574
        %v4780 = vunpack.c.h.b16 %v4574
        %v4781 = vunpack.c.l.b16 %v4575
        %v4782 = vunpack.c.l.b16 %v4576
        %v4783 = vunpack.c.h.b16 %v4576
        %v4784 = vunpack.c.l.b16 %v4577
        %v4785 = vunpack.c.l.b16 %v4578
        %v4786 = vunpack.c.h.b16 %v4578
        %v4787 = vunpack.c.l.b16 %v4579
        %v4788 = vunpack.c.l.b16 %v4580
        %v4789 = vunpack.c.h.b16 %v4580
        %v4790 = vunpack.c.l.b16 %v4581
        %v4791 = vpack.c.b16 %v4698, %v4695
        %v4792 = vpack.c.b16 %v4699, %v4696
        %v4793 = vpack.c.b16 %v4700, %v4697
        %v4794 = vpack.c.b16 %v4704, %v4701
        %v4795 = vpack.c.b16 %v4705, %v4702
        %v4796 = vpack.c.b16 %v4706, %v4703
        %v4797 = vpack.c.b16 %v4710, %v4707
        %v4798 = vpack.c.b16 %v4711, %v4708
        %v4799 = vpack.c.b16 %v4712, %v4709
        %v4800 = vpack.c.b16 %v4716, %v4713
        %v4801 = vpack.c.b16 %v4717, %v4714
        %v4802 = vpack.c.b16 %v4718, %v4715
        %v4803 = vpack.c.b16 %v4722, %v4719
        %v4804 = vpack.c.b16 %v4723, %v4720
        %v4805 = vpack.c.b16 %v4724, %v4721
        %v4806 = vpack.c.b16 %v4728, %v4725
        %v4807 = vpack.c.b16 %v4729, %v4726
        %v4808 = vpack.c.b16 %v4730, %v4727
        %v4809 = vpack.c.b16 %v4734, %v4731
        %v4810 = vpack.c.b16 %v4735, %v4732
        %v4811 = vpack.c.b16 %v4736, %v4733
        %v4812 = vpack.c.b16 %v4740, %v4737
        %v4813 = vpack.c.b16 %v4741, %v4738
        %v4814 = vpack.c.b16 %v4742, %v4739
        %v4815 = vpack.c.b16 %v4746, %v4743
        %v4816 = vpack.c.b16 %v4747, %v4744
        %v4817 = vpack.c.b16 %v4748, %v4745
        %v4818 = vpack.c.b16 %v4752, %v4749
        %v4819 = vpack.c.b16 %v4753, %v4750
        %v4820 = vpack.c.b16 %v4754, %v4751
        %v4821 = vpack.c.b16 %v4758, %v4755
        %v4822 = vpack.c.b16 %v4759, %v4756
        %v4823 = vpack.c.b16 %v4760, %v4757
        %v4824 = vpack.c.b16 %v4764, %v4761
        %v4825 = vpack.c.b16 %v4765, %v4762
        %v4826 = vpack.c.b16 %v4766, %v4763
        %v4827 = vpack.c.b16 %v4770, %v4767
        %v4828 = vpack.c.b16 %v4771, %v4768
        %v4829 = vpack.c.b16 %v4772, %v4769
        %v4830 = vpack.c.b16 %v4776, %v4773
        %v4831 = vpack.c.b16 %v4777, %v4774
        %v4832 = vpack.c.b16 %v4778, %v4775
        %v4833 = vpack.c.b16 %v4782, %v4779
        %v4834 = vpack.c.b16 %v4783, %v4780
        %v4835 = vpack.c.b16 %v4784, %v4781
        %v4836 = vpack.c.b16 %v4788, %v4785
        %v4837 = vpack.c.b16 %v4789, %v4786
        %v4838 = vpack.c.b16 %v4790, %v4787
        %v4935 = vunpack.c.l.b16 %v4583
        %v4936 = vunpack.c.l.b16 %v4584
        %v4937 = vunpack.c.l.b16 %v4585
        %v4938 = vunpack.c.l.b16 %v4586
        %v4939 = vunpack.c.l.b16 %v4587
        %v4940 = vunpack.c.l.b16 %v4588
        %v4941 = vunpack.c.l.b16 %v4589
        %v4942 = vunpack.c.l.b16 %v4590
        %v4943 = vunpack.c.l.b16 %v4591
        %v4944 = vunpack.c.l.b16 %v4592
        %v4945 = vunpack.c.l.b16 %v4593
        %v4946 = vunpack.c.l.b16 %v4594
        %v4947 = vunpack.c.l.b16 %v4595
        %v4948 = vunpack.c.l.b16 %v4596
        %v4949 = vunpack.c.l.b16 %v4597
        %v4950 = vunpack.c.l.b16 %v4598
        %v4951 = vunpack.c.l.b16 %v4599
        %v4952 = vunpack.c.l.b16 %v4600
        %v4953 = vunpack.c.l.b16 %v4601
        %v4954 = vunpack.c.l.b16 %v4602
        %v4955 = vunpack.c.l.b16 %v4603
        %v4956 = vunpack.c.l.b16 %v4604
        %v4957 = vunpack.c.l.b16 %v4605
        %v4958 = vunpack.c.l.b16 %v4606
        %v4959 = vunpack.c.l.b16 %v4607
        %v4960 = vunpack.c.l.b16 %v4608
        %v4961 = vunpack.c.l.b16 %v4609
        %v4962 = vunpack.c.l.b16 %v4610
        %v4963 = vunpack.c.l.b16 %v4611
        %v4964 = vunpack.c.l.b16 %v4612
        %v4965 = vunpack.c.l.b16 %v4613
        %v4966 = vunpack.c.l.b16 %v4614
        %v4967 = vunpack.c.l.b16 %v4615
        %v4968 = vunpack.c.l.b16 %v4616
        %v4969 = vunpack.c.l.b16 %v4617
        %v4970 = vunpack.c.l.b16 %v4618
        %v4971 = vunpack.c.l.b16 %v4619
        %v4972 = vunpack.c.l.b16 %v4620
        %v4973 = vunpack.c.l.b16 %v4621
        %v4974 = vunpack.c.l.b16 %v4622
        %v4975 = vunpack.c.l.b16 %v4623
        %v4976 = vunpack.c.l.b16 %v4624
        %v4977 = vunpack.c.l.b16 %v4625
        %v4978 = vunpack.c.l.b16 %v4626
        %v4979 = vunpack.c.l.b16 %v4627
        %v4980 = vunpack.c.l.b16 %v4628
        %v4981 = vunpack.c.l.b16 %v4629
        %v4982 = vunpack.c.l.b16 %v4630
        %v4983 = vpack.c.b16 %v4936, %v4935
        %v4984 = vpack.c.b16 %v4938, %v4937
        %v4985 = vpack.c.b16 %v4940, %v4939
        %v4986 = vpack.c.b16 %v4942, %v4941
        %v4987 = vpack.c.b16 %v4944, %v4943
        %v4988 = vpack.c.b16 %v4946, %v4945
        %v4989 = vpack.c.b16 %v4948, %v4947
        %v4990 = vpack.c.b16 %v4950, %v4949
        %v4991 = vpack.c.b16 %v4952, %v4951
        %v4992 = vpack.c.b16 %v4954, %v4953
        %v4993 = vpack.c.b16 %v4956, %v4955
        %v4994 = vpack.c.b16 %v4958, %v4957
        %v4995 = vpack.c.b16 %v4960, %v4959
        %v4996 = vpack.c.b16 %v4962, %v4961
        %v4997 = vpack.c.b16 %v4964, %v4963
        %v4998 = vpack.c.b16 %v4966, %v4965
        %v4999 = vpack.c.b16 %v4968, %v4967
        %v5000 = vpack.c.b16 %v4970, %v4969
        %v5001 = vpack.c.b16 %v4972, %v4971
        %v5002 = vpack.c.b16 %v4974, %v4973
        %v5003 = vpack.c.b16 %v4976, %v4975
        %v5004 = vpack.c.b16 %v4978, %v4977
        %v5005 = vpack.c.b16 %v4980, %v4979
        %v5006 = vpack.c.b16 %v4982, %v4981
        %5031 = vmatpush.bf16.msra.mxu0 %v4990
        %5032 = vmatpush.bf16.msra.mxu0 %v4989
        %5033 = vmatpush.bf16.msra.mxu0 %v4988
        %5034 = vmatpush.bf16.msra.mxu0 %v4987
        %5035 = vmatpush.bf16.msra.mxu0 %v4986
        %5036 = vmatpush.bf16.msra.mxu0 %v4985
        %5037 = vmatpush.bf16.msra.mxu0 %v4984
        %5038 = vmatpush.bf16.msra.mxu0 %v4983
        %5039 = vmatmul.bf16.gmra.mxu0 %v4791
        %v5040 = vpop.f32.mrf.mxu0
        %v5041 = vadd.f32 0.0, %v5040
        %v5042 = vpop.f32.mrf.mxu0
        %v5043 = vadd.f32 0.0, %v5042
        %5044 = vmatmul.bf16.gmra.mxu0 %v4794
        %v5045 = vpop.f32.mrf.mxu0
        %v5046 = vadd.f32 0.0, %v5045
        %v5047 = vpop.f32.mrf.mxu0
        %v5048 = vadd.f32 0.0, %v5047
        %5049 = vmatmul.bf16.gmra.mxu0 %v4797
        %v5050 = vpop.f32.mrf.mxu0
        %v5051 = vadd.f32 0.0, %v5050
        %v5052 = vpop.f32.mrf.mxu0
        %v5053 = vadd.f32 0.0, %v5052
        %5054 = vmatmul.bf16.gmra.mxu0 %v4800
        %v5055 = vpop.f32.mrf.mxu0
        %v5056 = vadd.f32 0.0, %v5055
        %v5057 = vpop.f32.mrf.mxu0
        %v5058 = vadd.f32 0.0, %v5057
        %5059 = vmatmul.bf16.gmra.mxu0 %v4803
        %v5060 = vpop.f32.mrf.mxu0
        %v5061 = vadd.f32 0.0, %v5060
        %v5062 = vpop.f32.mrf.mxu0
        %v5063 = vadd.f32 0.0, %v5062
        %5064 = vmatmul.bf16.gmra.mxu0 %v4806
        %v5065 = vpop.f32.mrf.mxu0
        %v5066 = vadd.f32 0.0, %v5065
        %v5067 = vpop.f32.mrf.mxu0
        %v5068 = vadd.f32 0.0, %v5067
        %5069 = vmatmul.bf16.gmra.mxu0 %v4809
        %v5070 = vpop.f32.mrf.mxu0
        %v5071 = vadd.f32 0.0, %v5070
        %v5072 = vpop.f32.mrf.mxu0
        %v5073 = vadd.f32 0.0, %v5072
        %5074 = vmatmul.bf16.gmra.mxu0 %v4812
        %v5075 = vpop.f32.mrf.mxu0
        %v5076 = vadd.f32 0.0, %v5075
        %v5077 = vpop.f32.mrf.mxu0
        %v5078 = vadd.f32 0.0, %v5077
        %5079 = vmatmul.bf16.gmra.mxu0 %v4815
        %v5080 = vpop.f32.mrf.mxu0
        %v5081 = vadd.f32 0.0, %v5080
        %v5082 = vpop.f32.mrf.mxu0
        %v5083 = vadd.f32 0.0, %v5082
        %5084 = vmatmul.bf16.gmra.mxu0 %v4818
        %v5085 = vpop.f32.mrf.mxu0
        %v5086 = vadd.f32 0.0, %v5085
        %v5087 = vpop.f32.mrf.mxu0
        %v5088 = vadd.f32 0.0, %v5087
        %5089 = vmatmul.bf16.gmra.mxu0 %v4821
        %v5090 = vpop.f32.mrf.mxu0
        %v5091 = vadd.f32 0.0, %v5090
        %v5092 = vpop.f32.mrf.mxu0
        %v5093 = vadd.f32 0.0, %v5092
        %5094 = vmatmul.bf16.gmra.mxu0 %v4824
        %v5095 = vpop.f32.mrf.mxu0
        %v5096 = vadd.f32 0.0, %v5095
        %v5097 = vpop.f32.mrf.mxu0
        %v5098 = vadd.f32 0.0, %v5097
        %5099 = vmatmul.bf16.gmra.mxu0 %v4827
        %v5100 = vpop.f32.mrf.mxu0
        %v5101 = vadd.f32 0.0, %v5100
        %v5102 = vpop.f32.mrf.mxu0
        %v5103 = vadd.f32 0.0, %v5102
        %5104 = vmatmul.bf16.gmra.mxu0 %v4830
        %v5105 = vpop.f32.mrf.mxu0
        %v5106 = vadd.f32 0.0, %v5105
        %v5107 = vpop.f32.mrf.mxu0
        %v5108 = vadd.f32 0.0, %v5107
        %5109 = vmatmul.bf16.gmra.mxu0 %v4833
        %v5110 = vpop.f32.mrf.mxu0
        %v5111 = vadd.f32 0.0, %v5110
        %v5112 = vpop.f32.mrf.mxu0
        %v5113 = vadd.f32 0.0, %v5112
        %5114 = vmatmul.bf16.gmra.mxu0 %v4836
        %v5115 = vpop.f32.mrf.mxu0
        %v5116 = vadd.f32 0.0, %v5115
        %v5117 = vpop.f32.mrf.mxu0
        %v5118 = vadd.f32 0.0, %v5117
        %5119 = vdwg.mxu0
        %5120 = vmatpush.bf16.msra.mxu0 %v4998
        %5121 = vmatpush.bf16.msra.mxu0 %v4997
        %5122 = vmatpush.bf16.msra.mxu0 %v4996
        %5123 = vmatpush.bf16.msra.mxu0 %v4995
        %5124 = vmatpush.bf16.msra.mxu0 %v4994
        %5125 = vmatpush.bf16.msra.mxu0 %v4993
        %5126 = vmatpush.bf16.msra.mxu0 %v4992
        %5127 = vmatpush.bf16.msra.mxu0 %v4991
        %5128 = vmatmul.bf16.gmra.mxu0 %v4792
        %v5129 = vpop.f32.mrf.mxu0
        %v5130 = vadd.f32 %v5041, %v5129
        %v5131 = vpop.f32.mrf.mxu0
        %v5132 = vadd.f32 %v5043, %v5131
        %5133 = vmatmul.bf16.gmra.mxu0 %v4795
        %v5134 = vpop.f32.mrf.mxu0
        %v5135 = vadd.f32 %v5046, %v5134
        %v5136 = vpop.f32.mrf.mxu0
        %v5137 = vadd.f32 %v5048, %v5136
        %5138 = vmatmul.bf16.gmra.mxu0 %v4798
        %v5139 = vpop.f32.mrf.mxu0
        %v5140 = vadd.f32 %v5051, %v5139
        %v5141 = vpop.f32.mrf.mxu0
        %v5142 = vadd.f32 %v5053, %v5141
        %5143 = vmatmul.bf16.gmra.mxu0 %v4801
        %v5144 = vpop.f32.mrf.mxu0
        %v5145 = vadd.f32 %v5056, %v5144
        %v5146 = vpop.f32.mrf.mxu0
        %v5147 = vadd.f32 %v5058, %v5146
        %5148 = vmatmul.bf16.gmra.mxu0 %v4804
        %v5149 = vpop.f32.mrf.mxu0
        %v5150 = vadd.f32 %v5061, %v5149
        %v5151 = vpop.f32.mrf.mxu0
        %v5152 = vadd.f32 %v5063, %v5151
        %5153 = vmatmul.bf16.gmra.mxu0 %v4807
        %v5154 = vpop.f32.mrf.mxu0
        %v5155 = vadd.f32 %v5066, %v5154
        %v5156 = vpop.f32.mrf.mxu0
        %v5157 = vadd.f32 %v5068, %v5156
        %5158 = vmatmul.bf16.gmra.mxu0 %v4810
        %v5159 = vpop.f32.mrf.mxu0
        %v5160 = vadd.f32 %v5071, %v5159
        %v5161 = vpop.f32.mrf.mxu0
        %v5162 = vadd.f32 %v5073, %v5161
        %5163 = vmatmul.bf16.gmra.mxu0 %v4813
        %v5164 = vpop.f32.mrf.mxu0
        %v5165 = vadd.f32 %v5076, %v5164
        %v5166 = vpop.f32.mrf.mxu0
        %v5167 = vadd.f32 %v5078, %v5166
        %5168 = vmatmul.bf16.gmra.mxu0 %v4816
        %v5169 = vpop.f32.mrf.mxu0
        %v5170 = vadd.f32 %v5081, %v5169
        %v5171 = vpop.f32.mrf.mxu0
        %v5172 = vadd.f32 %v5083, %v5171
        %5173 = vmatmul.bf16.gmra.mxu0 %v4819
        %v5174 = vpop.f32.mrf.mxu0
        %v5175 = vadd.f32 %v5086, %v5174
        %v5176 = vpop.f32.mrf.mxu0
        %v5177 = vadd.f32 %v5088, %v5176
        %5178 = vmatmul.bf16.gmra.mxu0 %v4822
        %v5179 = vpop.f32.mrf.mxu0
        %v5180 = vadd.f32 %v5091, %v5179
        %v5181 = vpop.f32.mrf.mxu0
        %v5182 = vadd.f32 %v5093, %v5181
        %5183 = vmatmul.bf16.gmra.mxu0 %v4825
        %v5184 = vpop.f32.mrf.mxu0
        %v5185 = vadd.f32 %v5096, %v5184
        %v5186 = vpop.f32.mrf.mxu0
        %v5187 = vadd.f32 %v5098, %v5186
        %5188 = vmatmul.bf16.gmra.mxu0 %v4828
        %v5189 = vpop.f32.mrf.mxu0
        %v5190 = vadd.f32 %v5101, %v5189
        %v5191 = vpop.f32.mrf.mxu0
        %v5192 = vadd.f32 %v5103, %v5191
        %5193 = vmatmul.bf16.gmra.mxu0 %v4831
        %v5194 = vpop.f32.mrf.mxu0
        %v5195 = vadd.f32 %v5106, %v5194
        %v5196 = vpop.f32.mrf.mxu0
        %v5197 = vadd.f32 %v5108, %v5196
        %5198 = vmatmul.bf16.gmra.mxu0 %v4834
        %v5199 = vpop.f32.mrf.mxu0
        %v5200 = vadd.f32 %v5111, %v5199
        %v5201 = vpop.f32.mrf.mxu0
        %v5202 = vadd.f32 %v5113, %v5201
        %5203 = vmatmul.bf16.gmra.mxu0 %v4837
        %v5204 = vpop.f32.mrf.mxu0
        %v5205 = vadd.f32 %v5116, %v5204
        %v5206 = vpop.f32.mrf.mxu0
        %v5207 = vadd.f32 %v5118, %v5206
        %5208 = vdwg.mxu0
        %5209 = vmatpush.bf16.msra.mxu0 %v5006
        %5210 = vmatpush.bf16.msra.mxu0 %v5005
        %5211 = vmatpush.bf16.msra.mxu0 %v5004
        %5212 = vmatpush.bf16.msra.mxu0 %v5003
        %5213 = vmatpush.bf16.msra.mxu0 %v5002
        %5214 = vmatpush.bf16.msra.mxu0 %v5001
        %5215 = vmatpush.bf16.msra.mxu0 %v5000
        %5216 = vmatpush.bf16.msra.mxu0 %v4999
        %5217 = vmatmul.bf16.gmra.mxu0 %v4793
        %v5218 = vpop.f32.mrf.mxu0
        %v5219 = vadd.f32 %v5130, %v5218
        %v5220 = vpop.f32.mrf.mxu0
        %v5221 = vadd.f32 %v5132, %v5220
        %5222 = vmatmul.bf16.gmra.mxu0 %v4796
        %v5223 = vpop.f32.mrf.mxu0
        %v5224 = vadd.f32 %v5135, %v5223
        %v5225 = vpop.f32.mrf.mxu0
        %v5226 = vadd.f32 %v5137, %v5225
        %5227 = vmatmul.bf16.gmra.mxu0 %v4799
        %v5228 = vpop.f32.mrf.mxu0
        %v5229 = vadd.f32 %v5140, %v5228
        %v5230 = vpop.f32.mrf.mxu0
        %v5231 = vadd.f32 %v5142, %v5230
        %5232 = vmatmul.bf16.gmra.mxu0 %v4802
        %v5233 = vpop.f32.mrf.mxu0
        %v5234 = vadd.f32 %v5145, %v5233
        %v5235 = vpop.f32.mrf.mxu0
        %v5236 = vadd.f32 %v5147, %v5235
        %5237 = vmatmul.bf16.gmra.mxu0 %v4805
        %v5238 = vpop.f32.mrf.mxu0
        %v5239 = vadd.f32 %v5150, %v5238
        %v5240 = vpop.f32.mrf.mxu0
        %v5241 = vadd.f32 %v5152, %v5240
        %5242 = vmatmul.bf16.gmra.mxu0 %v4808
        %v5243 = vpop.f32.mrf.mxu0
        %v5244 = vadd.f32 %v5155, %v5243
        %v5245 = vpop.f32.mrf.mxu0
        %v5246 = vadd.f32 %v5157, %v5245
        %5247 = vmatmul.bf16.gmra.mxu0 %v4811
        %v5248 = vpop.f32.mrf.mxu0
        %v5249 = vadd.f32 %v5160, %v5248
        %v5250 = vpop.f32.mrf.mxu0
        %v5251 = vadd.f32 %v5162, %v5250
        %5252 = vmatmul.bf16.gmra.mxu0 %v4814
        %v5253 = vpop.f32.mrf.mxu0
        %v5254 = vadd.f32 %v5165, %v5253
        %v5255 = vpop.f32.mrf.mxu0
        %v5256 = vadd.f32 %v5167, %v5255
        %5257 = vmatmul.bf16.gmra.mxu0 %v4817
        %v5258 = vpop.f32.mrf.mxu0
        %v5259 = vadd.f32 %v5170, %v5258
        %v5260 = vpop.f32.mrf.mxu0
        %v5261 = vadd.f32 %v5172, %v5260
        %5262 = vmatmul.bf16.gmra.mxu0 %v4820
        %v5263 = vpop.f32.mrf.mxu0
        %v5264 = vadd.f32 %v5175, %v5263
        %v5265 = vpop.f32.mrf.mxu0
        %v5266 = vadd.f32 %v5177, %v5265
        %5267 = vmatmul.bf16.gmra.mxu0 %v4823
        %v5268 = vpop.f32.mrf.mxu0
        %v5269 = vadd.f32 %v5180, %v5268
        %v5270 = vpop.f32.mrf.mxu0
        %v5271 = vadd.f32 %v5182, %v5270
        %5272 = vmatmul.bf16.gmra.mxu0 %v4826
        %v5273 = vpop.f32.mrf.mxu0
        %v5274 = vadd.f32 %v5185, %v5273
        %v5275 = vpop.f32.mrf.mxu0
        %v5276 = vadd.f32 %v5187, %v5275
        %5277 = vmatmul.bf16.gmra.mxu0 %v4829
        %v5278 = vpop.f32.mrf.mxu0
        %v5279 = vadd.f32 %v5190, %v5278
        %v5280 = vpop.f32.mrf.mxu0
        %v5281 = vadd.f32 %v5192, %v5280
        %5282 = vmatmul.bf16.gmra.mxu0 %v4832
        %v5283 = vpop.f32.mrf.mxu0
        %v5284 = vadd.f32 %v5195, %v5283
        %v5285 = vpop.f32.mrf.mxu0
        %v5286 = vadd.f32 %v5197, %v5285
        %5287 = vmatmul.bf16.gmra.mxu0 %v4835
        %v5288 = vpop.f32.mrf.mxu0
        %v5289 = vadd.f32 %v5200, %v5288
        %v5290 = vpop.f32.mrf.mxu0
        %v5291 = vadd.f32 %v5202, %v5290
        %5292 = vmatmul.bf16.gmra.mxu0 %v4838
        %v5293 = vpop.f32.mrf.mxu0
        %v5294 = vadd.f32 %v5205, %v5293
        %v5295 = vpop.f32.mrf.mxu0
        %v5296 = vadd.f32 %v5207, %v5295
        %5297 = vdwg.mxu0
        %v5362 = vunpack.c.l.b16 %v4406
        %v5363 = vunpack.c.h.b16 %v4406
        %v5364 = vunpack.c.l.b16 %v4407
        %v5365 = vunpack.c.l.b16 %v4408
        %v5366 = vunpack.c.h.b16 %v4408
        %v5367 = vunpack.c.l.b16 %v4409
        %v5368 = vunpack.c.l.b16 %v4410
        %v5369 = vunpack.c.h.b16 %v4410
        %v5370 = vunpack.c.l.b16 %v4411
        %v5371 = vunpack.c.l.b16 %v4412
        %v5372 = vunpack.c.h.b16 %v4412
        %v5373 = vunpack.c.l.b16 %v4413
        %v5374 = vunpack.c.l.b16 %v4414
        %v5375 = vunpack.c.h.b16 %v4414
        %v5376 = vunpack.c.l.b16 %v4415
        %v5377 = vunpack.c.l.b16 %v4416
        %v5378 = vunpack.c.h.b16 %v4416
        %v5379 = vunpack.c.l.b16 %v4417
        %v5380 = vunpack.c.l.b16 %v4418
        %v5381 = vunpack.c.h.b16 %v4418
        %v5382 = vunpack.c.l.b16 %v4419
        %v5383 = vunpack.c.l.b16 %v4420
        %v5384 = vunpack.c.h.b16 %v4420
        %v5385 = vunpack.c.l.b16 %v4421
        %v5386 = vunpack.c.l.b16 %v4422
        %v5387 = vunpack.c.h.b16 %v4422
        %v5388 = vunpack.c.l.b16 %v4423
        %v5389 = vunpack.c.l.b16 %v4424
        %v5390 = vunpack.c.h.b16 %v4424
        %v5391 = vunpack.c.l.b16 %v4425
        %v5392 = vunpack.c.l.b16 %v4426
        %v5393 = vunpack.c.h.b16 %v4426
        %v5394 = vunpack.c.l.b16 %v4427
        %v5395 = vunpack.c.l.b16 %v4428
        %v5396 = vunpack.c.h.b16 %v4428
        %v5397 = vunpack.c.l.b16 %v4429
        %v5398 = vunpack.c.l.b16 %v4430
        %v5399 = vunpack.c.h.b16 %v4430
        %v5400 = vunpack.c.l.b16 %v4431
        %v5401 = vunpack.c.l.b16 %v4432
        %v5402 = vunpack.c.h.b16 %v4432
        %v5403 = vunpack.c.l.b16 %v4433
        %v5404 = vunpack.c.l.b16 %v4434
        %v5405 = vunpack.c.h.b16 %v4434
        %v5406 = vunpack.c.l.b16 %v4435
        %v5407 = vunpack.c.l.b16 %v4436
        %v5408 = vunpack.c.h.b16 %v4436
        %v5409 = vunpack.c.l.b16 %v4437
        %v5410 = vunpack.c.l.b16 %v4438
        %v5411 = vunpack.c.h.b16 %v4438
        %v5412 = vunpack.c.l.b16 %v4439
        %v5413 = vunpack.c.l.b16 %v4440
        %v5414 = vunpack.c.h.b16 %v4440
        %v5415 = vunpack.c.l.b16 %v4441
        %v5416 = vunpack.c.l.b16 %v4442
        %v5417 = vunpack.c.h.b16 %v4442
        %v5418 = vunpack.c.l.b16 %v4443
        %v5419 = vunpack.c.l.b16 %v4444
        %v5420 = vunpack.c.h.b16 %v4444
        %v5421 = vunpack.c.l.b16 %v4445
        %v5422 = vunpack.c.l.b16 %v4446
        %v5423 = vunpack.c.h.b16 %v4446
        %v5424 = vunpack.c.l.b16 %v4447
        %v5425 = vunpack.c.l.b16 %v4448
        %v5426 = vunpack.c.h.b16 %v4448
        %v5427 = vunpack.c.l.b16 %v4449
        %v5428 = vunpack.c.l.b16 %v4450
        %v5429 = vunpack.c.h.b16 %v4450
        %v5430 = vunpack.c.l.b16 %v4451
        %v5431 = vunpack.c.l.b16 %v4452
        %v5432 = vunpack.c.h.b16 %v4452
        %v5433 = vunpack.c.l.b16 %v4453
        %v5434 = vunpack.c.l.b16 %v4454
        %v5435 = vunpack.c.h.b16 %v4454
        %v5436 = vunpack.c.l.b16 %v4455
        %v5437 = vunpack.c.l.b16 %v4456
        %v5438 = vunpack.c.h.b16 %v4456
        %v5439 = vunpack.c.l.b16 %v4457
        %v5440 = vunpack.c.l.b16 %v4458
        %v5441 = vunpack.c.h.b16 %v4458
        %v5442 = vunpack.c.l.b16 %v4459
        %v5443 = vunpack.c.l.b16 %v4460
        %v5444 = vunpack.c.h.b16 %v4460
        %v5445 = vunpack.c.l.b16 %v4461
        %v5446 = vunpack.c.l.b16 %v4462
        %v5447 = vunpack.c.h.b16 %v4462
        %v5448 = vunpack.c.l.b16 %v4463
        %v5449 = vunpack.c.l.b16 %v4464
        %v5450 = vunpack.c.h.b16 %v4464
        %v5451 = vunpack.c.l.b16 %v4465
        %v5452 = vunpack.c.l.b16 %v4466
        %v5453 = vunpack.c.h.b16 %v4466
        %v5454 = vunpack.c.l.b16 %v4467
        %v5455 = vunpack.c.l.b16 %v4468
        %v5456 = vunpack.c.h.b16 %v4468
        %v5457 = vunpack.c.l.b16 %v4469
        %v5458 = vpack.c.b16 %v5365, %v5362
        %v5459 = vpack.c.b16 %v5366, %v5363
        %v5460 = vpack.c.b16 %v5367, %v5364
        %v5461 = vpack.c.b16 %v5371, %v5368
        %v5462 = vpack.c.b16 %v5372, %v5369
        %v5463 = vpack.c.b16 %v5373, %v5370
        %v5464 = vpack.c.b16 %v5377, %v5374
        %v5465 = vpack.c.b16 %v5378, %v5375
        %v5466 = vpack.c.b16 %v5379, %v5376
        %v5467 = vpack.c.b16 %v5383, %v5380
        %v5468 = vpack.c.b16 %v5384, %v5381
        %v5469 = vpack.c.b16 %v5385, %v5382
        %v5470 = vpack.c.b16 %v5389, %v5386
        %v5471 = vpack.c.b16 %v5390, %v5387
        %v5472 = vpack.c.b16 %v5391, %v5388
        %v5473 = vpack.c.b16 %v5395, %v5392
        %v5474 = vpack.c.b16 %v5396, %v5393
        %v5475 = vpack.c.b16 %v5397, %v5394
        %v5476 = vpack.c.b16 %v5401, %v5398
        %v5477 = vpack.c.b16 %v5402, %v5399
        %v5478 = vpack.c.b16 %v5403, %v5400
        %v5479 = vpack.c.b16 %v5407, %v5404
        %v5480 = vpack.c.b16 %v5408, %v5405
        %v5481 = vpack.c.b16 %v5409, %v5406
        %v5482 = vpack.c.b16 %v5413, %v5410
        %v5483 = vpack.c.b16 %v5414, %v5411
        %v5484 = vpack.c.b16 %v5415, %v5412
        %v5485 = vpack.c.b16 %v5419, %v5416
        %v5486 = vpack.c.b16 %v5420, %v5417
        %v5487 = vpack.c.b16 %v5421, %v5418
        %v5488 = vpack.c.b16 %v5425, %v5422
        %v5489 = vpack.c.b16 %v5426, %v5423
        %v5490 = vpack.c.b16 %v5427, %v5424
        %v5491 = vpack.c.b16 %v5431, %v5428
        %v5492 = vpack.c.b16 %v5432, %v5429
        %v5493 = vpack.c.b16 %v5433, %v5430
        %v5494 = vpack.c.b16 %v5437, %v5434
        %v5495 = vpack.c.b16 %v5438, %v5435
        %v5496 = vpack.c.b16 %v5439, %v5436
        %v5497 = vpack.c.b16 %v5443, %v5440
        %v5498 = vpack.c.b16 %v5444, %v5441
        %v5499 = vpack.c.b16 %v5445, %v5442
        %v5500 = vpack.c.b16 %v5449, %v5446
        %v5501 = vpack.c.b16 %v5450, %v5447
        %v5502 = vpack.c.b16 %v5451, %v5448
        %v5503 = vpack.c.b16 %v5455, %v5452
        %v5504 = vpack.c.b16 %v5456, %v5453
        %v5505 = vpack.c.b16 %v5457, %v5454
        %v5602 = vunpack.c.l.b16 %v4470
        %v5603 = vunpack.c.l.b16 %v4471
        %v5604 = vunpack.c.l.b16 %v4472
        %v5605 = vunpack.c.l.b16 %v4473
        %v5606 = vunpack.c.l.b16 %v4474
        %v5607 = vunpack.c.l.b16 %v4475
        %v5608 = vunpack.c.l.b16 %v4476
        %v5609 = vunpack.c.l.b16 %v4477
        %v5610 = vunpack.c.l.b16 %v4478
        %v5611 = vunpack.c.l.b16 %v4479
        %v5612 = vunpack.c.l.b16 %v4480
        %v5613 = vunpack.c.l.b16 %v4481
        %v5614 = vunpack.c.l.b16 %v4482
        %v5615 = vunpack.c.l.b16 %v4483
        %v5616 = vunpack.c.l.b16 %v4484
        %v5617 = vunpack.c.l.b16 %v4485
        %v5618 = vunpack.c.l.b16 %v4486
        %v5619 = vunpack.c.l.b16 %v4487
        %v5620 = vunpack.c.l.b16 %v4488
        %v5621 = vunpack.c.l.b16 %v4489
        %v5622 = vunpack.c.l.b16 %v4490
        %v5623 = vunpack.c.l.b16 %v4491
        %v5624 = vunpack.c.l.b16 %v4492
        %v5625 = vunpack.c.l.b16 %v4493
        %v5626 = vunpack.c.l.b16 %v4494
        %v5627 = vunpack.c.l.b16 %v4495
        %v5628 = vunpack.c.l.b16 %v4496
        %v5629 = vunpack.c.l.b16 %v4497
        %v5630 = vunpack.c.l.b16 %v4498
        %v5631 = vunpack.c.l.b16 %v4499
        %v5632 = vunpack.c.l.b16 %v4500
        %v5633 = vunpack.c.l.b16 %v4501
        %v5634 = vunpack.c.l.b16 %v4502
        %v5635 = vunpack.c.l.b16 %v4503
        %v5636 = vunpack.c.l.b16 %v4504
        %v5637 = vunpack.c.l.b16 %v4505
        %v5638 = vunpack.c.l.b16 %v4506
        %v5639 = vunpack.c.l.b16 %v4507
        %v5640 = vunpack.c.l.b16 %v4508
        %v5641 = vunpack.c.l.b16 %v4509
        %v5642 = vunpack.c.l.b16 %v4510
        %v5643 = vunpack.c.l.b16 %v4511
        %v5644 = vunpack.c.l.b16 %v4512
        %v5645 = vunpack.c.l.b16 %v4513
        %v5646 = vunpack.c.l.b16 %v4514
        %v5647 = vunpack.c.l.b16 %v4515
        %v5648 = vunpack.c.l.b16 %v4516
        %v5649 = vunpack.c.l.b16 %v4517
        %v5650 = vpack.c.b16 %v5603, %v5602
        %v5651 = vpack.c.b16 %v5605, %v5604
        %v5652 = vpack.c.b16 %v5607, %v5606
        %v5653 = vpack.c.b16 %v5609, %v5608
        %v5654 = vpack.c.b16 %v5611, %v5610
        %v5655 = vpack.c.b16 %v5613, %v5612
        %v5656 = vpack.c.b16 %v5615, %v5614
        %v5657 = vpack.c.b16 %v5617, %v5616
        %v5658 = vpack.c.b16 %v5619, %v5618
        %v5659 = vpack.c.b16 %v5621, %v5620
        %v5660 = vpack.c.b16 %v5623, %v5622
        %v5661 = vpack.c.b16 %v5625, %v5624
        %v5662 = vpack.c.b16 %v5627, %v5626
        %v5663 = vpack.c.b16 %v5629, %v5628
        %v5664 = vpack.c.b16 %v5631, %v5630
        %v5665 = vpack.c.b16 %v5633, %v5632
        %v5666 = vpack.c.b16 %v5635, %v5634
        %v5667 = vpack.c.b16 %v5637, %v5636
        %v5668 = vpack.c.b16 %v5639, %v5638
        %v5669 = vpack.c.b16 %v5641, %v5640
        %v5670 = vpack.c.b16 %v5643, %v5642
        %v5671 = vpack.c.b16 %v5645, %v5644
        %v5672 = vpack.c.b16 %v5647, %v5646
        %v5673 = vpack.c.b16 %v5649, %v5648
        %5698 = vmatpush.bf16.msra.mxu0 %v5657
        %5699 = vmatpush.bf16.msra.mxu0 %v5656
        %5700 = vmatpush.bf16.msra.mxu0 %v5655
        %5701 = vmatpush.bf16.msra.mxu0 %v5654
        %5702 = vmatpush.bf16.msra.mxu0 %v5653
        %5703 = vmatpush.bf16.msra.mxu0 %v5652
        %5704 = vmatpush.bf16.msra.mxu0 %v5651
        %5705 = vmatpush.bf16.msra.mxu0 %v5650
        %5706 = vmatmul.bf16.gmra.mxu0 %v5458
        %v5707 = vpop.f32.mrf.mxu0
        %v5708 = vadd.f32 %v5219, %v5707
        %v5709 = vpop.f32.mrf.mxu0
        %v5710 = vadd.f32 %v5221, %v5709
        %5711 = vmatmul.bf16.gmra.mxu0 %v5461
        %v5712 = vpop.f32.mrf.mxu0
        %v5713 = vadd.f32 %v5224, %v5712
        %v5714 = vpop.f32.mrf.mxu0
        %v5715 = vadd.f32 %v5226, %v5714
        %5716 = vmatmul.bf16.gmra.mxu0 %v5464
        %v5717 = vpop.f32.mrf.mxu0
        %v5718 = vadd.f32 %v5229, %v5717
        %v5719 = vpop.f32.mrf.mxu0
        %v5720 = vadd.f32 %v5231, %v5719
        %5721 = vmatmul.bf16.gmra.mxu0 %v5467
        %v5722 = vpop.f32.mrf.mxu0
        %v5723 = vadd.f32 %v5234, %v5722
        %v5724 = vpop.f32.mrf.mxu0
        %v5725 = vadd.f32 %v5236, %v5724
        %5726 = vmatmul.bf16.gmra.mxu0 %v5470
        %v5727 = vpop.f32.mrf.mxu0
        %v5728 = vadd.f32 %v5239, %v5727
        %v5729 = vpop.f32.mrf.mxu0
        %v5730 = vadd.f32 %v5241, %v5729
        %5731 = vmatmul.bf16.gmra.mxu0 %v5473
        %v5732 = vpop.f32.mrf.mxu0
        %v5733 = vadd.f32 %v5244, %v5732
        %v5734 = vpop.f32.mrf.mxu0
        %v5735 = vadd.f32 %v5246, %v5734
        %5736 = vmatmul.bf16.gmra.mxu0 %v5476
        %v5737 = vpop.f32.mrf.mxu0
        %v5738 = vadd.f32 %v5249, %v5737
        %v5739 = vpop.f32.mrf.mxu0
        %v5740 = vadd.f32 %v5251, %v5739
        %5741 = vmatmul.bf16.gmra.mxu0 %v5479
        %v5742 = vpop.f32.mrf.mxu0
        %v5743 = vadd.f32 %v5254, %v5742
        %v5744 = vpop.f32.mrf.mxu0
        %v5745 = vadd.f32 %v5256, %v5744
        %5746 = vmatmul.bf16.gmra.mxu0 %v5482
        %v5747 = vpop.f32.mrf.mxu0
        %v5748 = vadd.f32 %v5259, %v5747
        %v5749 = vpop.f32.mrf.mxu0
        %v5750 = vadd.f32 %v5261, %v5749
        %5751 = vmatmul.bf16.gmra.mxu0 %v5485
        %v5752 = vpop.f32.mrf.mxu0
        %v5753 = vadd.f32 %v5264, %v5752
        %v5754 = vpop.f32.mrf.mxu0
        %v5755 = vadd.f32 %v5266, %v5754
        %5756 = vmatmul.bf16.gmra.mxu0 %v5488
        %v5757 = vpop.f32.mrf.mxu0
        %v5758 = vadd.f32 %v5269, %v5757
        %v5759 = vpop.f32.mrf.mxu0
        %v5760 = vadd.f32 %v5271, %v5759
        %5761 = vmatmul.bf16.gmra.mxu0 %v5491
        %v5762 = vpop.f32.mrf.mxu0
        %v5763 = vadd.f32 %v5274, %v5762
        %v5764 = vpop.f32.mrf.mxu0
        %v5765 = vadd.f32 %v5276, %v5764
        %5766 = vmatmul.bf16.gmra.mxu0 %v5494
        %v5767 = vpop.f32.mrf.mxu0
        %v5768 = vadd.f32 %v5279, %v5767
        %v5769 = vpop.f32.mrf.mxu0
        %v5770 = vadd.f32 %v5281, %v5769
        %5771 = vmatmul.bf16.gmra.mxu0 %v5497
        %v5772 = vpop.f32.mrf.mxu0
        %v5773 = vadd.f32 %v5284, %v5772
        %v5774 = vpop.f32.mrf.mxu0
        %v5775 = vadd.f32 %v5286, %v5774
        %5776 = vmatmul.bf16.gmra.mxu0 %v5500
        %v5777 = vpop.f32.mrf.mxu0
        %v5778 = vadd.f32 %v5289, %v5777
        %v5779 = vpop.f32.mrf.mxu0
        %v5780 = vadd.f32 %v5291, %v5779
        %5781 = vmatmul.bf16.gmra.mxu0 %v5503
        %v5782 = vpop.f32.mrf.mxu0
        %v5783 = vadd.f32 %v5294, %v5782
        %v5784 = vpop.f32.mrf.mxu0
        %v5785 = vadd.f32 %v5296, %v5784
        %5786 = vdwg.mxu0
        %5787 = vmatpush.bf16.msra.mxu0 %v5665
        %5788 = vmatpush.bf16.msra.mxu0 %v5664
        %5789 = vmatpush.bf16.msra.mxu0 %v5663
        %5790 = vmatpush.bf16.msra.mxu0 %v5662
        %5791 = vmatpush.bf16.msra.mxu0 %v5661
        %5792 = vmatpush.bf16.msra.mxu0 %v5660
        %5793 = vmatpush.bf16.msra.mxu0 %v5659
        %5794 = vmatpush.bf16.msra.mxu0 %v5658
        %5795 = vmatmul.bf16.gmra.mxu0 %v5459
        %v5796 = vpop.f32.mrf.mxu0
        %v5797 = vadd.f32 %v5708, %v5796
        %v5798 = vpop.f32.mrf.mxu0
        %v5799 = vadd.f32 %v5710, %v5798
        %5800 = vmatmul.bf16.gmra.mxu0 %v5462
        %v5801 = vpop.f32.mrf.mxu0
        %v5802 = vadd.f32 %v5713, %v5801
        %v5803 = vpop.f32.mrf.mxu0
        %v5804 = vadd.f32 %v5715, %v5803
        %5805 = vmatmul.bf16.gmra.mxu0 %v5465
        %v5806 = vpop.f32.mrf.mxu0
        %v5807 = vadd.f32 %v5718, %v5806
        %v5808 = vpop.f32.mrf.mxu0
        %v5809 = vadd.f32 %v5720, %v5808
        %5810 = vmatmul.bf16.gmra.mxu0 %v5468
        %v5811 = vpop.f32.mrf.mxu0
        %v5812 = vadd.f32 %v5723, %v5811
        %v5813 = vpop.f32.mrf.mxu0
        %v5814 = vadd.f32 %v5725, %v5813
        %5815 = vmatmul.bf16.gmra.mxu0 %v5471
        %v5816 = vpop.f32.mrf.mxu0
        %v5817 = vadd.f32 %v5728, %v5816
        %v5818 = vpop.f32.mrf.mxu0
        %v5819 = vadd.f32 %v5730, %v5818
        %5820 = vmatmul.bf16.gmra.mxu0 %v5474
        %v5821 = vpop.f32.mrf.mxu0
        %v5822 = vadd.f32 %v5733, %v5821
        %v5823 = vpop.f32.mrf.mxu0
        %v5824 = vadd.f32 %v5735, %v5823
        %5825 = vmatmul.bf16.gmra.mxu0 %v5477
        %v5826 = vpop.f32.mrf.mxu0
        %v5827 = vadd.f32 %v5738, %v5826
        %v5828 = vpop.f32.mrf.mxu0
        %v5829 = vadd.f32 %v5740, %v5828
        %5830 = vmatmul.bf16.gmra.mxu0 %v5480
        %v5831 = vpop.f32.mrf.mxu0
        %v5832 = vadd.f32 %v5743, %v5831
        %v5833 = vpop.f32.mrf.mxu0
        %v5834 = vadd.f32 %v5745, %v5833
        %5835 = vmatmul.bf16.gmra.mxu0 %v5483
        %v5836 = vpop.f32.mrf.mxu0
        %v5837 = vadd.f32 %v5748, %v5836
        %v5838 = vpop.f32.mrf.mxu0
        %v5839 = vadd.f32 %v5750, %v5838
        %5840 = vmatmul.bf16.gmra.mxu0 %v5486
        %v5841 = vpop.f32.mrf.mxu0
        %v5842 = vadd.f32 %v5753, %v5841
        %v5843 = vpop.f32.mrf.mxu0
        %v5844 = vadd.f32 %v5755, %v5843
        %5845 = vmatmul.bf16.gmra.mxu0 %v5489
        %v5846 = vpop.f32.mrf.mxu0
        %v5847 = vadd.f32 %v5758, %v5846
        %v5848 = vpop.f32.mrf.mxu0
        %v5849 = vadd.f32 %v5760, %v5848
        %5850 = vmatmul.bf16.gmra.mxu0 %v5492
        %v5851 = vpop.f32.mrf.mxu0
        %v5852 = vadd.f32 %v5763, %v5851
        %v5853 = vpop.f32.mrf.mxu0
        %v5854 = vadd.f32 %v5765, %v5853
        %5855 = vmatmul.bf16.gmra.mxu0 %v5495
        %v5856 = vpop.f32.mrf.mxu0
        %v5857 = vadd.f32 %v5768, %v5856
        %v5858 = vpop.f32.mrf.mxu0
        %v5859 = vadd.f32 %v5770, %v5858
        %5860 = vmatmul.bf16.gmra.mxu0 %v5498
        %v5861 = vpop.f32.mrf.mxu0
        %v5862 = vadd.f32 %v5773, %v5861
        %v5863 = vpop.f32.mrf.mxu0
        %v5864 = vadd.f32 %v5775, %v5863
        %5865 = vmatmul.bf16.gmra.mxu0 %v5501
        %v5866 = vpop.f32.mrf.mxu0
        %v5867 = vadd.f32 %v5778, %v5866
        %v5868 = vpop.f32.mrf.mxu0
        %v5869 = vadd.f32 %v5780, %v5868
        %5870 = vmatmul.bf16.gmra.mxu0 %v5504
        %v5871 = vpop.f32.mrf.mxu0
        %v5872 = vadd.f32 %v5783, %v5871
        %v5873 = vpop.f32.mrf.mxu0
        %v5874 = vadd.f32 %v5785, %v5873
        %5875 = vdwg.mxu0
        %5876 = vmatpush.bf16.msra.mxu0 %v5673
        %5877 = vmatpush.bf16.msra.mxu0 %v5672
        %5878 = vmatpush.bf16.msra.mxu0 %v5671
        %5879 = vmatpush.bf16.msra.mxu0 %v5670
        %5880 = vmatpush.bf16.msra.mxu0 %v5669
        %5881 = vmatpush.bf16.msra.mxu0 %v5668
        %5882 = vmatpush.bf16.msra.mxu0 %v5667
        %5883 = vmatpush.bf16.msra.mxu0 %v5666
        %5884 = vmatmul.bf16.gmra.mxu0 %v5460
        %v5885 = vpop.f32.mrf.mxu0
        %v5886 = vadd.f32 %v5797, %v5885
        %v5887 = vpop.f32.mrf.mxu0
        %v5888 = vadd.f32 %v5799, %v5887
        %5889 = vmatmul.bf16.gmra.mxu0 %v5463
        %v5890 = vpop.f32.mrf.mxu0
        %v5891 = vadd.f32 %v5802, %v5890
        %v5892 = vpop.f32.mrf.mxu0
        %v5893 = vadd.f32 %v5804, %v5892
        %5894 = vmatmul.bf16.gmra.mxu0 %v5466
        %v5895 = vpop.f32.mrf.mxu0
        %v5896 = vadd.f32 %v5807, %v5895
        %v5897 = vpop.f32.mrf.mxu0
        %v5898 = vadd.f32 %v5809, %v5897
        %5899 = vmatmul.bf16.gmra.mxu0 %v5469
        %v5900 = vpop.f32.mrf.mxu0
        %v5901 = vadd.f32 %v5812, %v5900
        %v5902 = vpop.f32.mrf.mxu0
        %v5903 = vadd.f32 %v5814, %v5902
        %5904 = vmatmul.bf16.gmra.mxu0 %v5472
        %v5905 = vpop.f32.mrf.mxu0
        %v5906 = vadd.f32 %v5817, %v5905
        %v5907 = vpop.f32.mrf.mxu0
        %v5908 = vadd.f32 %v5819, %v5907
        %5909 = vmatmul.bf16.gmra.mxu0 %v5475
        %v5910 = vpop.f32.mrf.mxu0
        %v5911 = vadd.f32 %v5822, %v5910
        %v5912 = vpop.f32.mrf.mxu0
        %v5913 = vadd.f32 %v5824, %v5912
        %5914 = vmatmul.bf16.gmra.mxu0 %v5478
        %v5915 = vpop.f32.mrf.mxu0
        %v5916 = vadd.f32 %v5827, %v5915
        %v5917 = vpop.f32.mrf.mxu0
        %v5918 = vadd.f32 %v5829, %v5917
        %5919 = vmatmul.bf16.gmra.mxu0 %v5481
        %v5920 = vpop.f32.mrf.mxu0
        %v5921 = vadd.f32 %v5832, %v5920
        %v5922 = vpop.f32.mrf.mxu0
        %v5923 = vadd.f32 %v5834, %v5922
        %5924 = vmatmul.bf16.gmra.mxu0 %v5484
        %v5925 = vpop.f32.mrf.mxu0
        %v5926 = vadd.f32 %v5837, %v5925
        %v5927 = vpop.f32.mrf.mxu0
        %v5928 = vadd.f32 %v5839, %v5927
        %5929 = vmatmul.bf16.gmra.mxu0 %v5487
        %v5930 = vpop.f32.mrf.mxu0
        %v5931 = vadd.f32 %v5842, %v5930
        %v5932 = vpop.f32.mrf.mxu0
        %v5933 = vadd.f32 %v5844, %v5932
        %5934 = vmatmul.bf16.gmra.mxu0 %v5490
        %v5935 = vpop.f32.mrf.mxu0
        %v5936 = vadd.f32 %v5847, %v5935
        %v5937 = vpop.f32.mrf.mxu0
        %v5938 = vadd.f32 %v5849, %v5937
        %5939 = vmatmul.bf16.gmra.mxu0 %v5493
        %v5940 = vpop.f32.mrf.mxu0
        %v5941 = vadd.f32 %v5852, %v5940
        %v5942 = vpop.f32.mrf.mxu0
        %v5943 = vadd.f32 %v5854, %v5942
        %5944 = vmatmul.bf16.gmra.mxu0 %v5496
        %v5945 = vpop.f32.mrf.mxu0
        %v5946 = vadd.f32 %v5857, %v5945
        %v5947 = vpop.f32.mrf.mxu0
        %v5948 = vadd.f32 %v5859, %v5947
        %5949 = vmatmul.bf16.gmra.mxu0 %v5499
        %v5950 = vpop.f32.mrf.mxu0
        %v5951 = vadd.f32 %v5862, %v5950
        %v5952 = vpop.f32.mrf.mxu0
        %v5953 = vadd.f32 %v5864, %v5952
        %5954 = vmatmul.bf16.gmra.mxu0 %v5502
        %v5955 = vpop.f32.mrf.mxu0
        %v5956 = vadd.f32 %v5867, %v5955
        %v5957 = vpop.f32.mrf.mxu0
        %v5958 = vadd.f32 %v5869, %v5957
        %5959 = vmatmul.bf16.gmra.mxu0 %v5505
        %v5960 = vpop.f32.mrf.mxu0
        %v5961 = vadd.f32 %v5872, %v5960
        %v5962 = vpop.f32.mrf.mxu0
        %v5963 = vadd.f32 %v5874, %v5962
        %5964 = vdwg.mxu0
        %s5965 = scalar_lea.vmem [#allocation3], 48
        %v5966 = vld [vmem:[%s5965] sm:$0xff]
        %v5967 = vld [vmem:[%s5965 + $0x8] sm:$0xf]
        %v5968 = vld [vmem:[%s5965 + $0xc] sm:$0xff]
        %v5969 = vld [vmem:[%s5965 + $0x14] sm:$0xf]
        %v5970 = vld [vmem:[%s5965 + $0x18] sm:$0xff]
        %v5971 = vld [vmem:[%s5965 + $0x20] sm:$0xf]
        %v5972 = vld [vmem:[%s5965 + $0x24] sm:$0xff]
        %v5973 = vld [vmem:[%s5965 + $0x2c] sm:$0xf]
        %v5974 = vld [vmem:[%s5965 + $0x30] sm:$0xff]
        %v5975 = vld [vmem:[%s5965 + $0x38] sm:$0xf]
        %v5976 = vld [vmem:[%s5965 + $0x3c] sm:$0xff]
        %v5977 = vld [vmem:[%s5965 + $0x44] sm:$0xf]
        %v5978 = vld [vmem:[%s5965 + $0x48] sm:$0xff]
        %v5979 = vld [vmem:[%s5965 + $0x50] sm:$0xf]
        %v5980 = vld [vmem:[%s5965 + $0x54] sm:$0xff]
        %v5981 = vld [vmem:[%s5965 + $0x5c] sm:$0xf]
        %v5982 = vld [vmem:[%s5965 + $0x60] sm:$0xff]
        %v5983 = vld [vmem:[%s5965 + $0x68] sm:$0xf]
        %v5984 = vld [vmem:[%s5965 + $0x6c] sm:$0xff]
        %v5985 = vld [vmem:[%s5965 + $0x74] sm:$0xf]
        %v5986 = vld [vmem:[%s5965 + $0x78] sm:$0xff]
        %v5987 = vld [vmem:[%s5965 + $0x80] sm:$0xf]
        %v5988 = vld [vmem:[%s5965 + $0x84] sm:$0xff]
        %v5989 = vld [vmem:[%s5965 + $0x8c] sm:$0xf]
        %v5990 = vld [vmem:[%s5965 + $0x90] sm:$0xff]
        %v5991 = vld [vmem:[%s5965 + $0x98] sm:$0xf]
        %v5992 = vld [vmem:[%s5965 + $0x9c] sm:$0xff]
        %v5993 = vld [vmem:[%s5965 + $0xa4] sm:$0xf]
        %v5994 = vld [vmem:[%s5965 + $0xa8] sm:$0xff]
        %v5995 = vld [vmem:[%s5965 + $0xb0] sm:$0xf]
        %v5996 = vld [vmem:[%s5965 + $0xb4] sm:$0xff]
        %v5997 = vld [vmem:[%s5965 + $0xbc] sm:$0xf]
        %v5998 = vld [vmem:[%s5965 + $0xc0] sm:$0xff]
        %v5999 = vld [vmem:[%s5965 + $0xc8] sm:$0xf]
        %v6000 = vld [vmem:[%s5965 + $0xcc] sm:$0xff]
        %v6001 = vld [vmem:[%s5965 + $0xd4] sm:$0xf]
        %v6002 = vld [vmem:[%s5965 + $0xd8] sm:$0xff]
        %v6003 = vld [vmem:[%s5965 + $0xe0] sm:$0xf]
        %v6004 = vld [vmem:[%s5965 + $0xe4] sm:$0xff]
        %v6005 = vld [vmem:[%s5965 + $0xec] sm:$0xf]
        %v6006 = vld [vmem:[%s5965 + $0xf0] sm:$0xff]
        %v6007 = vld [vmem:[%s5965 + $0xf8] sm:$0xf]
        %v6008 = vld [vmem:[%s5965 + $0xfc] sm:$0xff]
        %v6009 = vld [vmem:[%s5965 + $0x104] sm:$0xf]
        %v6010 = vld [vmem:[%s5965 + $0x108] sm:$0xff]
        %v6011 = vld [vmem:[%s5965 + $0x110] sm:$0xf]
        %v6012 = vld [vmem:[%s5965 + $0x114] sm:$0xff]
        %v6013 = vld [vmem:[%s5965 + $0x11c] sm:$0xf]
        %v6014 = vld [vmem:[%s5965 + $0x120] sm:$0xff]
        %v6015 = vld [vmem:[%s5965 + $0x128] sm:$0xf]
        %v6016 = vld [vmem:[%s5965 + $0x12c] sm:$0xff]
        %v6017 = vld [vmem:[%s5965 + $0x134] sm:$0xf]
        %v6018 = vld [vmem:[%s5965 + $0x138] sm:$0xff]
        %v6019 = vld [vmem:[%s5965 + $0x140] sm:$0xf]
        %v6020 = vld [vmem:[%s5965 + $0x144] sm:$0xff]
        %v6021 = vld [vmem:[%s5965 + $0x14c] sm:$0xf]
        %v6022 = vld [vmem:[%s5965 + $0x150] sm:$0xff]
        %v6023 = vld [vmem:[%s5965 + $0x158] sm:$0xf]
        %v6024 = vld [vmem:[%s5965 + $0x15c] sm:$0xff]
        %v6025 = vld [vmem:[%s5965 + $0x164] sm:$0xf]
        %v6026 = vld [vmem:[%s5965 + $0x168] sm:$0xff]
        %v6027 = vld [vmem:[%s5965 + $0x170] sm:$0xf]
        %v6028 = vld [vmem:[%s5965 + $0x174] sm:$0xff]
        %v6029 = vld [vmem:[%s5965 + $0x17c] sm:$0xf]
        %s6030 = scalar_lea.vmem [#allocation9], 384
        %v6031 = vld [vmem:[%s6030] sm:$0xf]
        %v6032 = vld [vmem:[%s6030 + $0x4] sm:$0xf]
        %v6033 = vld [vmem:[%s6030 + $0x8] sm:$0xf]
        %v6034 = vld [vmem:[%s6030 + $0xc] sm:$0xf]
        %v6035 = vld [vmem:[%s6030 + $0x10] sm:$0xf]
        %v6036 = vld [vmem:[%s6030 + $0x14] sm:$0xf]
        %v6037 = vld [vmem:[%s6030 + $0x18] sm:$0xf]
        %v6038 = vld [vmem:[%s6030 + $0x1c] sm:$0xf]
        %v6039 = vld [vmem:[%s6030 + $0x20] sm:$0xf]
        %v6040 = vld [vmem:[%s6030 + $0x24] sm:$0xf]
        %v6041 = vld [vmem:[%s6030 + $0x28] sm:$0xf]
        %v6042 = vld [vmem:[%s6030 + $0x2c] sm:$0xf]
        %v6043 = vld [vmem:[%s6030 + $0x30] sm:$0xf]
        %v6044 = vld [vmem:[%s6030 + $0x34] sm:$0xf]
        %v6045 = vld [vmem:[%s6030 + $0x38] sm:$0xf]
        %v6046 = vld [vmem:[%s6030 + $0x3c] sm:$0xf]
        %v6047 = vld [vmem:[%s6030 + $0x40] sm:$0xf]
        %v6048 = vld [vmem:[%s6030 + $0x44] sm:$0xf]
        %v6049 = vld [vmem:[%s6030 + $0x48] sm:$0xf]
        %v6050 = vld [vmem:[%s6030 + $0x4c] sm:$0xf]
        %v6051 = vld [vmem:[%s6030 + $0x50] sm:$0xf]
        %v6052 = vld [vmem:[%s6030 + $0x54] sm:$0xf]
        %v6053 = vld [vmem:[%s6030 + $0x58] sm:$0xf]
        %v6054 = vld [vmem:[%s6030 + $0x5c] sm:$0xf]
        %v6055 = vld [vmem:[%s6030 + $0x60] sm:$0xf]
        %v6056 = vld [vmem:[%s6030 + $0x64] sm:$0xf]
        %v6057 = vld [vmem:[%s6030 + $0x68] sm:$0xf]
        %v6058 = vld [vmem:[%s6030 + $0x6c] sm:$0xf]
        %v6059 = vld [vmem:[%s6030 + $0x70] sm:$0xf]
        %v6060 = vld [vmem:[%s6030 + $0x74] sm:$0xf]
        %v6061 = vld [vmem:[%s6030 + $0x78] sm:$0xf]
        %v6062 = vld [vmem:[%s6030 + $0x7c] sm:$0xf]
        %v6063 = vld [vmem:[%s6030 + $0x80] sm:$0xf]
        %v6064 = vld [vmem:[%s6030 + $0x84] sm:$0xf]
        %v6065 = vld [vmem:[%s6030 + $0x88] sm:$0xf]
        %v6066 = vld [vmem:[%s6030 + $0x8c] sm:$0xf]
        %v6067 = vld [vmem:[%s6030 + $0x90] sm:$0xf]
        %v6068 = vld [vmem:[%s6030 + $0x94] sm:$0xf]
        %v6069 = vld [vmem:[%s6030 + $0x98] sm:$0xf]
        %v6070 = vld [vmem:[%s6030 + $0x9c] sm:$0xf]
        %v6071 = vld [vmem:[%s6030 + $0xa0] sm:$0xf]
        %v6072 = vld [vmem:[%s6030 + $0xa4] sm:$0xf]
        %v6073 = vld [vmem:[%s6030 + $0xa8] sm:$0xf]
        %v6074 = vld [vmem:[%s6030 + $0xac] sm:$0xf]
        %v6075 = vld [vmem:[%s6030 + $0xb0] sm:$0xf]
        %v6076 = vld [vmem:[%s6030 + $0xb4] sm:$0xf]
        %v6077 = vld [vmem:[%s6030 + $0xb8] sm:$0xf]
        %v6078 = vld [vmem:[%s6030 + $0xbc] sm:$0xf]
        %v6143 = vunpack.c.l.b16 %v5966
        %v6144 = vunpack.c.h.b16 %v5966
        %v6145 = vunpack.c.l.b16 %v5967
        %v6146 = vunpack.c.l.b16 %v5968
        %v6147 = vunpack.c.h.b16 %v5968
        %v6148 = vunpack.c.l.b16 %v5969
        %v6149 = vunpack.c.l.b16 %v5970
        %v6150 = vunpack.c.h.b16 %v5970
        %v6151 = vunpack.c.l.b16 %v5971
        %v6152 = vunpack.c.l.b16 %v5972
        %v6153 = vunpack.c.h.b16 %v5972
        %v6154 = vunpack.c.l.b16 %v5973
        %v6155 = vunpack.c.l.b16 %v5974
        %v6156 = vunpack.c.h.b16 %v5974
        %v6157 = vunpack.c.l.b16 %v5975
        %v6158 = vunpack.c.l.b16 %v5976
        %v6159 = vunpack.c.h.b16 %v5976
        %v6160 = vunpack.c.l.b16 %v5977
        %v6161 = vunpack.c.l.b16 %v5978
        %v6162 = vunpack.c.h.b16 %v5978
        %v6163 = vunpack.c.l.b16 %v5979
        %v6164 = vunpack.c.l.b16 %v5980
        %v6165 = vunpack.c.h.b16 %v5980
        %v6166 = vunpack.c.l.b16 %v5981
        %v6167 = vunpack.c.l.b16 %v5982
        %v6168 = vunpack.c.h.b16 %v5982
        %v6169 = vunpack.c.l.b16 %v5983
        %v6170 = vunpack.c.l.b16 %v5984
        %v6171 = vunpack.c.h.b16 %v5984
        %v6172 = vunpack.c.l.b16 %v5985
        %v6173 = vunpack.c.l.b16 %v5986
        %v6174 = vunpack.c.h.b16 %v5986
        %v6175 = vunpack.c.l.b16 %v5987
        %v6176 = vunpack.c.l.b16 %v5988
        %v6177 = vunpack.c.h.b16 %v5988
        %v6178 = vunpack.c.l.b16 %v5989
        %v6179 = vunpack.c.l.b16 %v5990
        %v6180 = vunpack.c.h.b16 %v5990
        %v6181 = vunpack.c.l.b16 %v5991
        %v6182 = vunpack.c.l.b16 %v5992
        %v6183 = vunpack.c.h.b16 %v5992
        %v6184 = vunpack.c.l.b16 %v5993
        %v6185 = vunpack.c.l.b16 %v5994
        %v6186 = vunpack.c.h.b16 %v5994
        %v6187 = vunpack.c.l.b16 %v5995
        %v6188 = vunpack.c.l.b16 %v5996
        %v6189 = vunpack.c.h.b16 %v5996
        %v6190 = vunpack.c.l.b16 %v5997
        %v6191 = vunpack.c.l.b16 %v5998
        %v6192 = vunpack.c.h.b16 %v5998
        %v6193 = vunpack.c.l.b16 %v5999
        %v6194 = vunpack.c.l.b16 %v6000
        %v6195 = vunpack.c.h.b16 %v6000
        %v6196 = vunpack.c.l.b16 %v6001
        %v6197 = vunpack.c.l.b16 %v6002
        %v6198 = vunpack.c.h.b16 %v6002
        %v6199 = vunpack.c.l.b16 %v6003
        %v6200 = vunpack.c.l.b16 %v6004
        %v6201 = vunpack.c.h.b16 %v6004
        %v6202 = vunpack.c.l.b16 %v6005
        %v6203 = vunpack.c.l.b16 %v6006
        %v6204 = vunpack.c.h.b16 %v6006
        %v6205 = vunpack.c.l.b16 %v6007
        %v6206 = vunpack.c.l.b16 %v6008
        %v6207 = vunpack.c.h.b16 %v6008
        %v6208 = vunpack.c.l.b16 %v6009
        %v6209 = vunpack.c.l.b16 %v6010
        %v6210 = vunpack.c.h.b16 %v6010
        %v6211 = vunpack.c.l.b16 %v6011
        %v6212 = vunpack.c.l.b16 %v6012
        %v6213 = vunpack.c.h.b16 %v6012
        %v6214 = vunpack.c.l.b16 %v6013
        %v6215 = vunpack.c.l.b16 %v6014
        %v6216 = vunpack.c.h.b16 %v6014
        %v6217 = vunpack.c.l.b16 %v6015
        %v6218 = vunpack.c.l.b16 %v6016
        %v6219 = vunpack.c.h.b16 %v6016
        %v6220 = vunpack.c.l.b16 %v6017
        %v6221 = vunpack.c.l.b16 %v6018
        %v6222 = vunpack.c.h.b16 %v6018
        %v6223 = vunpack.c.l.b16 %v6019
        %v6224 = vunpack.c.l.b16 %v6020
        %v6225 = vunpack.c.h.b16 %v6020
        %v6226 = vunpack.c.l.b16 %v6021
        %v6227 = vunpack.c.l.b16 %v6022
        %v6228 = vunpack.c.h.b16 %v6022
        %v6229 = vunpack.c.l.b16 %v6023
        %v6230 = vunpack.c.l.b16 %v6024
        %v6231 = vunpack.c.h.b16 %v6024
        %v6232 = vunpack.c.l.b16 %v6025
        %v6233 = vunpack.c.l.b16 %v6026
        %v6234 = vunpack.c.h.b16 %v6026
        %v6235 = vunpack.c.l.b16 %v6027
        %v6236 = vunpack.c.l.b16 %v6028
        %v6237 = vunpack.c.h.b16 %v6028
        %v6238 = vunpack.c.l.b16 %v6029
        %v6239 = vpack.c.b16 %v6146, %v6143
        %v6240 = vpack.c.b16 %v6147, %v6144
        %v6241 = vpack.c.b16 %v6148, %v6145
        %v6242 = vpack.c.b16 %v6152, %v6149
        %v6243 = vpack.c.b16 %v6153, %v6150
        %v6244 = vpack.c.b16 %v6154, %v6151
        %v6245 = vpack.c.b16 %v6158, %v6155
        %v6246 = vpack.c.b16 %v6159, %v6156
        %v6247 = vpack.c.b16 %v6160, %v6157
        %v6248 = vpack.c.b16 %v6164, %v6161
        %v6249 = vpack.c.b16 %v6165, %v6162
        %v6250 = vpack.c.b16 %v6166, %v6163
        %v6251 = vpack.c.b16 %v6170, %v6167
        %v6252 = vpack.c.b16 %v6171, %v6168
        %v6253 = vpack.c.b16 %v6172, %v6169
        %v6254 = vpack.c.b16 %v6176, %v6173
        %v6255 = vpack.c.b16 %v6177, %v6174
        %v6256 = vpack.c.b16 %v6178, %v6175
        %v6257 = vpack.c.b16 %v6182, %v6179
        %v6258 = vpack.c.b16 %v6183, %v6180
        %v6259 = vpack.c.b16 %v6184, %v6181
        %v6260 = vpack.c.b16 %v6188, %v6185
        %v6261 = vpack.c.b16 %v6189, %v6186
        %v6262 = vpack.c.b16 %v6190, %v6187
        %v6263 = vpack.c.b16 %v6194, %v6191
        %v6264 = vpack.c.b16 %v6195, %v6192
        %v6265 = vpack.c.b16 %v6196, %v6193
        %v6266 = vpack.c.b16 %v6200, %v6197
        %v6267 = vpack.c.b16 %v6201, %v6198
        %v6268 = vpack.c.b16 %v6202, %v6199
        %v6269 = vpack.c.b16 %v6206, %v6203
        %v6270 = vpack.c.b16 %v6207, %v6204
        %v6271 = vpack.c.b16 %v6208, %v6205
        %v6272 = vpack.c.b16 %v6212, %v6209
        %v6273 = vpack.c.b16 %v6213, %v6210
        %v6274 = vpack.c.b16 %v6214, %v6211
        %v6275 = vpack.c.b16 %v6218, %v6215
        %v6276 = vpack.c.b16 %v6219, %v6216
        %v6277 = vpack.c.b16 %v6220, %v6217
        %v6278 = vpack.c.b16 %v6224, %v6221
        %v6279 = vpack.c.b16 %v6225, %v6222
        %v6280 = vpack.c.b16 %v6226, %v6223
        %v6281 = vpack.c.b16 %v6230, %v6227
        %v6282 = vpack.c.b16 %v6231, %v6228
        %v6283 = vpack.c.b16 %v6232, %v6229
        %v6284 = vpack.c.b16 %v6236, %v6233
        %v6285 = vpack.c.b16 %v6237, %v6234
        %v6286 = vpack.c.b16 %v6238, %v6235
        %v6383 = vunpack.c.l.b16 %v6031
        %v6384 = vunpack.c.l.b16 %v6032
        %v6385 = vunpack.c.l.b16 %v6033
        %v6386 = vunpack.c.l.b16 %v6034
        %v6387 = vunpack.c.l.b16 %v6035
        %v6388 = vunpack.c.l.b16 %v6036
        %v6389 = vunpack.c.l.b16 %v6037
        %v6390 = vunpack.c.l.b16 %v6038
        %v6391 = vunpack.c.l.b16 %v6039
        %v6392 = vunpack.c.l.b16 %v6040
        %v6393 = vunpack.c.l.b16 %v6041
        %v6394 = vunpack.c.l.b16 %v6042
        %v6395 = vunpack.c.l.b16 %v6043
        %v6396 = vunpack.c.l.b16 %v6044
        %v6397 = vunpack.c.l.b16 %v6045
        %v6398 = vunpack.c.l.b16 %v6046
        %v6399 = vunpack.c.l.b16 %v6047
        %v6400 = vunpack.c.l.b16 %v6048
        %v6401 = vunpack.c.l.b16 %v6049
        %v6402 = vunpack.c.l.b16 %v6050
        %v6403 = vunpack.c.l.b16 %v6051
        %v6404 = vunpack.c.l.b16 %v6052
        %v6405 = vunpack.c.l.b16 %v6053
        %v6406 = vunpack.c.l.b16 %v6054
        %v6407 = vunpack.c.l.b16 %v6055
        %v6408 = vunpack.c.l.b16 %v6056
        %v6409 = vunpack.c.l.b16 %v6057
        %v6410 = vunpack.c.l.b16 %v6058
        %v6411 = vunpack.c.l.b16 %v6059
        %v6412 = vunpack.c.l.b16 %v6060
        %v6413 = vunpack.c.l.b16 %v6061
        %v6414 = vunpack.c.l.b16 %v6062
        %v6415 = vunpack.c.l.b16 %v6063
        %v6416 = vunpack.c.l.b16 %v6064
        %v6417 = vunpack.c.l.b16 %v6065
        %v6418 = vunpack.c.l.b16 %v6066
        %v6419 = vunpack.c.l.b16 %v6067
        %v6420 = vunpack.c.l.b16 %v6068
        %v6421 = vunpack.c.l.b16 %v6069
        %v6422 = vunpack.c.l.b16 %v6070
        %v6423 = vunpack.c.l.b16 %v6071
        %v6424 = vunpack.c.l.b16 %v6072
        %v6425 = vunpack.c.l.b16 %v6073
        %v6426 = vunpack.c.l.b16 %v6074
        %v6427 = vunpack.c.l.b16 %v6075
        %v6428 = vunpack.c.l.b16 %v6076
        %v6429 = vunpack.c.l.b16 %v6077
        %v6430 = vunpack.c.l.b16 %v6078
        %v6431 = vpack.c.b16 %v6384, %v6383
        %v6432 = vpack.c.b16 %v6386, %v6385
        %v6433 = vpack.c.b16 %v6388, %v6387
        %v6434 = vpack.c.b16 %v6390, %v6389
        %v6435 = vpack.c.b16 %v6392, %v6391
        %v6436 = vpack.c.b16 %v6394, %v6393
        %v6437 = vpack.c.b16 %v6396, %v6395
        %v6438 = vpack.c.b16 %v6398, %v6397
        %v6439 = vpack.c.b16 %v6400, %v6399
        %v6440 = vpack.c.b16 %v6402, %v6401
        %v6441 = vpack.c.b16 %v6404, %v6403
        %v6442 = vpack.c.b16 %v6406, %v6405
        %v6443 = vpack.c.b16 %v6408, %v6407
        %v6444 = vpack.c.b16 %v6410, %v6409
        %v6445 = vpack.c.b16 %v6412, %v6411
        %v6446 = vpack.c.b16 %v6414, %v6413
        %v6447 = vpack.c.b16 %v6416, %v6415
        %v6448 = vpack.c.b16 %v6418, %v6417
        %v6449 = vpack.c.b16 %v6420, %v6419
        %v6450 = vpack.c.b16 %v6422, %v6421
        %v6451 = vpack.c.b16 %v6424, %v6423
        %v6452 = vpack.c.b16 %v6426, %v6425
        %v6453 = vpack.c.b16 %v6428, %v6427
        %v6454 = vpack.c.b16 %v6430, %v6429
        %6479 = vmatpush.bf16.msra.mxu0 %v6438
        %6480 = vmatpush.bf16.msra.mxu0 %v6437
        %6481 = vmatpush.bf16.msra.mxu0 %v6436
        %6482 = vmatpush.bf16.msra.mxu0 %v6435
        %6483 = vmatpush.bf16.msra.mxu0 %v6434
        %6484 = vmatpush.bf16.msra.mxu0 %v6433
        %6485 = vmatpush.bf16.msra.mxu0 %v6432
        %6486 = vmatpush.bf16.msra.mxu0 %v6431
        %6487 = vmatmul.bf16.gmra.mxu0 %v6239
        %v6488 = vpop.f32.mrf.mxu0
        %v6489 = vadd.f32 0.0, %v6488
        %v6490 = vpop.f32.mrf.mxu0
        %v6491 = vadd.f32 0.0, %v6490
        %6492 = vmatmul.bf16.gmra.mxu0 %v6242
        %v6493 = vpop.f32.mrf.mxu0
        %v6494 = vadd.f32 0.0, %v6493
        %v6495 = vpop.f32.mrf.mxu0
        %v6496 = vadd.f32 0.0, %v6495
        %6497 = vmatmul.bf16.gmra.mxu0 %v6245
        %v6498 = vpop.f32.mrf.mxu0
        %v6499 = vadd.f32 0.0, %v6498
        %v6500 = vpop.f32.mrf.mxu0
        %v6501 = vadd.f32 0.0, %v6500
        %6502 = vmatmul.bf16.gmra.mxu0 %v6248
        %v6503 = vpop.f32.mrf.mxu0
        %v6504 = vadd.f32 0.0, %v6503
        %v6505 = vpop.f32.mrf.mxu0
        %v6506 = vadd.f32 0.0, %v6505
        %6507 = vmatmul.bf16.gmra.mxu0 %v6251
        %v6508 = vpop.f32.mrf.mxu0
        %v6509 = vadd.f32 0.0, %v6508
        %v6510 = vpop.f32.mrf.mxu0
        %v6511 = vadd.f32 0.0, %v6510
        %6512 = vmatmul.bf16.gmra.mxu0 %v6254
        %v6513 = vpop.f32.mrf.mxu0
        %v6514 = vadd.f32 0.0, %v6513
        %v6515 = vpop.f32.mrf.mxu0
        %v6516 = vadd.f32 0.0, %v6515
        %6517 = vmatmul.bf16.gmra.mxu0 %v6257
        %v6518 = vpop.f32.mrf.mxu0
        %v6519 = vadd.f32 0.0, %v6518
        %v6520 = vpop.f32.mrf.mxu0
        %v6521 = vadd.f32 0.0, %v6520
        %6522 = vmatmul.bf16.gmra.mxu0 %v6260
        %v6523 = vpop.f32.mrf.mxu0
        %v6524 = vadd.f32 0.0, %v6523
        %v6525 = vpop.f32.mrf.mxu0
        %v6526 = vadd.f32 0.0, %v6525
        %6527 = vmatmul.bf16.gmra.mxu0 %v6263
        %v6528 = vpop.f32.mrf.mxu0
        %v6529 = vadd.f32 0.0, %v6528
        %v6530 = vpop.f32.mrf.mxu0
        %v6531 = vadd.f32 0.0, %v6530
        %6532 = vmatmul.bf16.gmra.mxu0 %v6266
        %v6533 = vpop.f32.mrf.mxu0
        %v6534 = vadd.f32 0.0, %v6533
        %v6535 = vpop.f32.mrf.mxu0
        %v6536 = vadd.f32 0.0, %v6535
        %6537 = vmatmul.bf16.gmra.mxu0 %v6269
        %v6538 = vpop.f32.mrf.mxu0
        %v6539 = vadd.f32 0.0, %v6538
        %v6540 = vpop.f32.mrf.mxu0
        %v6541 = vadd.f32 0.0, %v6540
        %6542 = vmatmul.bf16.gmra.mxu0 %v6272
        %v6543 = vpop.f32.mrf.mxu0
        %v6544 = vadd.f32 0.0, %v6543
        %v6545 = vpop.f32.mrf.mxu0
        %v6546 = vadd.f32 0.0, %v6545
        %6547 = vmatmul.bf16.gmra.mxu0 %v6275
        %v6548 = vpop.f32.mrf.mxu0
        %v6549 = vadd.f32 0.0, %v6548
        %v6550 = vpop.f32.mrf.mxu0
        %v6551 = vadd.f32 0.0, %v6550
        %6552 = vmatmul.bf16.gmra.mxu0 %v6278
        %v6553 = vpop.f32.mrf.mxu0
        %v6554 = vadd.f32 0.0, %v6553
        %v6555 = vpop.f32.mrf.mxu0
        %v6556 = vadd.f32 0.0, %v6555
        %6557 = vmatmul.bf16.gmra.mxu0 %v6281
        %v6558 = vpop.f32.mrf.mxu0
        %v6559 = vadd.f32 0.0, %v6558
        %v6560 = vpop.f32.mrf.mxu0
        %v6561 = vadd.f32 0.0, %v6560
        %6562 = vmatmul.bf16.gmra.mxu0 %v6284
        %v6563 = vpop.f32.mrf.mxu0
        %v6564 = vadd.f32 0.0, %v6563
        %v6565 = vpop.f32.mrf.mxu0
        %v6566 = vadd.f32 0.0, %v6565
        %6567 = vdwg.mxu0
        %6568 = vmatpush.bf16.msra.mxu0 %v6446
        %6569 = vmatpush.bf16.msra.mxu0 %v6445
        %6570 = vmatpush.bf16.msra.mxu0 %v6444
        %6571 = vmatpush.bf16.msra.mxu0 %v6443
        %6572 = vmatpush.bf16.msra.mxu0 %v6442
        %6573 = vmatpush.bf16.msra.mxu0 %v6441
        %6574 = vmatpush.bf16.msra.mxu0 %v6440
        %6575 = vmatpush.bf16.msra.mxu0 %v6439
        %6576 = vmatmul.bf16.gmra.mxu0 %v6240
        %v6577 = vpop.f32.mrf.mxu0
        %v6578 = vadd.f32 %v6489, %v6577
        %v6579 = vpop.f32.mrf.mxu0
        %v6580 = vadd.f32 %v6491, %v6579
        %6581 = vmatmul.bf16.gmra.mxu0 %v6243
        %v6582 = vpop.f32.mrf.mxu0
        %v6583 = vadd.f32 %v6494, %v6582
        %v6584 = vpop.f32.mrf.mxu0
        %v6585 = vadd.f32 %v6496, %v6584
        %6586 = vmatmul.bf16.gmra.mxu0 %v6246
        %v6587 = vpop.f32.mrf.mxu0
        %v6588 = vadd.f32 %v6499, %v6587
        %v6589 = vpop.f32.mrf.mxu0
        %v6590 = vadd.f32 %v6501, %v6589
        %6591 = vmatmul.bf16.gmra.mxu0 %v6249
        %v6592 = vpop.f32.mrf.mxu0
        %v6593 = vadd.f32 %v6504, %v6592
        %v6594 = vpop.f32.mrf.mxu0
        %v6595 = vadd.f32 %v6506, %v6594
        %6596 = vmatmul.bf16.gmra.mxu0 %v6252
        %v6597 = vpop.f32.mrf.mxu0
        %v6598 = vadd.f32 %v6509, %v6597
        %v6599 = vpop.f32.mrf.mxu0
        %v6600 = vadd.f32 %v6511, %v6599
        %6601 = vmatmul.bf16.gmra.mxu0 %v6255
        %v6602 = vpop.f32.mrf.mxu0
        %v6603 = vadd.f32 %v6514, %v6602
        %v6604 = vpop.f32.mrf.mxu0
        %v6605 = vadd.f32 %v6516, %v6604
        %6606 = vmatmul.bf16.gmra.mxu0 %v6258
        %v6607 = vpop.f32.mrf.mxu0
        %v6608 = vadd.f32 %v6519, %v6607
        %v6609 = vpop.f32.mrf.mxu0
        %v6610 = vadd.f32 %v6521, %v6609
        %6611 = vmatmul.bf16.gmra.mxu0 %v6261
        %v6612 = vpop.f32.mrf.mxu0
        %v6613 = vadd.f32 %v6524, %v6612
        %v6614 = vpop.f32.mrf.mxu0
        %v6615 = vadd.f32 %v6526, %v6614
        %6616 = vmatmul.bf16.gmra.mxu0 %v6264
        %v6617 = vpop.f32.mrf.mxu0
        %v6618 = vadd.f32 %v6529, %v6617
        %v6619 = vpop.f32.mrf.mxu0
        %v6620 = vadd.f32 %v6531, %v6619
        %6621 = vmatmul.bf16.gmra.mxu0 %v6267
        %v6622 = vpop.f32.mrf.mxu0
        %v6623 = vadd.f32 %v6534, %v6622
        %v6624 = vpop.f32.mrf.mxu0
        %v6625 = vadd.f32 %v6536, %v6624
        %6626 = vmatmul.bf16.gmra.mxu0 %v6270
        %v6627 = vpop.f32.mrf.mxu0
        %v6628 = vadd.f32 %v6539, %v6627
        %v6629 = vpop.f32.mrf.mxu0
        %v6630 = vadd.f32 %v6541, %v6629
        %6631 = vmatmul.bf16.gmra.mxu0 %v6273
        %v6632 = vpop.f32.mrf.mxu0
        %v6633 = vadd.f32 %v6544, %v6632
        %v6634 = vpop.f32.mrf.mxu0
        %v6635 = vadd.f32 %v6546, %v6634
        %6636 = vmatmul.bf16.gmra.mxu0 %v6276
        %v6637 = vpop.f32.mrf.mxu0
        %v6638 = vadd.f32 %v6549, %v6637
        %v6639 = vpop.f32.mrf.mxu0
        %v6640 = vadd.f32 %v6551, %v6639
        %6641 = vmatmul.bf16.gmra.mxu0 %v6279
        %v6642 = vpop.f32.mrf.mxu0
        %v6643 = vadd.f32 %v6554, %v6642
        %v6644 = vpop.f32.mrf.mxu0
        %v6645 = vadd.f32 %v6556, %v6644
        %6646 = vmatmul.bf16.gmra.mxu0 %v6282
        %v6647 = vpop.f32.mrf.mxu0
        %v6648 = vadd.f32 %v6559, %v6647
        %v6649 = vpop.f32.mrf.mxu0
        %v6650 = vadd.f32 %v6561, %v6649
        %6651 = vmatmul.bf16.gmra.mxu0 %v6285
        %v6652 = vpop.f32.mrf.mxu0
        %v6653 = vadd.f32 %v6564, %v6652
        %v6654 = vpop.f32.mrf.mxu0
        %v6655 = vadd.f32 %v6566, %v6654
        %6656 = vdwg.mxu0
        %6657 = vmatpush.bf16.msra.mxu0 %v6454
        %6658 = vmatpush.bf16.msra.mxu0 %v6453
        %6659 = vmatpush.bf16.msra.mxu0 %v6452
        %6660 = vmatpush.bf16.msra.mxu0 %v6451
        %6661 = vmatpush.bf16.msra.mxu0 %v6450
        %6662 = vmatpush.bf16.msra.mxu0 %v6449
        %6663 = vmatpush.bf16.msra.mxu0 %v6448
        %6664 = vmatpush.bf16.msra.mxu0 %v6447
        %6665 = vmatmul.bf16.gmra.mxu0 %v6241
        %v6666 = vpop.f32.mrf.mxu0
        %v6667 = vadd.f32 %v6578, %v6666
        %v6668 = vpop.f32.mrf.mxu0
        %v6669 = vadd.f32 %v6580, %v6668
        %6670 = vmatmul.bf16.gmra.mxu0 %v6244
        %v6671 = vpop.f32.mrf.mxu0
        %v6672 = vadd.f32 %v6583, %v6671
        %v6673 = vpop.f32.mrf.mxu0
        %v6674 = vadd.f32 %v6585, %v6673
        %6675 = vmatmul.bf16.gmra.mxu0 %v6247
        %v6676 = vpop.f32.mrf.mxu0
        %v6677 = vadd.f32 %v6588, %v6676
        %v6678 = vpop.f32.mrf.mxu0
        %v6679 = vadd.f32 %v6590, %v6678
        %6680 = vmatmul.bf16.gmra.mxu0 %v6250
        %v6681 = vpop.f32.mrf.mxu0
        %v6682 = vadd.f32 %v6593, %v6681
        %v6683 = vpop.f32.mrf.mxu0
        %v6684 = vadd.f32 %v6595, %v6683
        %6685 = vmatmul.bf16.gmra.mxu0 %v6253
        %v6686 = vpop.f32.mrf.mxu0
        %v6687 = vadd.f32 %v6598, %v6686
        %v6688 = vpop.f32.mrf.mxu0
        %v6689 = vadd.f32 %v6600, %v6688
        %6690 = vmatmul.bf16.gmra.mxu0 %v6256
        %v6691 = vpop.f32.mrf.mxu0
        %v6692 = vadd.f32 %v6603, %v6691
        %v6693 = vpop.f32.mrf.mxu0
        %v6694 = vadd.f32 %v6605, %v6693
        %6695 = vmatmul.bf16.gmra.mxu0 %v6259
        %v6696 = vpop.f32.mrf.mxu0
        %v6697 = vadd.f32 %v6608, %v6696
        %v6698 = vpop.f32.mrf.mxu0
        %v6699 = vadd.f32 %v6610, %v6698
        %6700 = vmatmul.bf16.gmra.mxu0 %v6262
        %v6701 = vpop.f32.mrf.mxu0
        %v6702 = vadd.f32 %v6613, %v6701
        %v6703 = vpop.f32.mrf.mxu0
        %v6704 = vadd.f32 %v6615, %v6703
        %6705 = vmatmul.bf16.gmra.mxu0 %v6265
        %v6706 = vpop.f32.mrf.mxu0
        %v6707 = vadd.f32 %v6618, %v6706
        %v6708 = vpop.f32.mrf.mxu0
        %v6709 = vadd.f32 %v6620, %v6708
        %6710 = vmatmul.bf16.gmra.mxu0 %v6268
        %v6711 = vpop.f32.mrf.mxu0
        %v6712 = vadd.f32 %v6623, %v6711
        %v6713 = vpop.f32.mrf.mxu0
        %v6714 = vadd.f32 %v6625, %v6713
        %6715 = vmatmul.bf16.gmra.mxu0 %v6271
        %v6716 = vpop.f32.mrf.mxu0
        %v6717 = vadd.f32 %v6628, %v6716
        %v6718 = vpop.f32.mrf.mxu0
        %v6719 = vadd.f32 %v6630, %v6718
        %6720 = vmatmul.bf16.gmra.mxu0 %v6274
        %v6721 = vpop.f32.mrf.mxu0
        %v6722 = vadd.f32 %v6633, %v6721
        %v6723 = vpop.f32.mrf.mxu0
        %v6724 = vadd.f32 %v6635, %v6723
        %6725 = vmatmul.bf16.gmra.mxu0 %v6277
        %v6726 = vpop.f32.mrf.mxu0
        %v6727 = vadd.f32 %v6638, %v6726
        %v6728 = vpop.f32.mrf.mxu0
        %v6729 = vadd.f32 %v6640, %v6728
        %6730 = vmatmul.bf16.gmra.mxu0 %v6280
        %v6731 = vpop.f32.mrf.mxu0
        %v6732 = vadd.f32 %v6643, %v6731
        %v6733 = vpop.f32.mrf.mxu0
        %v6734 = vadd.f32 %v6645, %v6733
        %6735 = vmatmul.bf16.gmra.mxu0 %v6283
        %v6736 = vpop.f32.mrf.mxu0
        %v6737 = vadd.f32 %v6648, %v6736
        %v6738 = vpop.f32.mrf.mxu0
        %v6739 = vadd.f32 %v6650, %v6738
        %6740 = vmatmul.bf16.gmra.mxu0 %v6286
        %v6741 = vpop.f32.mrf.mxu0
        %v6742 = vadd.f32 %v6653, %v6741
        %v6743 = vpop.f32.mrf.mxu0
        %v6744 = vadd.f32 %v6655, %v6743
        %6745 = vdwg.mxu0
        %v6746 = vadd.f32 %v5886, %v6667
        %v6747 = vadd.f32 %v5888, %v6669
        %v6748 = vadd.f32 %v5891, %v6672
        %v6749 = vadd.f32 %v5893, %v6674
        %v6750 = vadd.f32 %v5896, %v6677
        %v6751 = vadd.f32 %v5898, %v6679
        %v6752 = vadd.f32 %v5901, %v6682
        %v6753 = vadd.f32 %v5903, %v6684
        %v6754 = vadd.f32 %v5906, %v6687
        %v6755 = vadd.f32 %v5908, %v6689
        %v6756 = vadd.f32 %v5911, %v6692
        %v6757 = vadd.f32 %v5913, %v6694
        %v6758 = vadd.f32 %v5916, %v6697
        %v6759 = vadd.f32 %v5918, %v6699
        %v6760 = vadd.f32 %v5921, %v6702
        %v6761 = vadd.f32 %v5923, %v6704
        %v6762 = vadd.f32 %v5926, %v6707
        %v6763 = vadd.f32 %v5928, %v6709
        %v6764 = vadd.f32 %v5931, %v6712
        %v6765 = vadd.f32 %v5933, %v6714
        %v6766 = vadd.f32 %v5936, %v6717
        %v6767 = vadd.f32 %v5938, %v6719
        %v6768 = vadd.f32 %v5941, %v6722
        %v6769 = vadd.f32 %v5943, %v6724
        %v6770 = vadd.f32 %v5946, %v6727
        %v6771 = vadd.f32 %v5948, %v6729
        %v6772 = vadd.f32 %v5951, %v6732
        %v6773 = vadd.f32 %v5953, %v6734
        %v6774 = vadd.f32 %v5956, %v6737
        %v6775 = vadd.f32 %v5958, %v6739
        %v6776 = vadd.f32 %v5961, %v6742
        %v6777 = vadd.f32 %v5963, %v6744
        %v6779 = vperm.slane %v4404, 0
        %v6781 = vmul.f32 %v6746, %v6779
        %v6782 = vmul.f32 %v6747, %v6779
        %v6783 = vmul.f32 %v6748, %v6779
        %v6784 = vmul.f32 %v6749, %v6779
        %v6785 = vmul.f32 %v6750, %v6779
        %v6786 = vmul.f32 %v6751, %v6779
        %v6787 = vmul.f32 %v6752, %v6779
        %v6788 = vmul.f32 %v6753, %v6779
        %v6789 = vmul.f32 %v6754, %v6779
        %v6790 = vmul.f32 %v6755, %v6779
        %v6791 = vmul.f32 %v6756, %v6779
        %v6792 = vmul.f32 %v6757, %v6779
        %v6793 = vmul.f32 %v6758, %v6779
        %v6794 = vmul.f32 %v6759, %v6779
        %v6795 = vmul.f32 %v6760, %v6779
        %v6796 = vmul.f32 %v6761, %v6779
        %v6797 = vmul.f32 %v6762, %v6779
        %v6798 = vmul.f32 %v6763, %v6779
        %v6799 = vmul.f32 %v6764, %v6779
        %v6800 = vmul.f32 %v6765, %v6779
        %v6801 = vmul.f32 %v6766, %v6779
        %v6802 = vmul.f32 %v6767, %v6779
        %v6803 = vmul.f32 %v6768, %v6779
        %v6804 = vmul.f32 %v6769, %v6779
        %v6805 = vmul.f32 %v6770, %v6779
        %v6806 = vmul.f32 %v6771, %v6779
        %v6807 = vmul.f32 %v6772, %v6779
        %v6808 = vmul.f32 %v6773, %v6779
        %v6809 = vmul.f32 %v6774, %v6779
        %v6810 = vmul.f32 %v6775, %v6779
        %v6811 = vmul.f32 %v6776, %v6779
        %v6812 = vmul.f32 %v6777, %v6779
        %v6814 = vperm.slane %v4405, 0
        %v6816 = vadd.f32 %v6781, %v6814
        %v6817 = vadd.f32 %v6782, %v6814
        %v6818 = vadd.f32 %v6783, %v6814
        %v6819 = vadd.f32 %v6784, %v6814
        %v6820 = vadd.f32 %v6785, %v6814
        %v6821 = vadd.f32 %v6786, %v6814
        %v6822 = vadd.f32 %v6787, %v6814
        %v6823 = vadd.f32 %v6788, %v6814
        %v6824 = vadd.f32 %v6789, %v6814
        %v6825 = vadd.f32 %v6790, %v6814
        %v6826 = vadd.f32 %v6791, %v6814
        %v6827 = vadd.f32 %v6792, %v6814
        %v6828 = vadd.f32 %v6793, %v6814
        %v6829 = vadd.f32 %v6794, %v6814
        %v6830 = vadd.f32 %v6795, %v6814
        %v6831 = vadd.f32 %v6796, %v6814
        %v6832 = vadd.f32 %v6797, %v6814
        %v6833 = vadd.f32 %v6798, %v6814
        %v6834 = vadd.f32 %v6799, %v6814
        %v6835 = vadd.f32 %v6800, %v6814
        %v6836 = vadd.f32 %v6801, %v6814
        %v6837 = vadd.f32 %v6802, %v6814
        %v6838 = vadd.f32 %v6803, %v6814
        %v6839 = vadd.f32 %v6804, %v6814
        %v6840 = vadd.f32 %v6805, %v6814
        %v6841 = vadd.f32 %v6806, %v6814
        %v6842 = vadd.f32 %v6807, %v6814
        %v6843 = vadd.f32 %v6808, %v6814
        %v6844 = vadd.f32 %v6809, %v6814
        %v6845 = vadd.f32 %v6810, %v6814
        %v6846 = vadd.f32 %v6811, %v6814
        %v6847 = vadd.f32 %v6812, %v6814
        %v6848 = vmax.f32 %v6816, 0.0
        %v6849 = vmax.f32 %v6817, 0.0
        %v6850 = vmax.f32 %v6818, 0.0
        %v6851 = vmax.f32 %v6819, 0.0
        %v6852 = vmax.f32 %v6820, 0.0
        %v6853 = vmax.f32 %v6821, 0.0
        %v6854 = vmax.f32 %v6822, 0.0
        %v6855 = vmax.f32 %v6823, 0.0
        %v6856 = vmax.f32 %v6824, 0.0
        %v6857 = vmax.f32 %v6825, 0.0
        %v6858 = vmax.f32 %v6826, 0.0
        %v6859 = vmax.f32 %v6827, 0.0
        %v6860 = vmax.f32 %v6828, 0.0
        %v6861 = vmax.f32 %v6829, 0.0
        %v6862 = vmax.f32 %v6830, 0.0
        %v6863 = vmax.f32 %v6831, 0.0
        %v6864 = vmax.f32 %v6832, 0.0
        %v6865 = vmax.f32 %v6833, 0.0
        %v6866 = vmax.f32 %v6834, 0.0
        %v6867 = vmax.f32 %v6835, 0.0
        %v6868 = vmax.f32 %v6836, 0.0
        %v6869 = vmax.f32 %v6837, 0.0
        %v6870 = vmax.f32 %v6838, 0.0
        %v6871 = vmax.f32 %v6839, 0.0
        %v6872 = vmax.f32 %v6840, 0.0
        %v6873 = vmax.f32 %v6841, 0.0
        %v6874 = vmax.f32 %v6842, 0.0
        %v6875 = vmax.f32 %v6843, 0.0
        %v6876 = vmax.f32 %v6844, 0.0
        %v6877 = vmax.f32 %v6845, 0.0
        %v6878 = vmax.f32 %v6846, 0.0
        %v6879 = vmax.f32 %v6847, 0.0
        %6880 = vst [vmem:[%s331] sm:$0xff] %v6848
        %6881 = vst [vmem:[%s331 + $0x8] sm:$0xff] %v6849
        %6882 = vst [vmem:[%s331 + $0x10] sm:$0xff] %v6850
        %6883 = vst [vmem:[%s331 + $0x18] sm:$0xff] %v6851
        %6884 = vst [vmem:[%s331 + $0x20] sm:$0xff] %v6852
        %6885 = vst [vmem:[%s331 + $0x28] sm:$0xff] %v6853
        %6886 = vst [vmem:[%s331 + $0x30] sm:$0xff] %v6854
        %6887 = vst [vmem:[%s331 + $0x38] sm:$0xff] %v6855
        %6888 = vst [vmem:[%s331 + $0x40] sm:$0xff] %v6856
        %6889 = vst [vmem:[%s331 + $0x48] sm:$0xff] %v6857
        %6890 = vst [vmem:[%s331 + $0x50] sm:$0xff] %v6858
        %6891 = vst [vmem:[%s331 + $0x58] sm:$0xff] %v6859
        %6892 = vst [vmem:[%s331 + $0x60] sm:$0xff] %v6860
        %6893 = vst [vmem:[%s331 + $0x68] sm:$0xff] %v6861
        %6894 = vst [vmem:[%s331 + $0x70] sm:$0xff] %v6862
        %6895 = vst [vmem:[%s331 + $0x78] sm:$0xff] %v6863
        %6896 = vst [vmem:[%s331 + $0x80] sm:$0xff] %v6864
        %6897 = vst [vmem:[%s331 + $0x88] sm:$0xff] %v6865
        %6898 = vst [vmem:[%s331 + $0x90] sm:$0xff] %v6866
        %6899 = vst [vmem:[%s331 + $0x98] sm:$0xff] %v6867
        %6900 = vst [vmem:[%s331 + $0xa0] sm:$0xff] %v6868
        %6901 = vst [vmem:[%s331 + $0xa8] sm:$0xff] %v6869
        %6902 = vst [vmem:[%s331 + $0xb0] sm:$0xff] %v6870
        %6903 = vst [vmem:[%s331 + $0xb8] sm:$0xff] %v6871
        %6904 = vst [vmem:[%s331 + $0xc0] sm:$0xff] %v6872
        %6905 = vst [vmem:[%s331 + $0xc8] sm:$0xff] %v6873
        %6906 = vst [vmem:[%s331 + $0xd0] sm:$0xff] %v6874
        %6907 = vst [vmem:[%s331 + $0xd8] sm:$0xff] %v6875
        %6908 = vst [vmem:[%s331 + $0xe0] sm:$0xff] %v6876
        %6909 = vst [vmem:[%s331 + $0xe8] sm:$0xff] %v6877
        %6910 = vst [vmem:[%s331 + $0xf0] sm:$0xff] %v6878
        %6911 = vst [vmem:[%s331 + $0xf8] sm:$0xff] %v6879
        %s6912 = sand.u32 %s185, 1
        %s6913 = scalar_lea.sflag [#allocation6], %s6912
        %s6914 = sand.u32 %s185, 1
        %s6915 = smul.addr %s6914, 256
        %s6916 = scalar_lea.vmem [#allocation10], %s6915
        // Predicated region
        $region61: #{tpu_custom_call.1} parent=47 // pred_check
          %p6917 = pneg %p195
        $region62: #{tpu_custom_call.1} parent=47 // pred_check_branch
          %6919 = sbr.rel (%p6917) target = $region64
        $region63: #{tpu_custom_call.1} parent=47 // pred_region
          %6921 = vsyncadd %s6913, 0
          %s6922 = smul.addr %s25, 32
          %s6923 = smul.addr %s6922, 8
          %s6924 = scalar_lea.hbm %s7, %s6923
          %s6925 = sshll.u32 %s6916, 4
          %s6926 = int_to_ptr.vmem [resolvable:$true] %s6925
          %s6927 = sshll.u32 %s6924, 4
          %s6928 = int_to_ptr.hbm [resolvable:$true] %s6927
          %6933 = dma.vmem_to_hbm [thread:$0]  %s6926, 4096, %s6928, %s6913, 128, 128, 8
        $region64: #{tpu_custom_call.1} parent=47 // pred_fallthru
          _
      $region48: #{tpu_custom_call.1} parent=5 // pred_fallthru
        _
      %p6934 = scmp.le.s32.totalorder 2, %s20
      // Predicated region
      $region65: #{tpu_custom_call.1} parent=5 // pred_check
        %p6935 = pneg %p6934
      $region66: #{tpu_custom_call.1} parent=5 // pred_check_branch
        %6937 = sbr.rel (%p6935) target = $region68
      $region67: #{tpu_custom_call.1} parent=5 // pred_region
        %s6938 = ssub.s32 %s20, 2
        // Predicated region
        $region69: #{tpu_custom_call.1} parent=67 // pred_check
          %p6939 = pneg %p201
        $region70: #{tpu_custom_call.1} parent=67 // pred_check_branch
          %6941 = sbr.rel (%p6939) target = $region72
        $region71: #{tpu_custom_call.1} parent=67 // pred_region
          %s6942 = sand.u32 %s186, 1
          %s6943 = scalar_lea.sflag [#allocation6], %s6942
          %s6944 = sand.u32 %s186, 1
          %s6945 = smul.addr %s6944, 256
          %s6946 = scalar_lea.vmem [#allocation10], %s6945
          %6948 = dma.done %s6943, 4096
        $region72: #{tpu_custom_call.1} parent=67 // pred_fallthru
          _
      $region68: #{tpu_custom_call.1} parent=5 // pred_fallthru
        _
    $region6: #{tpu_custom_call.1} parent=1 // loop_footer
      %s24 = sadd.s32 1, %s20
    $region7: #{tpu_custom_call.1} parent=1 // loop_footer_branch
      %19 = sbr.rel target = $region3
    $region8: #{tpu_custom_call.1} parent=1 // loop_exit
      _
    %6949 = vsyncpa [#allocation5], 1
    %s6950 = scalar_lea.sflag [#allocation5], 1
    %6951 = vsyncpa %s6950, 1
    %6952 = vsyncpa [#allocation8], 1
    %6953 = vsyncpa [#allocation6], 1
    %s6954 = scalar_lea.sflag [#allocation6], 1
    %6955 = vsyncpa %s6954, 1

</llo_original>
